<compile_context>
chip_gen: v7x
topology: tpu7x:2x2x1
jax: 0.10.0
libtpu: 0.0.40
codegen_flags: <defaults>
</compile_context>

<pallas_src>
import functools

import jax
import jax.numpy as jnp
from jax.experimental import pallas as pl
from jax.experimental.pallas import tpu as pltpu

BN_EPS = 1e-5
_ROW_TILE_TARGET = 512          # safe across v5e / v6e / v7x VMEM budgets
_CONV_SEMANTICS = ("parallel", "arbitrary")   # batch axis megacore-parallel


def _choose_tile(n):
    """Row tile over the points axis (sublane-aligned) and padded extent."""
    if n >= _ROW_TILE_TARGET:
        tile = _ROW_TILE_TARGET
    else:
        tile = max(8, ((n + 7) // 8) * 8)
    n_pad = ((n + tile - 1) // tile) * tile
    return tile, n_pad


def _valid_rows(tile, n_points):
    rows = pl.program_id(1) * tile + jax.lax.broadcasted_iota(
        jnp.int32, (tile, 1), 0)
    return rows < n_points


# --------------------------------------------------------------------------
# Kernels
# --------------------------------------------------------------------------
def _conv1_stats_kernel(x_ref, w1_ref, b1_ref, sum_ref, sq_ref,
                        *, tile, n_points, masked):
    """Stats-only pass: conv1 on one row tile; per-batch sum / sum-of-squares.

    The conv1 activation is never written to HBM; it is (cheaply) recomputed
    inside the conv2 kernel.
    """
    y = jnp.dot(x_ref[...].astype(jnp.bfloat16), w1_ref[...],
                preferred_element_type=jnp.float32) + b1_ref[...]

    @pl.when(pl.program_id(1) == 0)
    def _():
        sum_ref[...] = jnp.zeros_like(sum_ref)
        sq_ref[...] = jnp.zeros_like(sq_ref)

    if masked:
        y = jnp.where(_valid_rows(tile, n_points), y, 0.0)
    sum_ref[...] += jnp.sum(y, axis=0, keepdims=True)
    sq_ref[...] += jnp.sum(y * y, axis=0, keepdims=True)


def _conv12_kernel(x_ref, sc1_ref, sh1_ref, w1_ref, b1_ref, w2_ref, b2_ref,
                   y2_ref, sum_ref, sq_ref, *, tile, n_points, masked):
    """x tile -> conv1 (recompute) -> BN1+ReLU -> conv2.  y2 stored in bf16."""
    y1 = jnp.dot(x_ref[...].astype(jnp.bfloat16), w1_ref[...],
                 preferred_element_type=jnp.float32) + b1_ref[...]
    h1 = jnp.maximum(y1 * sc1_ref[...] + sh1_ref[...], 0.0)
    y2 = jnp.dot(h1.astype(jnp.bfloat16), w2_ref[...],
                 preferred_element_type=jnp.float32) + b2_ref[...]
    y2_ref[...] = y2.astype(jnp.bfloat16)        # halved HBM activation traffic

    @pl.when(pl.program_id(1) == 0)
    def _():
        sum_ref[...] = jnp.zeros_like(sum_ref)
        sq_ref[...] = jnp.zeros_like(sq_ref)

    if masked:
        y2 = jnp.where(_valid_rows(tile, n_points), y2, 0.0)
    sum_ref[...] += jnp.sum(y2, axis=0, keepdims=True)
    sq_ref[...] += jnp.sum(y2 * y2, axis=0, keepdims=True)


def _conv3_kernel(y2_ref, sc2_ref, sh2_ref, w3_ref, b3_ref,
                  sum_ref, sq_ref, max_ref, min_ref,
                  *, tile, n_points, masked):
    """BN2+ReLU -> conv3; accumulate BN3 sum/sumsq and per-batch max/min.

    The (B, N, 1024) conv3 activation never hits HBM.
    """
    h = jnp.maximum(y2_ref[...].astype(jnp.float32) * sc2_ref[...]
                    + sh2_ref[...], 0.0)
    y = jnp.dot(h.astype(jnp.bfloat16), w3_ref[...],
                preferred_element_type=jnp.float32) + b3_ref[...]

    @pl.when(pl.program_id(1) == 0)
    def _():
        sum_ref[...] = jnp.zeros_like(sum_ref)
        sq_ref[...] = jnp.zeros_like(sq_ref)
        max_ref[...] = jnp.full(max_ref.shape, -jnp.inf, max_ref.dtype)
        min_ref[...] = jnp.full(min_ref.shape, jnp.inf, min_ref.dtype)

    if masked:
        valid = _valid_rows(tile, n_points)
        ys = jnp.where(valid, y, 0.0)
        ymx = jnp.where(valid, y, -jnp.inf)
        ymn = jnp.where(valid, y, jnp.inf)
    else:
        ys = ymx = ymn = y
    sum_ref[...] += jnp.sum(ys, axis=0, keepdims=True)
    sq_ref[...] += jnp.sum(ys * ys, axis=0, keepdims=True)
    max_ref[...] = jnp.maximum(max_ref[...], jnp.max(ymx, axis=0, keepdims=True))
    min_ref[...] = jnp.minimum(min_ref[...], jnp.min(ymn, axis=0, keepdims=True))


def _head_kernel(ymax_ref, ymin_ref, scale_ref, shift_ref,
                 wf1_ref, bf1_ref, wf2_ref, bf2_ref, wf3_ref, bf3_ref,
                 eye_ref, out_ref):
    # max_n ReLU(BN3(y_n)) == ReLU(BN3(max_n y_n)) when gamma >= 0 and
    #                      == ReLU(BN3(min_n y_n)) when gamma <  0,
    # so the elementwise max of both branches is exact for any gamma.
    a = jnp.maximum(ymax_ref[...] * scale_ref[...] + shift_ref[...], 0.0)
    b = jnp.maximum(ymin_ref[...] * scale_ref[...] + shift_ref[...], 0.0)
    g = jnp.maximum(a, b)                                        # (B, 1024)

    f = jnp.dot(g.astype(jnp.bfloat16), wf1_ref[...],
                preferred_element_type=jnp.float32) + bf1_ref[...]
    f = jnp.dot(f.astype(jnp.bfloat16), wf2_ref[...],
                preferred_element_type=jnp.float32) + bf2_ref[...]
    f = jnp.dot(f.astype(jnp.bfloat16), wf3_ref[...],
                preferred_element_type=jnp.float32) + bf3_ref[...]
    out_ref[...] = f + eye_ref[...]


# --------------------------------------------------------------------------
# Wrappers
# --------------------------------------------------------------------------
def _stat_spec(cout):
    # Per-batch partial accumulator: index_map depends only on the batch index,
    # so the batch grid axis can be "parallel" (megacore-safe).
    return pl.BlockSpec((None, 1, cout), lambda b_, n_: (b_, 0, 0))


def _bn_scale_shift(ssum_part, ssq_part, gamma, beta, count):
    """Training-mode BN (biased variance) folded into per-channel scale/shift.

    ssum_part / ssq_part are per-batch partials shaped (B, 1, cout).
    """
    ssum = jnp.sum(ssum_part, axis=0)                  # (1, cout)
    ssq = jnp.sum(ssq_part, axis=0)
    mean = ssum / count
    var = jnp.maximum(ssq / count - mean * mean, 0.0)
    scale = gamma * jax.lax.rsqrt(var + BN_EPS)
    shift = beta - mean * scale
    return scale, shift


def _conv1_stats(x, w1_bf16, b1, *, tile, n_points, masked):
    B, n_pad, cin = x.shape
    cout = w1_bf16.shape[1]
    nt = n_pad // tile
    kernel = functools.partial(_conv1_stats_kernel, tile=tile,
                               n_points=n_points, masked=masked)
    ssum, ssq = pl.pallas_call(
        kernel,
        grid=(B, nt),
        in_specs=[
            pl.BlockSpec((None, tile, cin), lambda b_, n_: (b_, n_, 0)),
            pl.BlockSpec((cin, cout), lambda b_, n_: (0, 0)),
            pl.BlockSpec((1, cout), lambda b_, n_: (0, 0)),
        ],
        out_specs=[_stat_spec(cout), _stat_spec(cout)],
        out_shape=[jax.ShapeDtypeStruct((B, 1, cout), jnp.float32)] * 2,
        compiler_params=pltpu.CompilerParams(
            dimension_semantics=_CONV_SEMANTICS),
    )(x, w1_bf16, b1)
    return ssum, ssq


def _conv12(x, sc1, sh1, w1_bf16, b1, w2_bf16, b2, *, tile, n_points, masked):
    B, n_pad, cin = x.shape
    c1 = w1_bf16.shape[1]
    c2 = w2_bf16.shape[1]
    nt = n_pad // tile
    kernel = functools.partial(_conv12_kernel, tile=tile,
                               n_points=n_points, masked=masked)
    # TODO(synk): sweep pipeline_mode=pl.Buffered(3) on the x in_spec for this
    # mem-bound pass once a per-chip VMEM headroom check is in place.
    y2, ssum, ssq = pl.pallas_call(
        kernel,
        grid=(B, nt),
        in_specs=[
            pl.BlockSpec((None, tile, cin), lambda b_, n_: (b_, n_, 0)),
            pl.BlockSpec((1, c1), lambda b_, n_: (0, 0)),
            pl.BlockSpec((1, c1), lambda b_, n_: (0, 0)),
            pl.BlockSpec((cin, c1), lambda b_, n_: (0, 0)),
            pl.BlockSpec((1, c1), lambda b_, n_: (0, 0)),
            pl.BlockSpec((c1, c2), lambda b_, n_: (0, 0)),
            pl.BlockSpec((1, c2), lambda b_, n_: (0, 0)),
        ],
        out_specs=[
            pl.BlockSpec((None, tile, c2), lambda b_, n_: (b_, n_, 0)),
            _stat_spec(c2),
            _stat_spec(c2),
        ],
        out_shape=[
            jax.ShapeDtypeStruct((B, n_pad, c2), jnp.bfloat16),
            jax.ShapeDtypeStruct((B, 1, c2), jnp.float32),
            jax.ShapeDtypeStruct((B, 1, c2), jnp.float32),
        ],
        compiler_params=pltpu.CompilerParams(
            dimension_semantics=_CONV_SEMANTICS),
    )(x, sc1, sh1, w1_bf16, b1, w2_bf16, b2)
    return y2, ssum, ssq


def _conv3(y2, sc2, sh2, w3_bf16, b3, *, tile, n_points, masked):
    B, n_pad, cin = y2.shape
    cout = w3_bf16.shape[1]
    nt = n_pad // tile
    kernel = functools.partial(_conv3_kernel, tile=tile,
                               n_points=n_points, masked=masked)
    ssum, ssq, ymax, ymin = pl.pallas_call(
        kernel,
        grid=(B, nt),
        in_specs=[
            pl.BlockSpec((None, tile, cin), lambda b_, n_: (b_, n_, 0)),
            pl.BlockSpec((1, cin), lambda b_, n_: (0, 0)),
            pl.BlockSpec((1, cin), lambda b_, n_: (0, 0)),
            pl.BlockSpec((cin, cout), lambda b_, n_: (0, 0)),
            pl.BlockSpec((1, cout), lambda b_, n_: (0, 0)),
        ],
        out_specs=[_stat_spec(cout)] * 4,
        out_shape=[jax.ShapeDtypeStruct((B, 1, cout), jnp.float32)] * 4,
        compiler_params=pltpu.CompilerParams(
            dimension_semantics=_CONV_SEMANTICS),
    )(y2, sc2, sh2, w3_bf16, b3)
    return ssum, ssq, ymax.reshape(B, cout), ymin.reshape(B, cout)


def _head(ymax, ymin, scale3, shift3, wf1, bf1, wf2, bf2, wf3p, bf3p, eyep):
    B = ymax.shape[0]
    kkp = wf3p.shape[1]

    def fs(a):
        nd = a.ndim
        return pl.BlockSpec(a.shape, lambda i, _n=nd: (0,) * _n)

    inputs = (ymax, ymin, scale3, shift3, wf1, bf1, wf2, bf2, wf3p, bf3p, eyep)
    out = pl.pallas_call(
        _head_kernel,
        grid=(1,),
        in_specs=[fs(a) for a in inputs],
        out_specs=pl.BlockSpec((B, kkp), lambda i: (0, 0)),
        out_shape=jax.ShapeDtypeStruct((B, kkp), jnp.float32),
        compiler_params=pltpu.CompilerParams(dimension_semantics=("arbitrary",)),
    )(*inputs)
    return out


@functools.partial(jax.jit, static_argnums=(2,))
def tnet_forward(x_bcn, params, k):
    """x_bcn: (B, k, N) float32 (PyTorch layout).  Returns (B, k, k)."""
    B, C, N = x_bcn.shape
    assert C == k
    x = jnp.transpose(x_bcn, (0, 2, 1)).astype(jnp.float32)     # (B, N, k)
    tile, n_pad = _choose_tile(N)
    masked = n_pad != N
    if masked:
        x = jnp.pad(x, ((0, 0), (0, n_pad - N), (0, 0)))
    count = jnp.float32(B * N)

    bf = lambda w: w.astype(jnp.bfloat16)
    w1, w2, w3 = bf(params["w1"]), bf(params["w2"]), bf(params["w3"])

    # layer 1: stats only -> no (B, N, 64) HBM round trip.
    s1, q1 = _conv1_stats(x, w1, params["b1"],
                          tile=tile, n_points=N, masked=masked)
    sc1, sh1 = _bn_scale_shift(s1, q1, params["g1"], params["be1"], count)

    # layer 2: recompute conv1 -> BN1+ReLU -> conv2 (y2 stored in bf16).
    y2, s2, q2 = _conv12(x, sc1, sh1, w1, params["b1"], w2, params["b2"],
                         tile=tile, n_points=N, masked=masked)
    sc2, sh2 = _bn_scale_shift(s2, q2, params["g2"], params["be2"], count)

    # layer 3: BN2+ReLU -> conv3; (B, N, 1024) never hits HBM.
    s3, q3, ymax, ymin = _conv3(y2, sc2, sh2, w3, params["b3"],
                                tile=tile, n_points=N, masked=masked)
    sc3, sh3 = _bn_scale_shift(s3, q3, params["g3"], params["be3"], count)

    # Lane-dense (multiple-of-128) padding for the fc3 / eye / output slab.
    kk = k * k
    kkp = ((kk + 127) // 128) * 128
    wf3p = jnp.zeros((params["wf3"].shape[0], kkp), jnp.float32).at[:, :kk].set(params["wf3"])
    bf3p = jnp.zeros((1, kkp), jnp.float32).at[:, :kk].set(params["bf3"])
    eyep = jnp.zeros((1, kkp), jnp.float32).at[:, :kk].set(
        jnp.eye(k, dtype=jnp.float32).reshape(1, kk))

    out = _head(ymax, ymin, sc3, sh3,
                bf(params["wf1"]), params["bf1"],
                bf(params["wf2"]), params["bf2"],
                bf(wf3p), bf3p, eyep)
    return out[:, :kk].reshape(B, k, k)


# --------------------------------------------------------------------------
# Parameters and pure-JAX reference
# --------------------------------------------------------------------------
def init_params(key, k):
    keys = jax.random.split(key, 12)

    def w(kk, shape, fan_in):
        return (jax.random.normal(kk, shape, jnp.float32) /
                jnp.sqrt(fan_in)).astype(jnp.float32)

    p = {}
    p["w1"], p["b1"] = w(keys[0], (k, 64), k), w(keys[1], (1, 64), k)
    p["w2"], p["b2"] = w(keys[2], (64, 128), 64), w(keys[3], (1, 128), 64)
    p["w3"], p["b3"] = w(keys[4], (128, 1024), 128), w(keys[5], (1, 1024), 128)
    p["g1"], p["be1"] = jnp.ones((1, 64), jnp.float32), jnp.zeros((1, 64), jnp.float32)
    p["g2"], p["be2"] = jnp.ones((1, 128), jnp.float32), jnp.zeros((1, 128), jnp.float32)
    p["g3"], p["be3"] = jnp.ones((1, 1024), jnp.float32), jnp.zeros((1, 1024), jnp.float32)
    p["wf1"], p["bf1"] = w(keys[6], (1024, 512), 1024), w(keys[7], (1, 512), 1024)
    p["wf2"], p["bf2"] = w(keys[8], (512, 256), 512), w(keys[9], (1, 256), 512)
    p["wf3"], p["bf3"] = w(keys[10], (256, k * k), 256), w(keys[11], (1, k * k), 256)
    return p


def tnet_reference(x_bcn, params, k):
    """Pure-JAX reference with matching matmul precision (bf16 in, f32 acc)."""
    x = jnp.transpose(x_bcn, (0, 2, 1)).astype(jnp.float32)

    def mm(a, w, b):
        return jnp.dot(a.astype(jnp.bfloat16), w.astype(jnp.bfloat16),
                       preferred_element_type=jnp.float32) + b

    def bn_relu(y, g, be):
        m = jnp.mean(y, axis=(0, 1), keepdims=True)
        v = jnp.mean((y - m) ** 2, axis=(0, 1), keepdims=True)   # biased
        return jnp.maximum((y - m) * jax.lax.rsqrt(v + BN_EPS) * g + be, 0.0)

    h = bn_relu(mm(x, params["w1"], params["b1"]), params["g1"], params["be1"])
    h = bn_relu(mm(h, params["w2"], params["b2"]), params["g2"], params["be2"])
    h = bn_relu(mm(h, params["w3"], params["b3"]), params["g3"], params["be3"])
    g = jnp.max(h, axis=1)                                        # (B, 1024)
    f = mm(g, params["wf1"], params["bf1"])
    f = mm(f, params["wf2"], params["bf2"])
    f = mm(f, params["wf3"], params["bf3"])
    return f.reshape(-1, k, k) + jnp.eye(k, dtype=jnp.float32)[None]


if __name__ == "__main__":
    K = 8          # TNet "k" (input channels and output k x k transform)
    B = 2          # batch

    key = jax.random.PRNGKey(0)
    kx1, kx2, kp = jax.random.split(key, 3)
    params = init_params(kp, K)

    # Test 1: N divisible by the row tile (no padding / masking path).
    N1 = 16
    x1 = jax.random.normal(kx1, (B, K, N1), jnp.float32)   # PyTorch layout
    out1 = jax.block_until_ready(tnet_forward(x1, params, K))
    ref1 = jax.block_until_ready(tnet_reference(x1, params, K))
    assert out1.shape == (B, K, K)
    assert jnp.allclose(out1, ref1, atol=3e-2, rtol=3e-2), (
        f"mismatch vs reference (N={N1}): "
        f"max abs diff {jnp.max(jnp.abs(out1 - ref1))}")

    # Test 2: awkward N -> padded points axis + in-kernel stat/max masking.
    N2 = 20
    x2 = jax.random.normal(kx2, (B, K, N2), jnp.float32)
    out2 = jax.block_until_ready(tnet_forward(x2, params, K))
    ref2 = jax.block_until_ready(tnet_reference(x2, params, K))
    assert out2.shape == (B, K, K)
    assert jnp.allclose(out2, ref2, atol=3e-2, rtol=3e-2), (
        f"mismatch vs reference (N={N2}): "
        f"max abs diff {jnp.max(jnp.abs(out2 - ref2))}")

    print("KERNEL_OK")
</pallas_src>

<mosaic_0001>
module attributes {stable_mosaic.version = 11 : i64} {
  func.func @_conv1_stats_kernel(%arg0: i32, %arg1: i32, %arg2: memref<1x16x8xf32, #tpu.memory_space<vmem>>, %arg3: memref<8x64xbf16, #tpu.memory_space<vmem>>, %arg4: memref<1x64xf32, #tpu.memory_space<vmem>>, %arg5: memref<1x1x64xf32, #tpu.memory_space<vmem>>, %arg6: memref<1x1x64xf32, #tpu.memory_space<vmem>>) attributes {dimension_semantics = [#tpu.dimension_semantics<parallel>, #tpu.dimension_semantics<arbitrary>], iteration_bounds = array<i64: 2, 1>, scalar_prefetch = 0 : i64, scratch_operands = 0 : i64, tpu.core_type = #tpu.core_type<tc>, window_params = [{transform_indices = @transform_0, window_bounds = array<i64: 1, 16, 8>}, {pipeline_mode = #tpu.pipeline_mode<synchronous>, transform_indices = @transform_1, window_bounds = array<i64: 8, 64>}, {pipeline_mode = #tpu.pipeline_mode<synchronous>, transform_indices = @transform_2, window_bounds = array<i64: 1, 64>}, {transform_indices = @transform_3, window_bounds = array<i64: 1, 1, 64>}, {transform_indices = @transform_4, window_bounds = array<i64: 1, 1, 64>}]} {
    %c0 = arith.constant 0 : index
    %c0_0 = arith.constant 0 : index
    %c0_1 = arith.constant 0 : index
    %0 = vector.load %arg2[%c0, %c0_0, %c0_1] : memref<1x16x8xf32, #tpu.memory_space<vmem>>, vector<1x16x8xf32>
    %1 = vector.shape_cast %0 : vector<1x16x8xf32> to vector<16x8xf32>
    %2 = arith.truncf %1 : vector<16x8xf32> to vector<16x8xbf16>
    %c0_2 = arith.constant 0 : index
    %c0_3 = arith.constant 0 : index
    %3 = vector.load %arg3[%c0_2, %c0_3] : memref<8x64xbf16, #tpu.memory_space<vmem>>, vector<8x64xbf16>
    %cst = arith.constant dense<0.000000e+00> : vector<16x64xf32>
    %4 = tpu.matmul %2, %3, %cst {dimension_numbers = #tpu.dot_dimension_numbers<[1], [0], [0], [1], [0, 0, 1, 1], [], []>} : vector<16x8xbf16>, vector<8x64xbf16>, vector<16x64xf32> -> vector<16x64xf32>
    %c0_4 = arith.constant 0 : index
    %c0_5 = arith.constant 0 : index
    %5 = vector.load %arg4[%c0_4, %c0_5] : memref<1x64xf32, #tpu.memory_space<vmem>>, vector<1x64xf32>
    %6 = vector.broadcast %5 : vector<1x64xf32> to vector<16x64xf32>
    %7 = arith.addf %4, %6 : vector<16x64xf32>
    %c0_i32 = arith.constant 0 : i32
    %8 = arith.cmpi eq, %arg1, %c0_i32 : i32
    %9 = arith.extui %8 : i1 to i32
    %c0_i32_6 = arith.constant 0 : i32
    %10 = arith.cmpi ne, %9, %c0_i32_6 : i32
    scf.if %10 {
      %cst_21 = arith.constant 0.000000e+00 : f32
      %28 = vector.broadcast %cst_21 : f32 to vector<1x64xf32>
      %c0_22 = arith.constant 0 : index
      %c0_23 = arith.constant 0 : index
      %c0_24 = arith.constant 0 : index
      %29 = vector.load %arg5[%c0_22, %c0_23, %c0_24] : memref<1x1x64xf32, #tpu.memory_space<vmem>>, vector<1x1x64xf32>
      %30 = vector.shape_cast %29 : vector<1x1x64xf32> to vector<1x64xf32>
      %31 = vector.shape_cast %28 : vector<1x64xf32> to vector<1x1x64xf32>
      tpu.vector_store %arg5[%c0_22, %c0_23, %c0_24], %31 {strides = array<i32>} : memref<1x1x64xf32, #tpu.memory_space<vmem>>, vector<1x1x64xf32>,
      %cst_25 = arith.constant 0.000000e+00 : f32
      %32 = vector.broadcast %cst_25 : f32 to vector<1x64xf32>
      %c0_26 = arith.constant 0 : index
      %c0_27 = arith.constant 0 : index
      %c0_28 = arith.constant 0 : index
      %33 = vector.load %arg6[%c0_26, %c0_27, %c0_28] : memref<1x1x64xf32, #tpu.memory_space<vmem>>, vector<1x1x64xf32>
      %34 = vector.shape_cast %33 : vector<1x1x64xf32> to vector<1x64xf32>
      %35 = vector.shape_cast %32 : vector<1x64xf32> to vector<1x1x64xf32>
      tpu.vector_store %arg6[%c0_26, %c0_27, %c0_28], %35 {strides = array<i32>} : memref<1x1x64xf32, #tpu.memory_space<vmem>>, vector<1x1x64xf32>,
    } else {
    }
    %c0_7 = arith.constant 0 : index
    %c0_8 = arith.constant 0 : index
    %c0_9 = arith.constant 0 : index
    %11 = vector.load %arg5[%c0_7, %c0_8, %c0_9] : memref<1x1x64xf32, #tpu.memory_space<vmem>>, vector<1x1x64xf32>
    %12 = vector.shape_cast %11 : vector<1x1x64xf32> to vector<1x64xf32>
    %cst_10 = arith.constant dense<0.000000e+00> : vector<64xf32>
    %13 = vector.multi_reduction <add>, %7, %cst_10 [0] : vector<16x64xf32> to vector<64xf32>
    %14 = vector.shape_cast %13 : vector<64xf32> to vector<1x64xf32>
    %15 = arith.addf %12, %14 : vector<1x64xf32>
    %c0_11 = arith.constant 0 : index
    %c0_12 = arith.constant 0 : index
    %c0_13 = arith.constant 0 : index
    %16 = vector.load %arg5[%c0_11, %c0_12, %c0_13] : memref<1x1x64xf32, #tpu.memory_space<vmem>>, vector<1x1x64xf32>
    %17 = vector.shape_cast %16 : vector<1x1x64xf32> to vector<1x64xf32>
    %18 = vector.shape_cast %15 : vector<1x64xf32> to vector<1x1x64xf32>
    tpu.vector_store %arg5[%c0_11, %c0_12, %c0_13], %18 {strides = array<i32>} : memref<1x1x64xf32, #tpu.memory_space<vmem>>, vector<1x1x64xf32>,
    %c0_14 = arith.constant 0 : index
    %c0_15 = arith.constant 0 : index
    %c0_16 = arith.constant 0 : index
    %19 = vector.load %arg6[%c0_14, %c0_15, %c0_16] : memref<1x1x64xf32, #tpu.memory_space<vmem>>, vector<1x1x64xf32>
    %20 = vector.shape_cast %19 : vector<1x1x64xf32> to vector<1x64xf32>
    %21 = arith.mulf %7, %7 : vector<16x64xf32>
    %cst_17 = arith.constant dense<0.000000e+00> : vector<64xf32>
    %22 = vector.multi_reduction <add>, %21, %cst_17 [0] : vector<16x64xf32> to vector<64xf32>
    %23 = vector.shape_cast %22 : vector<64xf32> to vector<1x64xf32>
    %24 = arith.addf %20, %23 : vector<1x64xf32>
    %c0_18 = arith.constant 0 : index
    %c0_19 = arith.constant 0 : index
    %c0_20 = arith.constant 0 : index
    %25 = vector.load %arg6[%c0_18, %c0_19, %c0_20] : memref<1x1x64xf32, #tpu.memory_space<vmem>>, vector<1x1x64xf32>
    %26 = vector.shape_cast %25 : vector<1x1x64xf32> to vector<1x64xf32>
    %27 = vector.shape_cast %24 : vector<1x64xf32> to vector<1x1x64xf32>
    tpu.vector_store %arg6[%c0_18, %c0_19, %c0_20], %27 {strides = array<i32>} : memref<1x1x64xf32, #tpu.memory_space<vmem>>, vector<1x1x64xf32>,
    return
  }
  func.func @transform_0(%arg0: i32, %arg1: i32) -> (i32, i32, i32) {
    %c0_i32 = arith.constant 0 : i32
    %c0_i32_0 = arith.constant 0 : i32
    return %arg0, %arg1, %c0_i32 : i32, i32, i32
  }
  func.func @transform_1(%arg0: i32, %arg1: i32) -> (i32, i32) {
    %c0_i32 = arith.constant 0 : i32
    %c0_i32_0 = arith.constant 0 : i32
    %c0_i32_1 = arith.constant 0 : i32
    return %c0_i32, %c0_i32_0 : i32, i32
  }
  func.func @transform_2(%arg0: i32, %arg1: i32) -> (i32, i32) {
    %c0_i32 = arith.constant 0 : i32
    %c0_i32_0 = arith.constant 0 : i32
    %c0_i32_1 = arith.constant 0 : i32
    return %c0_i32, %c0_i32_0 : i32, i32
  }
  func.func @transform_3(%arg0: i32, %arg1: i32) -> (i32, i32, i32) {
    %c0_i32 = arith.constant 0 : i32
    %c0_i32_0 = arith.constant 0 : i32
    %c0_i32_1 = arith.constant 0 : i32
    return %arg0, %c0_i32, %c0_i32_0 : i32, i32, i32
  }
  func.func @transform_4(%arg0: i32, %arg1: i32) -> (i32, i32, i32) {
    %c0_i32 = arith.constant 0 : i32
    %c0_i32_0 = arith.constant 0 : i32
    %c0_i32_1 = arith.constant 0 : i32
    return %arg0, %c0_i32, %c0_i32_0 : i32, i32, i32
  }
}

module attributes {stable_mosaic.version = 11 : i64} {
  func.func @_conv12_kernel(%arg0: i32, %arg1: i32, %arg2: memref<1x16x8xf32, #tpu.memory_space<vmem>>, %arg3: memref<1x64xf32, #tpu.memory_space<vmem>>, %arg4: memref<1x64xf32, #tpu.memory_space<vmem>>, %arg5: memref<8x64xbf16, #tpu.memory_space<vmem>>, %arg6: memref<1x64xf32, #tpu.memory_space<vmem>>, %arg7: memref<64x128xbf16, #tpu.memory_space<vmem>>, %arg8: memref<1x128xf32, #tpu.memory_space<vmem>>, %arg9: memref<1x16x128xbf16, #tpu.memory_space<vmem>>, %arg10: memref<1x1x128xf32, #tpu.memory_space<vmem>>, %arg11: memref<1x1x128xf32, #tpu.memory_space<vmem>>) attributes {dimension_semantics = [#tpu.dimension_semantics<parallel>, #tpu.dimension_semantics<arbitrary>], iteration_bounds = array<i64: 2, 1>, scalar_prefetch = 0 : i64, scratch_operands = 0 : i64, tpu.core_type = #tpu.core_type<tc>, window_params = [{transform_indices = @transform_0, window_bounds = array<i64: 1, 16, 8>}, {pipeline_mode = #tpu.pipeline_mode<synchronous>, transform_indices = @transform_1, window_bounds = array<i64: 1, 64>}, {pipeline_mode = #tpu.pipeline_mode<synchronous>, transform_indices = @transform_2, window_bounds = array<i64: 1, 64>}, {pipeline_mode = #tpu.pipeline_mode<synchronous>, transform_indices = @transform_3, window_bounds = array<i64: 8, 64>}, {pipeline_mode = #tpu.pipeline_mode<synchronous>, transform_indices = @transform_4, window_bounds = array<i64: 1, 64>}, {pipeline_mode = #tpu.pipeline_mode<synchronous>, transform_indices = @transform_5, window_bounds = array<i64: 64, 128>}, {pipeline_mode = #tpu.pipeline_mode<synchronous>, transform_indices = @transform_6, window_bounds = array<i64: 1, 128>}, {transform_indices = @transform_7, window_bounds = array<i64: 1, 16, 128>}, {transform_indices = @transform_8, window_bounds = array<i64: 1, 1, 128>}, {transform_indices = @transform_9, window_bounds = array<i64: 1, 1, 128>}]} {
    %c0 = arith.constant 0 : index
    %c0_0 = arith.constant 0 : index
    %c0_1 = arith.constant 0 : index
    %0 = vector.load %arg2[%c0, %c0_0, %c0_1] : memref<1x16x8xf32, #tpu.memory_space<vmem>>, vector<1x16x8xf32>
    %1 = vector.shape_cast %0 : vector<1x16x8xf32> to vector<16x8xf32>
    %2 = arith.truncf %1 : vector<16x8xf32> to vector<16x8xbf16>
    %c0_2 = arith.constant 0 : index
    %c0_3 = arith.constant 0 : index
    %3 = vector.load %arg5[%c0_2, %c0_3] : memref<8x64xbf16, #tpu.memory_space<vmem>>, vector<8x64xbf16>
    %cst = arith.constant dense<0.000000e+00> : vector<16x64xf32>
    %4 = tpu.matmul %2, %3, %cst {dimension_numbers = #tpu.dot_dimension_numbers<[1], [0], [0], [1], [0, 0, 1, 1], [], []>} : vector<16x8xbf16>, vector<8x64xbf16>, vector<16x64xf32> -> vector<16x64xf32>
    %c0_4 = arith.constant 0 : index
    %c0_5 = arith.constant 0 : index
    %5 = vector.load %arg6[%c0_4, %c0_5] : memref<1x64xf32, #tpu.memory_space<vmem>>, vector<1x64xf32>
    %6 = vector.broadcast %5 : vector<1x64xf32> to vector<16x64xf32>
    %7 = arith.addf %4, %6 : vector<16x64xf32>
    %c0_6 = arith.constant 0 : index
    %c0_7 = arith.constant 0 : index
    %8 = vector.load %arg3[%c0_6, %c0_7] : memref<1x64xf32, #tpu.memory_space<vmem>>, vector<1x64xf32>
    %9 = vector.broadcast %8 : vector<1x64xf32> to vector<16x64xf32>
    %10 = arith.mulf %7, %9 : vector<16x64xf32>
    %c0_8 = arith.constant 0 : index
    %c0_9 = arith.constant 0 : index
    %11 = vector.load %arg4[%c0_8, %c0_9] : memref<1x64xf32, #tpu.memory_space<vmem>>, vector<1x64xf32>
    %12 = vector.broadcast %11 : vector<1x64xf32> to vector<16x64xf32>
    %13 = arith.addf %10, %12 : vector<16x64xf32>
    %cst_10 = arith.constant 0.000000e+00 : f32
    %14 = vector.broadcast %cst_10 : f32 to vector<16x64xf32>
    %15 = arith.maximumf %13, %14 : vector<16x64xf32>
    %16 = arith.truncf %15 : vector<16x64xf32> to vector<16x64xbf16>
    %c0_11 = arith.constant 0 : index
    %c0_12 = arith.constant 0 : index
    %17 = vector.load %arg7[%c0_11, %c0_12] : memref<64x128xbf16, #tpu.memory_space<vmem>>, vector<64x128xbf16>
    %cst_13 = arith.constant dense<0.000000e+00> : vector<16x128xf32>
    %18 = tpu.matmul %16, %17, %cst_13 {dimension_numbers = #tpu.dot_dimension_numbers<[1], [0], [0], [1], [0, 0, 1, 1], [], []>} : vector<16x64xbf16>, vector<64x128xbf16>, vector<16x128xf32> -> vector<16x128xf32>
    %c0_14 = arith.constant 0 : index
    %c0_15 = arith.constant 0 : index
    %19 = vector.load %arg8[%c0_14, %c0_15] : memref<1x128xf32, #tpu.memory_space<vmem>>, vector<1x128xf32>
    %20 = vector.broadcast %19 : vector<1x128xf32> to vector<16x128xf32>
    %21 = arith.addf %18, %20 : vector<16x128xf32>
    %22 = arith.truncf %21 : vector<16x128xf32> to vector<16x128xbf16>
    %c0_16 = arith.constant 0 : index
    %c0_17 = arith.constant 0 : index
    %c0_18 = arith.constant 0 : index
    %23 = vector.load %arg9[%c0_16, %c0_17, %c0_18] : memref<1x16x128xbf16, #tpu.memory_space<vmem>>, vector<1x16x128xbf16>
    %24 = vector.shape_cast %23 : vector<1x16x128xbf16> to vector<16x128xbf16>
    %25 = vector.shape_cast %22 : vector<16x128xbf16> to vector<1x16x128xbf16>
    tpu.vector_store %arg9[%c0_16, %c0_17, %c0_18], %25 {strides = array<i32>} : memref<1x16x128xbf16, #tpu.memory_space<vmem>>, vector<1x16x128xbf16>,
    %c0_i32 = arith.constant 0 : i32
    %26 = arith.cmpi eq, %arg1, %c0_i32 : i32
    %27 = arith.extui %26 : i1 to i32
    %c0_i32_19 = arith.constant 0 : i32
    %28 = arith.cmpi ne, %27, %c0_i32_19 : i32
    scf.if %28 {
      %cst_34 = arith.constant 0.000000e+00 : f32
      %46 = vector.broadcast %cst_34 : f32 to vector<1x128xf32>
      %c0_35 = arith.constant 0 : index
      %c0_36 = arith.constant 0 : index
      %c0_37 = arith.constant 0 : index
      %47 = vector.load %arg10[%c0_35, %c0_36, %c0_37] : memref<1x1x128xf32, #tpu.memory_space<vmem>>, vector<1x1x128xf32>
      %48 = vector.shape_cast %47 : vector<1x1x128xf32> to vector<1x128xf32>
      %49 = vector.shape_cast %46 : vector<1x128xf32> to vector<1x1x128xf32>
      tpu.vector_store %arg10[%c0_35, %c0_36, %c0_37], %49 {strides = array<i32>} : memref<1x1x128xf32, #tpu.memory_space<vmem>>, vector<1x1x128xf32>,
      %cst_38 = arith.constant 0.000000e+00 : f32
      %50 = vector.broadcast %cst_38 : f32 to vector<1x128xf32>
      %c0_39 = arith.constant 0 : index
      %c0_40 = arith.constant 0 : index
      %c0_41 = arith.constant 0 : index
      %51 = vector.load %arg11[%c0_39, %c0_40, %c0_41] : memref<1x1x128xf32, #tpu.memory_space<vmem>>, vector<1x1x128xf32>
      %52 = vector.shape_cast %51 : vector<1x1x128xf32> to vector<1x128xf32>
      %53 = vector.shape_cast %50 : vector<1x128xf32> to vector<1x1x128xf32>
      tpu.vector_store %arg11[%c0_39, %c0_40, %c0_41], %53 {strides = array<i32>} : memref<1x1x128xf32, #tpu.memory_space<vmem>>, vector<1x1x128xf32>,
    } else {
    }
    %c0_20 = arith.constant 0 : index
    %c0_21 = arith.constant 0 : index
    %c0_22 = arith.constant 0 : index
    %29 = vector.load %arg10[%c0_20, %c0_21, %c0_22] : memref<1x1x128xf32, #tpu.memory_space<vmem>>, vector<1x1x128xf32>
    %30 = vector.shape_cast %29 : vector<1x1x128xf32> to vector<1x128xf32>
    %cst_23 = arith.constant dense<0.000000e+00> : vector<128xf32>
    %31 = vector.multi_reduction <add>, %21, %cst_23 [0] : vector<16x128xf32> to vector<128xf32>
    %32 = vector.shape_cast %31 : vector<128xf32> to vector<1x128xf32>
    %33 = arith.addf %30, %32 : vector<1x128xf32>
    %c0_24 = arith.constant 0 : index
    %c0_25 = arith.constant 0 : index
    %c0_26 = arith.constant 0 : index
    %34 = vector.load %arg10[%c0_24, %c0_25, %c0_26] : memref<1x1x128xf32, #tpu.memory_space<vmem>>, vector<1x1x128xf32>
    %35 = vector.shape_cast %34 : vector<1x1x128xf32> to vector<1x128xf32>
    %36 = vector.shape_cast %33 : vector<1x128xf32> to vector<1x1x128xf32>
    tpu.vector_store %arg10[%c0_24, %c0_25, %c0_26], %36 {strides = array<i32>} : memref<1x1x128xf32, #tpu.memory_space<vmem>>, vector<1x1x128xf32>,
    %c0_27 = arith.constant 0 : index
    %c0_28 = arith.constant 0 : index
    %c0_29 = arith.constant 0 : index
    %37 = vector.load %arg11[%c0_27, %c0_28, %c0_29] : memref<1x1x128xf32, #tpu.memory_space<vmem>>, vector<1x1x128xf32>
    %38 = vector.shape_cast %37 : vector<1x1x128xf32> to vector<1x128xf32>
    %39 = arith.mulf %21, %21 : vector<16x128xf32>
    %cst_30 = arith.constant dense<0.000000e+00> : vector<128xf32>
    %40 = vector.multi_reduction <add>, %39, %cst_30 [0] : vector<16x128xf32> to vector<128xf32>
    %41 = vector.shape_cast %40 : vector<128xf32> to vector<1x128xf32>
    %42 = arith.addf %38, %41 : vector<1x128xf32>
    %c0_31 = arith.constant 0 : index
    %c0_32 = arith.constant 0 : index
    %c0_33 = arith.constant 0 : index
    %43 = vector.load %arg11[%c0_31, %c0_32, %c0_33] : memref<1x1x128xf32, #tpu.memory_space<vmem>>, vector<1x1x128xf32>
    %44 = vector.shape_cast %43 : vector<1x1x128xf32> to vector<1x128xf32>
    %45 = vector.shape_cast %42 : vector<1x128xf32> to vector<1x1x128xf32>
    tpu.vector_store %arg11[%c0_31, %c0_32, %c0_33], %45 {strides = array<i32>} : memref<1x1x128xf32, #tpu.memory_space<vmem>>, vector<1x1x128xf32>,
    return
  }
  func.func @transform_0(%arg0: i32, %arg1: i32) -> (i32, i32, i32) {
    %c0_i32 = arith.constant 0 : i32
    %c0_i32_0 = arith.constant 0 : i32
    return %arg0, %arg1, %c0_i32 : i32, i32, i32
  }
  func.func @transform_1(%arg0: i32, %arg1: i32) -> (i32, i32) {
    %c0_i32 = arith.constant 0 : i32
    %c0_i32_0 = arith.constant 0 : i32
    %c0_i32_1 = arith.constant 0 : i32
    return %c0_i32, %c0_i32_0 : i32, i32
  }
  func.func @transform_2(%arg0: i32, %arg1: i32) -> (i32, i32) {
    %c0_i32 = arith.constant 0 : i32
    %c0_i32_0 = arith.constant 0 : i32
    %c0_i32_1 = arith.constant 0 : i32
    return %c0_i32, %c0_i32_0 : i32, i32
  }
  func.func @transform_3(%arg0: i32, %arg1: i32) -> (i32, i32) {
    %c0_i32 = arith.constant 0 : i32
    %c0_i32_0 = arith.constant 0 : i32
    %c0_i32_1 = arith.constant 0 : i32
    return %c0_i32, %c0_i32_0 : i32, i32
  }
  func.func @transform_4(%arg0: i32, %arg1: i32) -> (i32, i32) {
    %c0_i32 = arith.constant 0 : i32
    %c0_i32_0 = arith.constant 0 : i32
    %c0_i32_1 = arith.constant 0 : i32
    return %c0_i32, %c0_i32_0 : i32, i32
  }
  func.func @transform_5(%arg0: i32, %arg1: i32) -> (i32, i32) {
    %c0_i32 = arith.constant 0 : i32
    %c0_i32_0 = arith.constant 0 : i32
    %c0_i32_1 = arith.constant 0 : i32
    return %c0_i32, %c0_i32_0 : i32, i32
  }
  func.func @transform_6(%arg0: i32, %arg1: i32) -> (i32, i32) {
    %c0_i32 = arith.constant 0 : i32
    %c0_i32_0 = arith.constant 0 : i32
    %c0_i32_1 = arith.constant 0 : i32
    return %c0_i32, %c0_i32_0 : i32, i32
  }
  func.func @transform_7(%arg0: i32, %arg1: i32) -> (i32, i32, i32) {
    %c0_i32 = arith.constant 0 : i32
    %c0_i32_0 = arith.constant 0 : i32
    return %arg0, %arg1, %c0_i32 : i32, i32, i32
  }
  func.func @transform_8(%arg0: i32, %arg1: i32) -> (i32, i32, i32) {
    %c0_i32 = arith.constant 0 : i32
    %c0_i32_0 = arith.constant 0 : i32
    %c0_i32_1 = arith.constant 0 : i32
    return %arg0, %c0_i32, %c0_i32_0 : i32, i32, i32
  }
  func.func @transform_9(%arg0: i32, %arg1: i32) -> (i32, i32, i32) {
    %c0_i32 = arith.constant 0 : i32
    %c0_i32_0 = arith.constant 0 : i32
    %c0_i32_1 = arith.constant 0 : i32
    return %arg0, %c0_i32, %c0_i32_0 : i32, i32, i32
  }
}

module attributes {stable_mosaic.version = 11 : i64} {
  func.func @_conv3_kernel(%arg0: i32, %arg1: i32, %arg2: memref<1x16x128xbf16, #tpu.memory_space<vmem>>, %arg3: memref<1x128xf32, #tpu.memory_space<vmem>>, %arg4: memref<1x128xf32, #tpu.memory_space<vmem>>, %arg5: memref<128x1024xbf16, #tpu.memory_space<vmem>>, %arg6: memref<1x1024xf32, #tpu.memory_space<vmem>>, %arg7: memref<1x1x1024xf32, #tpu.memory_space<vmem>>, %arg8: memref<1x1x1024xf32, #tpu.memory_space<vmem>>, %arg9: memref<1x1x1024xf32, #tpu.memory_space<vmem>>, %arg10: memref<1x1x1024xf32, #tpu.memory_space<vmem>>) attributes {dimension_semantics = [#tpu.dimension_semantics<parallel>, #tpu.dimension_semantics<arbitrary>], iteration_bounds = array<i64: 2, 1>, scalar_prefetch = 0 : i64, scratch_operands = 0 : i64, tpu.core_type = #tpu.core_type<tc>, window_params = [{transform_indices = @transform_0, window_bounds = array<i64: 1, 16, 128>}, {pipeline_mode = #tpu.pipeline_mode<synchronous>, transform_indices = @transform_1, window_bounds = array<i64: 1, 128>}, {pipeline_mode = #tpu.pipeline_mode<synchronous>, transform_indices = @transform_2, window_bounds = array<i64: 1, 128>}, {pipeline_mode = #tpu.pipeline_mode<synchronous>, transform_indices = @transform_3, window_bounds = array<i64: 128, 1024>}, {pipeline_mode = #tpu.pipeline_mode<synchronous>, transform_indices = @transform_4, window_bounds = array<i64: 1, 1024>}, {transform_indices = @transform_5, window_bounds = array<i64: 1, 1, 1024>}, {transform_indices = @transform_6, window_bounds = array<i64: 1, 1, 1024>}, {transform_indices = @transform_7, window_bounds = array<i64: 1, 1, 1024>}, {transform_indices = @transform_8, window_bounds = array<i64: 1, 1, 1024>}]} {
    %c0 = arith.constant 0 : index
    %c0_0 = arith.constant 0 : index
    %c0_1 = arith.constant 0 : index
    %0 = vector.load %arg2[%c0, %c0_0, %c0_1] : memref<1x16x128xbf16, #tpu.memory_space<vmem>>, vector<1x16x128xbf16>
    %1 = vector.shape_cast %0 : vector<1x16x128xbf16> to vector<16x128xbf16>
    %2 = arith.extf %1 : vector<16x128xbf16> to vector<16x128xf32>
    %c0_2 = arith.constant 0 : index
    %c0_3 = arith.constant 0 : index
    %3 = vector.load %arg3[%c0_2, %c0_3] : memref<1x128xf32, #tpu.memory_space<vmem>>, vector<1x128xf32>
    %4 = vector.broadcast %3 : vector<1x128xf32> to vector<16x128xf32>
    %5 = arith.mulf %2, %4 : vector<16x128xf32>
    %c0_4 = arith.constant 0 : index
    %c0_5 = arith.constant 0 : index
    %6 = vector.load %arg4[%c0_4, %c0_5] : memref<1x128xf32, #tpu.memory_space<vmem>>, vector<1x128xf32>
    %7 = vector.broadcast %6 : vector<1x128xf32> to vector<16x128xf32>
    %8 = arith.addf %5, %7 : vector<16x128xf32>
    %cst = arith.constant 0.000000e+00 : f32
    %9 = vector.broadcast %cst : f32 to vector<16x128xf32>
    %10 = arith.maximumf %8, %9 : vector<16x128xf32>
    %11 = arith.truncf %10 : vector<16x128xf32> to vector<16x128xbf16>
    %c0_6 = arith.constant 0 : index
    %c0_7 = arith.constant 0 : index
    %12 = vector.load %arg5[%c0_6, %c0_7] : memref<128x1024xbf16, #tpu.memory_space<vmem>>, vector<128x1024xbf16>
    %cst_8 = arith.constant dense<0.000000e+00> : vector<16x1024xf32>
    %13 = tpu.matmul %11, %12, %cst_8 {dimension_numbers = #tpu.dot_dimension_numbers<[1], [0], [0], [1], [0, 0, 1, 1], [], []>} : vector<16x128xbf16>, vector<128x1024xbf16>, vector<16x1024xf32> -> vector<16x1024xf32>
    %c0_9 = arith.constant 0 : index
    %c0_10 = arith.constant 0 : index
    %14 = vector.load %arg6[%c0_9, %c0_10] : memref<1x1024xf32, #tpu.memory_space<vmem>>, vector<1x1024xf32>
    %15 = vector.broadcast %14 : vector<1x1024xf32> to vector<16x1024xf32>
    %16 = arith.addf %13, %15 : vector<16x1024xf32>
    %c0_i32 = arith.constant 0 : i32
    %17 = arith.cmpi eq, %arg1, %c0_i32 : i32
    %18 = arith.extui %17 : i1 to i32
    %c0_i32_11 = arith.constant 0 : i32
    %19 = arith.cmpi ne, %18, %c0_i32_11 : i32
    scf.if %19 {
      %cst_40 = arith.constant 0.000000e+00 : f32
      %53 = vector.broadcast %cst_40 : f32 to vector<1x1024xf32>
      %c0_41 = arith.constant 0 : index
      %c0_42 = arith.constant 0 : index
      %c0_43 = arith.constant 0 : index
      %54 = vector.load %arg7[%c0_41, %c0_42, %c0_43] : memref<1x1x1024xf32, #tpu.memory_space<vmem>>, vector<1x1x1024xf32>
      %55 = vector.shape_cast %54 : vector<1x1x1024xf32> to vector<1x1024xf32>
      %56 = vector.shape_cast %53 : vector<1x1024xf32> to vector<1x1x1024xf32>
      tpu.vector_store %arg7[%c0_41, %c0_42, %c0_43], %56 {strides = array<i32>} : memref<1x1x1024xf32, #tpu.memory_space<vmem>>, vector<1x1x1024xf32>,
      %cst_44 = arith.constant 0.000000e+00 : f32
      %57 = vector.broadcast %cst_44 : f32 to vector<1x1024xf32>
      %c0_45 = arith.constant 0 : index
      %c0_46 = arith.constant 0 : index
      %c0_47 = arith.constant 0 : index
      %58 = vector.load %arg8[%c0_45, %c0_46, %c0_47] : memref<1x1x1024xf32, #tpu.memory_space<vmem>>, vector<1x1x1024xf32>
      %59 = vector.shape_cast %58 : vector<1x1x1024xf32> to vector<1x1024xf32>
      %60 = vector.shape_cast %57 : vector<1x1024xf32> to vector<1x1x1024xf32>
      tpu.vector_store %arg8[%c0_45, %c0_46, %c0_47], %60 {strides = array<i32>} : memref<1x1x1024xf32, #tpu.memory_space<vmem>>, vector<1x1x1024xf32>,
      %cst_48 = arith.constant 0xFF800000 : f32
      %61 = vector.broadcast %cst_48 : f32 to vector<1x1024xf32>
      %c0_49 = arith.constant 0 : index
      %c0_50 = arith.constant 0 : index
      %c0_51 = arith.constant 0 : index
      %62 = vector.load %arg9[%c0_49, %c0_50, %c0_51] : memref<1x1x1024xf32, #tpu.memory_space<vmem>>, vector<1x1x1024xf32>
      %63 = vector.shape_cast %62 : vector<1x1x1024xf32> to vector<1x1024xf32>
      %64 = vector.shape_cast %61 : vector<1x1024xf32> to vector<1x1x1024xf32>
      tpu.vector_store %arg9[%c0_49, %c0_50, %c0_51], %64 {strides = array<i32>} : memref<1x1x1024xf32, #tpu.memory_space<vmem>>, vector<1x1x1024xf32>,
      %cst_52 = arith.constant 0x7F800000 : f32
      %65 = vector.broadcast %cst_52 : f32 to vector<1x1024xf32>
      %c0_53 = arith.constant 0 : index
      %c0_54 = arith.constant 0 : index
      %c0_55 = arith.constant 0 : index
      %66 = vector.load %arg10[%c0_53, %c0_54, %c0_55] : memref<1x1x1024xf32, #tpu.memory_space<vmem>>, vector<1x1x1024xf32>
      %67 = vector.shape_cast %66 : vector<1x1x1024xf32> to vector<1x1024xf32>
      %68 = vector.shape_cast %65 : vector<1x1024xf32> to vector<1x1x1024xf32>
      tpu.vector_store %arg10[%c0_53, %c0_54, %c0_55], %68 {strides = array<i32>} : memref<1x1x1024xf32, #tpu.memory_space<vmem>>, vector<1x1x1024xf32>,
    } else {
    }
    %c0_12 = arith.constant 0 : index
    %c0_13 = arith.constant 0 : index
    %c0_14 = arith.constant 0 : index
    %20 = vector.load %arg7[%c0_12, %c0_13, %c0_14] : memref<1x1x1024xf32, #tpu.memory_space<vmem>>, vector<1x1x1024xf32>
    %21 = vector.shape_cast %20 : vector<1x1x1024xf32> to vector<1x1024xf32>
    %cst_15 = arith.constant dense<0.000000e+00> : vector<1024xf32>
    %22 = vector.multi_reduction <add>, %16, %cst_15 [0] : vector<16x1024xf32> to vector<1024xf32>
    %23 = vector.shape_cast %22 : vector<1024xf32> to vector<1x1024xf32>
    %24 = arith.addf %21, %23 : vector<1x1024xf32>
    %c0_16 = arith.constant 0 : index
    %c0_17 = arith.constant 0 : index
    %c0_18 = arith.constant 0 : index
    %25 = vector.load %arg7[%c0_16, %c0_17, %c0_18] : memref<1x1x1024xf32, #tpu.memory_space<vmem>>, vector<1x1x1024xf32>
    %26 = vector.shape_cast %25 : vector<1x1x1024xf32> to vector<1x1024xf32>
    %27 = vector.shape_cast %24 : vector<1x1024xf32> to vector<1x1x1024xf32>
    tpu.vector_store %arg7[%c0_16, %c0_17, %c0_18], %27 {strides = array<i32>} : memref<1x1x1024xf32, #tpu.memory_space<vmem>>, vector<1x1x1024xf32>,
    %c0_19 = arith.constant 0 : index
    %c0_20 = arith.constant 0 : index
    %c0_21 = arith.constant 0 : index
    %28 = vector.load %arg8[%c0_19, %c0_20, %c0_21] : memref<1x1x1024xf32, #tpu.memory_space<vmem>>, vector<1x1x1024xf32>
    %29 = vector.shape_cast %28 : vector<1x1x1024xf32> to vector<1x1024xf32>
    %30 = arith.mulf %16, %16 : vector<16x1024xf32>
    %cst_22 = arith.constant dense<0.000000e+00> : vector<1024xf32>
    %31 = vector.multi_reduction <add>, %30, %cst_22 [0] : vector<16x1024xf32> to vector<1024xf32>
    %32 = vector.shape_cast %31 : vector<1024xf32> to vector<1x1024xf32>
    %33 = arith.addf %29, %32 : vector<1x1024xf32>
    %c0_23 = arith.constant 0 : index
    %c0_24 = arith.constant 0 : index
    %c0_25 = arith.constant 0 : index
    %34 = vector.load %arg8[%c0_23, %c0_24, %c0_25] : memref<1x1x1024xf32, #tpu.memory_space<vmem>>, vector<1x1x1024xf32>
    %35 = vector.shape_cast %34 : vector<1x1x1024xf32> to vector<1x1024xf32>
    %36 = vector.shape_cast %33 : vector<1x1024xf32> to vector<1x1x1024xf32>
    tpu.vector_store %arg8[%c0_23, %c0_24, %c0_25], %36 {strides = array<i32>} : memref<1x1x1024xf32, #tpu.memory_space<vmem>>, vector<1x1x1024xf32>,
    %c0_26 = arith.constant 0 : index
    %c0_27 = arith.constant 0 : index
    %c0_28 = arith.constant 0 : index
    %37 = vector.load %arg9[%c0_26, %c0_27, %c0_28] : memref<1x1x1024xf32, #tpu.memory_space<vmem>>, vector<1x1x1024xf32>
    %38 = vector.shape_cast %37 : vector<1x1x1024xf32> to vector<1x1024xf32>
    %cst_29 = arith.constant dense<0xFF800000> : vector<1024xf32>
    %39 = vector.multi_reduction <maximumf>, %16, %cst_29 [0] : vector<16x1024xf32> to vector<1024xf32>
    %40 = vector.shape_cast %39 : vector<1024xf32> to vector<1x1024xf32>
    %41 = arith.maximumf %38, %40 : vector<1x1024xf32>
    %c0_30 = arith.constant 0 : index
    %c0_31 = arith.constant 0 : index
    %c0_32 = arith.constant 0 : index
    %42 = vector.load %arg9[%c0_30, %c0_31, %c0_32] : memref<1x1x1024xf32, #tpu.memory_space<vmem>>, vector<1x1x1024xf32>
    %43 = vector.shape_cast %42 : vector<1x1x1024xf32> to vector<1x1024xf32>
    %44 = vector.shape_cast %41 : vector<1x1024xf32> to vector<1x1x1024xf32>
    tpu.vector_store %arg9[%c0_30, %c0_31, %c0_32], %44 {strides = array<i32>} : memref<1x1x1024xf32, #tpu.memory_space<vmem>>, vector<1x1x1024xf32>,
    %c0_33 = arith.constant 0 : index
    %c0_34 = arith.constant 0 : index
    %c0_35 = arith.constant 0 : index
    %45 = vector.load %arg10[%c0_33, %c0_34, %c0_35] : memref<1x1x1024xf32, #tpu.memory_space<vmem>>, vector<1x1x1024xf32>
    %46 = vector.shape_cast %45 : vector<1x1x1024xf32> to vector<1x1024xf32>
    %cst_36 = arith.constant dense<0x7F800000> : vector<1024xf32>
    %47 = vector.multi_reduction <minimumf>, %16, %cst_36 [0] : vector<16x1024xf32> to vector<1024xf32>
    %48 = vector.shape_cast %47 : vector<1024xf32> to vector<1x1024xf32>
    %49 = arith.minimumf %46, %48 : vector<1x1024xf32>
    %c0_37 = arith.constant 0 : index
    %c0_38 = arith.constant 0 : index
    %c0_39 = arith.constant 0 : index
    %50 = vector.load %arg10[%c0_37, %c0_38, %c0_39] : memref<1x1x1024xf32, #tpu.memory_space<vmem>>, vector<1x1x1024xf32>
    %51 = vector.shape_cast %50 : vector<1x1x1024xf32> to vector<1x1024xf32>
    %52 = vector.shape_cast %49 : vector<1x1024xf32> to vector<1x1x1024xf32>
    tpu.vector_store %arg10[%c0_37, %c0_38, %c0_39], %52 {strides = array<i32>} : memref<1x1x1024xf32, #tpu.memory_space<vmem>>, vector<1x1x1024xf32>,
    return
  }
  func.func @transform_0(%arg0: i32, %arg1: i32) -> (i32, i32, i32) {
    %c0_i32 = arith.constant 0 : i32
    %c0_i32_0 = arith.constant 0 : i32
    return %arg0, %arg1, %c0_i32 : i32, i32, i32
  }
  func.func @transform_1(%arg0: i32, %arg1: i32) -> (i32, i32) {
    %c0_i32 = arith.constant 0 : i32
    %c0_i32_0 = arith.constant 0 : i32
    %c0_i32_1 = arith.constant 0 : i32
    return %c0_i32, %c0_i32_0 : i32, i32
  }
  func.func @transform_2(%arg0: i32, %arg1: i32) -> (i32, i32) {
    %c0_i32 = arith.constant 0 : i32
    %c0_i32_0 = arith.constant 0 : i32
    %c0_i32_1 = arith.constant 0 : i32
    return %c0_i32, %c0_i32_0 : i32, i32
  }
  func.func @transform_3(%arg0: i32, %arg1: i32) -> (i32, i32) {
    %c0_i32 = arith.constant 0 : i32
    %c0_i32_0 = arith.constant 0 : i32
    %c0_i32_1 = arith.constant 0 : i32
    return %c0_i32, %c0_i32_0 : i32, i32
  }
  func.func @transform_4(%arg0: i32, %arg1: i32) -> (i32, i32) {
    %c0_i32 = arith.constant 0 : i32
    %c0_i32_0 = arith.constant 0 : i32
    %c0_i32_1 = arith.constant 0 : i32
    return %c0_i32, %c0_i32_0 : i32, i32
  }
  func.func @transform_5(%arg0: i32, %arg1: i32) -> (i32, i32, i32) {
    %c0_i32 = arith.constant 0 : i32
    %c0_i32_0 = arith.constant 0 : i32
    %c0_i32_1 = arith.constant 0 : i32
    return %arg0, %c0_i32, %c0_i32_0 : i32, i32, i32
  }
  func.func @transform_6(%arg0: i32, %arg1: i32) -> (i32, i32, i32) {
    %c0_i32 = arith.constant 0 : i32
    %c0_i32_0 = arith.constant 0 : i32
    %c0_i32_1 = arith.constant 0 : i32
    return %arg0, %c0_i32, %c0_i32_0 : i32, i32, i32
  }
  func.func @transform_7(%arg0: i32, %arg1: i32) -> (i32, i32, i32) {
    %c0_i32 = arith.constant 0 : i32
    %c0_i32_0 = arith.constant 0 : i32
    %c0_i32_1 = arith.constant 0 : i32
    return %arg0, %c0_i32, %c0_i32_0 : i32, i32, i32
  }
  func.func @transform_8(%arg0: i32, %arg1: i32) -> (i32, i32, i32) {
    %c0_i32 = arith.constant 0 : i32
    %c0_i32_0 = arith.constant 0 : i32
    %c0_i32_1 = arith.constant 0 : i32
    return %arg0, %c0_i32, %c0_i32_0 : i32, i32, i32
  }
}

module attributes {stable_mosaic.version = 11 : i64} {
  func.func @_head_kernel(%arg0: i32, %arg1: memref<2x1024xf32, #tpu.memory_space<vmem>>, %arg2: memref<2x1024xf32, #tpu.memory_space<vmem>>, %arg3: memref<1x1024xf32, #tpu.memory_space<vmem>>, %arg4: memref<1x1024xf32, #tpu.memory_space<vmem>>, %arg5: memref<1024x512xbf16, #tpu.memory_space<vmem>>, %arg6: memref<1x512xf32, #tpu.memory_space<vmem>>, %arg7: memref<512x256xbf16, #tpu.memory_space<vmem>>, %arg8: memref<1x256xf32, #tpu.memory_space<vmem>>, %arg9: memref<256x128xbf16, #tpu.memory_space<vmem>>, %arg10: memref<1x128xf32, #tpu.memory_space<vmem>>, %arg11: memref<1x128xf32, #tpu.memory_space<vmem>>, %arg12: memref<2x128xf32, #tpu.memory_space<vmem>>) attributes {dimension_semantics = [#tpu.dimension_semantics<arbitrary>], iteration_bounds = array<i64: 1>, scalar_prefetch = 0 : i64, scratch_operands = 0 : i64, tpu.core_type = #tpu.core_type<tc>, window_params = [{pipeline_mode = #tpu.pipeline_mode<synchronous>, transform_indices = @transform_0, window_bounds = array<i64: 2, 1024>}, {pipeline_mode = #tpu.pipeline_mode<synchronous>, transform_indices = @transform_1, window_bounds = array<i64: 2, 1024>}, {pipeline_mode = #tpu.pipeline_mode<synchronous>, transform_indices = @transform_2, window_bounds = array<i64: 1, 1024>}, {pipeline_mode = #tpu.pipeline_mode<synchronous>, transform_indices = @transform_3, window_bounds = array<i64: 1, 1024>}, {pipeline_mode = #tpu.pipeline_mode<synchronous>, transform_indices = @transform_4, window_bounds = array<i64: 1024, 512>}, {pipeline_mode = #tpu.pipeline_mode<synchronous>, transform_indices = @transform_5, window_bounds = array<i64: 1, 512>}, {pipeline_mode = #tpu.pipeline_mode<synchronous>, transform_indices = @transform_6, window_bounds = array<i64: 512, 256>}, {pipeline_mode = #tpu.pipeline_mode<synchronous>, transform_indices = @transform_7, window_bounds = array<i64: 1, 256>}, {pipeline_mode = #tpu.pipeline_mode<synchronous>, transform_indices = @transform_8, window_bounds = array<i64: 256, 128>}, {pipeline_mode = #tpu.pipeline_mode<synchronous>, transform_indices = @transform_9, window_bounds = array<i64: 1, 128>}, {pipeline_mode = #tpu.pipeline_mode<synchronous>, transform_indices = @transform_10, window_bounds = array<i64: 1, 128>}, {pipeline_mode = #tpu.pipeline_mode<synchronous>, transform_indices = @transform_11, window_bounds = array<i64: 2, 128>}]} {
    %c0 = arith.constant 0 : index
    %c0_0 = arith.constant 0 : index
    %0 = vector.load %arg1[%c0, %c0_0] : memref<2x1024xf32, #tpu.memory_space<vmem>>, vector<2x1024xf32>
    %c0_1 = arith.constant 0 : index
    %c0_2 = arith.constant 0 : index
    %1 = vector.load %arg3[%c0_1, %c0_2] : memref<1x1024xf32, #tpu.memory_space<vmem>>, vector<1x1024xf32>
    %2 = vector.broadcast %1 : vector<1x1024xf32> to vector<2x1024xf32>
    %3 = arith.mulf %0, %2 : vector<2x1024xf32>
    %c0_3 = arith.constant 0 : index
    %c0_4 = arith.constant 0 : index
    %4 = vector.load %arg4[%c0_3, %c0_4] : memref<1x1024xf32, #tpu.memory_space<vmem>>, vector<1x1024xf32>
    %5 = vector.broadcast %4 : vector<1x1024xf32> to vector<2x1024xf32>
    %6 = arith.addf %3, %5 : vector<2x1024xf32>
    %cst = arith.constant 0.000000e+00 : f32
    %7 = vector.broadcast %cst : f32 to vector<2x1024xf32>
    %8 = arith.maximumf %6, %7 : vector<2x1024xf32>
    %c0_5 = arith.constant 0 : index
    %c0_6 = arith.constant 0 : index
    %9 = vector.load %arg2[%c0_5, %c0_6] : memref<2x1024xf32, #tpu.memory_space<vmem>>, vector<2x1024xf32>
    %c0_7 = arith.constant 0 : index
    %c0_8 = arith.constant 0 : index
    %10 = vector.load %arg3[%c0_7, %c0_8] : memref<1x1024xf32, #tpu.memory_space<vmem>>, vector<1x1024xf32>
    %11 = vector.broadcast %10 : vector<1x1024xf32> to vector<2x1024xf32>
    %12 = arith.mulf %9, %11 : vector<2x1024xf32>
    %c0_9 = arith.constant 0 : index
    %c0_10 = arith.constant 0 : index
    %13 = vector.load %arg4[%c0_9, %c0_10] : memref<1x1024xf32, #tpu.memory_space<vmem>>, vector<1x1024xf32>
    %14 = vector.broadcast %13 : vector<1x1024xf32> to vector<2x1024xf32>
    %15 = arith.addf %12, %14 : vector<2x1024xf32>
    %cst_11 = arith.constant 0.000000e+00 : f32
    %16 = vector.broadcast %cst_11 : f32 to vector<2x1024xf32>
    %17 = arith.maximumf %15, %16 : vector<2x1024xf32>
    %18 = arith.maximumf %8, %17 : vector<2x1024xf32>
    %19 = arith.truncf %18 : vector<2x1024xf32> to vector<2x1024xbf16>
    %c0_12 = arith.constant 0 : index
    %c0_13 = arith.constant 0 : index
    %20 = vector.load %arg5[%c0_12, %c0_13] : memref<1024x512xbf16, #tpu.memory_space<vmem>>, vector<1024x512xbf16>
    %cst_14 = arith.constant dense<0.000000e+00> : vector<2x512xf32>
    %21 = tpu.matmul %19, %20, %cst_14 {dimension_numbers = #tpu.dot_dimension_numbers<[1], [0], [0], [1], [0, 0, 1, 1], [], []>} : vector<2x1024xbf16>, vector<1024x512xbf16>, vector<2x512xf32> -> vector<2x512xf32>
    %c0_15 = arith.constant 0 : index
    %c0_16 = arith.constant 0 : index
    %22 = vector.load %arg6[%c0_15, %c0_16] : memref<1x512xf32, #tpu.memory_space<vmem>>, vector<1x512xf32>
    %23 = vector.broadcast %22 : vector<1x512xf32> to vector<2x512xf32>
    %24 = arith.addf %21, %23 : vector<2x512xf32>
    %25 = arith.truncf %24 : vector<2x512xf32> to vector<2x512xbf16>
    %c0_17 = arith.constant 0 : index
    %c0_18 = arith.constant 0 : index
    %26 = vector.load %arg7[%c0_17, %c0_18] : memref<512x256xbf16, #tpu.memory_space<vmem>>, vector<512x256xbf16>
    %cst_19 = arith.constant dense<0.000000e+00> : vector<2x256xf32>
    %27 = tpu.matmul %25, %26, %cst_19 {dimension_numbers = #tpu.dot_dimension_numbers<[1], [0], [0], [1], [0, 0, 1, 1], [], []>} : vector<2x512xbf16>, vector<512x256xbf16>, vector<2x256xf32> -> vector<2x256xf32>
    %c0_20 = arith.constant 0 : index
    %c0_21 = arith.constant 0 : index
    %28 = vector.load %arg8[%c0_20, %c0_21] : memref<1x256xf32, #tpu.memory_space<vmem>>, vector<1x256xf32>
    %29 = vector.broadcast %28 : vector<1x256xf32> to vector<2x256xf32>
    %30 = arith.addf %27, %29 : vector<2x256xf32>
    %31 = arith.truncf %30 : vector<2x256xf32> to vector<2x256xbf16>
    %c0_22 = arith.constant 0 : index
    %c0_23 = arith.constant 0 : index
    %32 = vector.load %arg9[%c0_22, %c0_23] : memref<256x128xbf16, #tpu.memory_space<vmem>>, vector<256x128xbf16>
    %cst_24 = arith.constant dense<0.000000e+00> : vector<2x128xf32>
    %33 = tpu.matmul %31, %32, %cst_24 {dimension_numbers = #tpu.dot_dimension_numbers<[1], [0], [0], [1], [0, 0, 1, 1], [], []>} : vector<2x256xbf16>, vector<256x128xbf16>, vector<2x128xf32> -> vector<2x128xf32>
    %c0_25 = arith.constant 0 : index
    %c0_26 = arith.constant 0 : index
    %34 = vector.load %arg10[%c0_25, %c0_26] : memref<1x128xf32, #tpu.memory_space<vmem>>, vector<1x128xf32>
    %35 = vector.broadcast %34 : vector<1x128xf32> to vector<2x128xf32>
    %36 = arith.addf %33, %35 : vector<2x128xf32>
    %c0_27 = arith.constant 0 : index
    %c0_28 = arith.constant 0 : index
    %37 = vector.load %arg11[%c0_27, %c0_28] : memref<1x128xf32, #tpu.memory_space<vmem>>, vector<1x128xf32>
    %38 = vector.broadcast %37 : vector<1x128xf32> to vector<2x128xf32>
    %39 = arith.addf %36, %38 : vector<2x128xf32>
    %c0_29 = arith.constant 0 : index
    %c0_30 = arith.constant 0 : index
    %40 = vector.load %arg12[%c0_29, %c0_30] : memref<2x128xf32, #tpu.memory_space<vmem>>, vector<2x128xf32>
    tpu.vector_store %arg12[%c0_29, %c0_30], %39 {strides = array<i32>} : memref<2x128xf32, #tpu.memory_space<vmem>>, vector<2x128xf32>,
    return
  }
  func.func @transform_0(%arg0: i32) -> (i32, i32) {
    %c0_i32 = arith.constant 0 : i32
    %c0_i32_0 = arith.constant 0 : i32
    %c0_i32_1 = arith.constant 0 : i32
    return %c0_i32, %c0_i32_0 : i32, i32
  }
  func.func @transform_1(%arg0: i32) -> (i32, i32) {
    %c0_i32 = arith.constant 0 : i32
    %c0_i32_0 = arith.constant 0 : i32
    %c0_i32_1 = arith.constant 0 : i32
    return %c0_i32, %c0_i32_0 : i32, i32
  }
  func.func @transform_2(%arg0: i32) -> (i32, i32) {
    %c0_i32 = arith.constant 0 : i32
    %c0_i32_0 = arith.constant 0 : i32
    %c0_i32_1 = arith.constant 0 : i32
    return %c0_i32, %c0_i32_0 : i32, i32
  }
  func.func @transform_3(%arg0: i32) -> (i32, i32) {
    %c0_i32 = arith.constant 0 : i32
    %c0_i32_0 = arith.constant 0 : i32
    %c0_i32_1 = arith.constant 0 : i32
    return %c0_i32, %c0_i32_0 : i32, i32
  }
  func.func @transform_4(%arg0: i32) -> (i32, i32) {
    %c0_i32 = arith.constant 0 : i32
    %c0_i32_0 = arith.constant 0 : i32
    %c0_i32_1 = arith.constant 0 : i32
    return %c0_i32, %c0_i32_0 : i32, i32
  }
  func.func @transform_5(%arg0: i32) -> (i32, i32) {
    %c0_i32 = arith.constant 0 : i32
    %c0_i32_0 = arith.constant 0 : i32
    %c0_i32_1 = arith.constant 0 : i32
    return %c0_i32, %c0_i32_0 : i32, i32
  }
  func.func @transform_6(%arg0: i32) -> (i32, i32) {
    %c0_i32 = arith.constant 0 : i32
    %c0_i32_0 = arith.constant 0 : i32
    %c0_i32_1 = arith.constant 0 : i32
    return %c0_i32, %c0_i32_0 : i32, i32
  }
  func.func @transform_7(%arg0: i32) -> (i32, i32) {
    %c0_i32 = arith.constant 0 : i32
    %c0_i32_0 = arith.constant 0 : i32
    %c0_i32_1 = arith.constant 0 : i32
    return %c0_i32, %c0_i32_0 : i32, i32
  }
  func.func @transform_8(%arg0: i32) -> (i32, i32) {
    %c0_i32 = arith.constant 0 : i32
    %c0_i32_0 = arith.constant 0 : i32
    %c0_i32_1 = arith.constant 0 : i32
    return %c0_i32, %c0_i32_0 : i32, i32
  }
  func.func @transform_9(%arg0: i32) -> (i32, i32) {
    %c0_i32 = arith.constant 0 : i32
    %c0_i32_0 = arith.constant 0 : i32
    %c0_i32_1 = arith.constant 0 : i32
    return %c0_i32, %c0_i32_0 : i32, i32
  }
  func.func @transform_10(%arg0: i32) -> (i32, i32) {
    %c0_i32 = arith.constant 0 : i32
    %c0_i32_0 = arith.constant 0 : i32
    %c0_i32_1 = arith.constant 0 : i32
    return %c0_i32, %c0_i32_0 : i32, i32
  }
  func.func @transform_11(%arg0: i32) -> (i32, i32) {
    %c0_i32 = arith.constant 0 : i32
    %c0_i32_0 = arith.constant 0 : i32
    %c0_i32_1 = arith.constant 0 : i32
    return %c0_i32, %c0_i32_0 : i32, i32
  }
}

</mosaic_0001>

<llo_original>
// kernel: tnet_forward.5
$region0: #{tnet_forward.5}
  #allocation0 [shape = 'u32[]', space=smem, size = 0x4, offset = 0x4, fixed_abs, tag = 'smem constant byte address 0x4 - core index']
  #allocation1 [shape = 'u32[144,128]{1,0:T(1,128)}', space=vmem, size = 0x12000, scoped, tag = 'internal scratch']
  %s0 = inlined_call_operand.vmem [shape: f32[2,16,8], index: 0, kind: input, shape index: {}]
  %s1 = inlined_call_operand.vmem [shape: f32[1,64], index: 1, kind: input, shape index: {}]
  %s2 = inlined_call_operand.vmem [shape: f32[1,64], index: 2, kind: input, shape index: {}]
  %s3 = inlined_call_operand.vmem [shape: bf16[8,64], index: 3, kind: input, shape index: {}]
  %s4 = inlined_call_operand.hbm [shape: f32[1,64], index: 4, kind: input, shape index: {}]
  %s5 = inlined_call_operand.vmem [shape: bf16[64,128], index: 5, kind: input, shape index: {}]
  %s6 = inlined_call_operand.hbm [shape: f32[1,128], index: 6, kind: input, shape index: {}]
  %s7 = inlined_call_operand.vmem [shape: bf16[2,16,128], index: 7, kind: output, shape index: {0}]
  %s8 = inlined_call_operand.vmem [shape: f32[2,1,128], index: 8, kind: output, shape index: {1}]
  %s9 = inlined_call_operand.vmem [shape: f32[2,1,128], index: 9, kind: output, shape index: {2}]
  %10 = xla_tuple %s7, %s8, %s9
  %s11 = sld [smem:[#allocation0]]
  $region89: #{tnet_forward.5} parent=0
    _
  %s13 = ssub.s32 1, %s11
  %s14 = scalar_select 0, %s13, %s11
  $region1: #{tnet_forward.5} parent=0
    #allocation2 [shape = 'u8[512]{0}', space=vmem, size = 0x400, scoped, tag = 'input window, operand 4, single buffered']
    #allocation3 [shape = 's32[2]{0}', space=sflag, size = 0x8, scoped, tag = 'scoped memory for tnet_forward.5']
    #allocation4 [shape = 'u8[512]{0}', space=vmem, size = 0x400, scoped, tag = 'input window, operand 6, single buffered']
    #allocation5 [shape = 's32[1]{0}', space=sflag, size = 0x4, scoped, tag = 'scoped memory for tnet_forward.5']
    %15 = vsyncpa [#allocation3], 0
    %16 = vsyncpa [#allocation5], 0
    loop: start=0, step=1, limit=4
    $region2: #{tnet_forward.5} parent=1 // loop_pre_header
      _
    $region3: #{tnet_forward.5} parent=1 // loop_header
      %s18 = sphi 0, %s22
      %p19 = scmp.ge.s32.totalorder %s18, 4
      %s25 = sphi 0, %s37
      %s26 = sphi 0, %s33
      %s27 = sphi 0, %s25
      %s28 = sphi 0, %s26
      %s29 = sphi 0, %s27
      %s30 = sphi 0, %s28
      %s42 = sphi 0, %s44
      %s45 = sphi 0, %s42
      %s46 = sphi 0, %s45
      %s62 = sphi 0, %s46
      %s66 = sphi 0, %s66
      %s68 = sphi 0, %s66
      %s69 = sphi 0, %s68
      %s83 = sphi 0, %s69
      %s87 = sphi 0, %s87
      %s89 = sphi 0, %s87
      %s90 = sphi 0, %s89
      %s104 = sphi 0, %s90
      %s108 = sphi 0, %s108
      %s110 = sphi 0, %s108
      %s111 = sphi 0, %s110
      %s125 = sphi 0, %s111
      %s129 = sphi 0, %s129
      %s131 = sphi 0, %s129
      %s132 = sphi 0, %s131
      %s146 = sphi 0, %s132
      %s150 = sphi 0, %s150
      %s152 = sphi 0, %s150
      %s153 = sphi 0, %s152
      %s167 = sphi 0, %s153
      %s171 = sphi 0, %s171
      %s173 = sphi 0, %s171
      %s174 = sphi 0, %s173
      %s188 = sphi 0, %s174
      %s196 = sphi 0, %s198
      %s199 = sphi 0, %s196
      %s200 = sphi 0, %s199
      %s216 = sphi 0, %s200
      %s222 = sphi 0, %s224
      %s225 = sphi 0, %s222
      %s226 = sphi 0, %s225
      %s242 = sphi 0, %s226
      %s248 = sphi 0, %s250
      %s251 = sphi 0, %s248
      %s252 = sphi 0, %s251
      %s268 = sphi 0, %s252
    $region4: #{tnet_forward.5} parent=1 // loop_header_branch
      %21 = sbr.rel (%p19) target = $region8
    $region5: #{tnet_forward.5} parent=1 // loop_body
      %s23 = ssub.s32 %s18, 1
      %s24 = ssub.s32 %s18, 2
      %s31 = sadd.s32 1, %s26
      %p32 = scmp.ge.s32.totalorder %s31, 1
      %s33 = scalar_select %p32, 0, %s31
      %s34 = sadd.s32 1, %s25
      %s35 = scalar_select %p32, %s34, %s25
      %p36 = scmp.ge.s32.totalorder %s35, 2
      %s37 = scalar_select %p36, 0, %s35
      %s38 = ssub.s32 %s25, %s37
      %s39 = ssub.s32 %s26, %s33
      %s40 = sor.u32 %s38, %s39
      %p41 = scmp.eq.s32.totalorder %s40, 0
      %s43 = sadd.s32 %s42, 1
      %s44 = scalar_select %p41, %s42, %s43
      %p47 = pneg %p41
      %p48 = scmp.eq.s32.totalorder %s18, 1
      %p49 = por %p47, %p48
      %p50 = scmp.ne.s32.totalorder %s42, %s45
      %p51 = scmp.eq.s32.totalorder %s18, 0
      %p52 = por %p50, %p51
      %p53 = scmp.ne.s32.totalorder %s42, %s45
      %p54 = scmp.eq.s32.totalorder %s23, 1
      %p55 = por %p53, %p54
      %p56 = scmp.ne.s32.totalorder %s45, %s46
      %p57 = scmp.eq.s32.totalorder %s23, 0
      %p58 = por %p56, %p57
      %p59 = scmp.ne.s32.totalorder %s45, %s46
      %p60 = scmp.eq.s32.totalorder %s24, 1
      %p61 = por %p59, %p60
      %p63 = scmp.ne.s32.totalorder %s46, %s62
      %p64 = scmp.eq.s32.totalorder %s24, 0
      %p65 = por %p63, %p64
      %s67 = sadd.s32 %s66, 1
      %p70 = scmp.eq.s32.totalorder %s18, 1
      %p71 = scmp.ne.s32.totalorder %s66, %s68
      %p72 = scmp.eq.s32.totalorder %s18, 0
      %p73 = por %p71, %p72
      %p74 = scmp.ne.s32.totalorder %s66, %s68
      %p75 = scmp.eq.s32.totalorder %s23, 1
      %p76 = por %p74, %p75
      %p77 = scmp.ne.s32.totalorder %s68, %s69
      %p78 = scmp.eq.s32.totalorder %s23, 0
      %p79 = por %p77, %p78
      %p80 = scmp.ne.s32.totalorder %s68, %s69
      %p81 = scmp.eq.s32.totalorder %s24, 1
      %p82 = por %p80, %p81
      %p84 = scmp.ne.s32.totalorder %s69, %s83
      %p85 = scmp.eq.s32.totalorder %s24, 0
      %p86 = por %p84, %p85
      %s88 = sadd.s32 %s87, 1
      %p91 = scmp.eq.s32.totalorder %s18, 1
      %p92 = scmp.ne.s32.totalorder %s87, %s89
      %p93 = scmp.eq.s32.totalorder %s18, 0
      %p94 = por %p92, %p93
      %p95 = scmp.ne.s32.totalorder %s87, %s89
      %p96 = scmp.eq.s32.totalorder %s23, 1
      %p97 = por %p95, %p96
      %p98 = scmp.ne.s32.totalorder %s89, %s90
      %p99 = scmp.eq.s32.totalorder %s23, 0
      %p100 = por %p98, %p99
      %p101 = scmp.ne.s32.totalorder %s89, %s90
      %p102 = scmp.eq.s32.totalorder %s24, 1
      %p103 = por %p101, %p102
      %p105 = scmp.ne.s32.totalorder %s90, %s104
      %p106 = scmp.eq.s32.totalorder %s24, 0
      %p107 = por %p105, %p106
      %s109 = sadd.s32 %s108, 1
      %p112 = scmp.eq.s32.totalorder %s18, 1
      %p113 = scmp.ne.s32.totalorder %s108, %s110
      %p114 = scmp.eq.s32.totalorder %s18, 0
      %p115 = por %p113, %p114
      %p116 = scmp.ne.s32.totalorder %s108, %s110
      %p117 = scmp.eq.s32.totalorder %s23, 1
      %p118 = por %p116, %p117
      %p119 = scmp.ne.s32.totalorder %s110, %s111
      %p120 = scmp.eq.s32.totalorder %s23, 0
      %p121 = por %p119, %p120
      %p122 = scmp.ne.s32.totalorder %s110, %s111
      %p123 = scmp.eq.s32.totalorder %s24, 1
      %p124 = por %p122, %p123
      %p126 = scmp.ne.s32.totalorder %s111, %s125
      %p127 = scmp.eq.s32.totalorder %s24, 0
      %p128 = por %p126, %p127
      %s130 = sadd.s32 %s129, 1
      %p133 = scmp.eq.s32.totalorder %s18, 1
      %p134 = scmp.ne.s32.totalorder %s129, %s131
      %p135 = scmp.eq.s32.totalorder %s18, 0
      %p136 = por %p134, %p135
      %p137 = scmp.ne.s32.totalorder %s129, %s131
      %p138 = scmp.eq.s32.totalorder %s23, 1
      %p139 = por %p137, %p138
      %p140 = scmp.ne.s32.totalorder %s131, %s132
      %p141 = scmp.eq.s32.totalorder %s23, 0
      %p142 = por %p140, %p141
      %p143 = scmp.ne.s32.totalorder %s131, %s132
      %p144 = scmp.eq.s32.totalorder %s24, 1
      %p145 = por %p143, %p144
      %p147 = scmp.ne.s32.totalorder %s132, %s146
      %p148 = scmp.eq.s32.totalorder %s24, 0
      %p149 = por %p147, %p148
      %s151 = sadd.s32 %s150, 1
      %p154 = scmp.eq.s32.totalorder %s18, 1
      %p155 = scmp.ne.s32.totalorder %s150, %s152
      %p156 = scmp.eq.s32.totalorder %s18, 0
      %p157 = por %p155, %p156
      %p158 = scmp.ne.s32.totalorder %s150, %s152
      %p159 = scmp.eq.s32.totalorder %s23, 1
      %p160 = por %p158, %p159
      %p161 = scmp.ne.s32.totalorder %s152, %s153
      %p162 = scmp.eq.s32.totalorder %s23, 0
      %p163 = por %p161, %p162
      %p164 = scmp.ne.s32.totalorder %s152, %s153
      %p165 = scmp.eq.s32.totalorder %s24, 1
      %p166 = por %p164, %p165
      %p168 = scmp.ne.s32.totalorder %s153, %s167
      %p169 = scmp.eq.s32.totalorder %s24, 0
      %p170 = por %p168, %p169
      %s172 = sadd.s32 %s171, 1
      %p175 = scmp.eq.s32.totalorder %s18, 1
      %p176 = scmp.ne.s32.totalorder %s171, %s173
      %p177 = scmp.eq.s32.totalorder %s18, 0
      %p178 = por %p176, %p177
      %p179 = scmp.ne.s32.totalorder %s171, %s173
      %p180 = scmp.eq.s32.totalorder %s23, 1
      %p181 = por %p179, %p180
      %p182 = scmp.ne.s32.totalorder %s173, %s174
      %p183 = scmp.eq.s32.totalorder %s23, 0
      %p184 = por %p182, %p183
      %p185 = scmp.ne.s32.totalorder %s173, %s174
      %p186 = scmp.eq.s32.totalorder %s24, 1
      %p187 = por %p185, %p186
      %p189 = scmp.ne.s32.totalorder %s174, %s188
      %p190 = scmp.eq.s32.totalorder %s24, 0
      %p191 = por %p189, %p190
      %s192 = ssub.s32 %s25, %s37
      %s193 = ssub.s32 %s26, %s33
      %s194 = sor.u32 %s192, %s193
      %p195 = scmp.eq.s32.totalorder %s194, 0
      %s197 = sadd.s32 %s196, 1
      %s198 = scalar_select %p195, %s196, %s197
      %p201 = pneg %p195
      %p202 = scmp.eq.s32.totalorder %s18, 1
      %p203 = por %p201, %p202
      %p204 = scmp.ne.s32.totalorder %s196, %s199
      %p205 = scmp.eq.s32.totalorder %s18, 0
      %p206 = por %p204, %p205
      %p207 = scmp.ne.s32.totalorder %s196, %s199
      %p208 = scmp.eq.s32.totalorder %s23, 1
      %p209 = por %p207, %p208
      %p210 = scmp.ne.s32.totalorder %s199, %s200
      %p211 = scmp.eq.s32.totalorder %s23, 0
      %p212 = por %p210, %p211
      %p213 = scmp.ne.s32.totalorder %s199, %s200
      %p214 = scmp.eq.s32.totalorder %s24, 1
      %p215 = por %p213, %p214
      %p217 = scmp.ne.s32.totalorder %s200, %s216
      %p218 = scmp.eq.s32.totalorder %s24, 0
      %p219 = por %p217, %p218
      %s220 = ssub.s32 %s25, %s37
      %p221 = scmp.eq.s32.totalorder %s220, 0
      %s223 = sadd.s32 %s222, 1
      %s224 = scalar_select %p221, %s222, %s223
      %p227 = pneg %p221
      %p228 = scmp.eq.s32.totalorder %s18, 1
      %p229 = por %p227, %p228
      %p230 = scmp.ne.s32.totalorder %s222, %s225
      %p231 = scmp.eq.s32.totalorder %s18, 0
      %p232 = por %p230, %p231
      %p233 = scmp.ne.s32.totalorder %s222, %s225
      %p234 = scmp.eq.s32.totalorder %s23, 1
      %p235 = por %p233, %p234
      %p236 = scmp.ne.s32.totalorder %s225, %s226
      %p237 = scmp.eq.s32.totalorder %s23, 0
      %p238 = por %p236, %p237
      %p239 = scmp.ne.s32.totalorder %s225, %s226
      %p240 = scmp.eq.s32.totalorder %s24, 1
      %p241 = por %p239, %p240
      %p243 = scmp.ne.s32.totalorder %s226, %s242
      %p244 = scmp.eq.s32.totalorder %s24, 0
      %p245 = por %p243, %p244
      %s246 = ssub.s32 %s25, %s37
      %p247 = scmp.eq.s32.totalorder %s246, 0
      %s249 = sadd.s32 %s248, 1
      %s250 = scalar_select %p247, %s248, %s249
      %p253 = pneg %p247
      %p254 = scmp.eq.s32.totalorder %s18, 1
      %p255 = por %p253, %p254
      %p256 = scmp.ne.s32.totalorder %s248, %s251
      %p257 = scmp.eq.s32.totalorder %s18, 0
      %p258 = por %p256, %p257
      %p259 = scmp.ne.s32.totalorder %s248, %s251
      %p260 = scmp.eq.s32.totalorder %s23, 1
      %p261 = por %p259, %p260
      %p262 = scmp.ne.s32.totalorder %s251, %s252
      %p263 = scmp.eq.s32.totalorder %s23, 0
      %p264 = por %p262, %p263
      %p265 = scmp.ne.s32.totalorder %s251, %s252
      %p266 = scmp.eq.s32.totalorder %s24, 1
      %p267 = por %p265, %p266
      %p269 = scmp.ne.s32.totalorder %s252, %s268
      %p270 = scmp.eq.s32.totalorder %s24, 0
      %p271 = por %p269, %p270
      %p272 = scmp.le.s32.totalorder 1, %s18
      %p273 = scmp.lt.s32.totalorder %s18, 3
      %p274 = pnand %p272, %p273
      %p275 = pneg %p274
      // Predicated region
      $region9: #{tnet_forward.5} parent=5 // pred_check
        _
      $region10: #{tnet_forward.5} parent=5 // pred_check_branch
        %277 = sbr.rel (%p274) target = $region12
      $region11: #{tnet_forward.5} parent=5 // pred_region
        %s278 = ssub.s32 %s18, 1
        // Predicated region
        $region13: #{tnet_forward.5} parent=11 // pred_check
          %p279 = pneg %p79
        $region14: #{tnet_forward.5} parent=11 // pred_check_branch
          %281 = sbr.rel (%p279) target = $region16
        $region15: #{tnet_forward.5} parent=11 // pred_region
          _
        $region16: #{tnet_forward.5} parent=11 // pred_fallthru
          _
        // Predicated region
        $region17: #{tnet_forward.5} parent=11 // pred_check
          %p282 = pneg %p100
        $region18: #{tnet_forward.5} parent=11 // pred_check_branch
          %284 = sbr.rel (%p282) target = $region20
        $region19: #{tnet_forward.5} parent=11 // pred_region
          _
        $region20: #{tnet_forward.5} parent=11 // pred_fallthru
          _
        // Predicated region
        $region21: #{tnet_forward.5} parent=11 // pred_check
          %p285 = pneg %p121
        $region22: #{tnet_forward.5} parent=11 // pred_check_branch
          %287 = sbr.rel (%p285) target = $region24
        $region23: #{tnet_forward.5} parent=11 // pred_region
          _
        $region24: #{tnet_forward.5} parent=11 // pred_fallthru
          _
        // Predicated region
        $region25: #{tnet_forward.5} parent=11 // pred_check
          %p288 = pneg %p142
        $region26: #{tnet_forward.5} parent=11 // pred_check_branch
          %290 = sbr.rel (%p288) target = $region28
        $region27: #{tnet_forward.5} parent=11 // pred_region
          %s292 = ssub.s32 16, 16
          %293 = vsyncadd [#allocation3], %s292
          %s295 = sshll.u32 [#allocation2], 4
          %s296 = int_to_ptr.vmem [resolvable:$true] %s295
          %298 = dma.hbm_to_vmem [thread:$0]  %s4, 16, %s296, [#allocation3]
        $region28: #{tnet_forward.5} parent=11 // pred_fallthru
          _
        // Predicated region
        $region29: #{tnet_forward.5} parent=11 // pred_check
          %p299 = pneg %p163
        $region30: #{tnet_forward.5} parent=11 // pred_check_branch
          %301 = sbr.rel (%p299) target = $region32
        $region31: #{tnet_forward.5} parent=11 // pred_region
          _
        $region32: #{tnet_forward.5} parent=11 // pred_fallthru
          _
        // Predicated region
        $region33: #{tnet_forward.5} parent=11 // pred_check
          %p302 = pneg %p184
        $region34: #{tnet_forward.5} parent=11 // pred_check_branch
          %304 = sbr.rel (%p302) target = $region36
        $region35: #{tnet_forward.5} parent=11 // pred_region
          %s306 = ssub.s32 16, 16
          %307 = vsyncadd [#allocation5], %s306
          %s309 = sshll.u32 [#allocation4], 4
          %s310 = int_to_ptr.vmem [resolvable:$true] %s309
          %312 = dma.hbm_to_vmem [thread:$0]  %s6, 16, %s310, [#allocation5]
        $region36: #{tnet_forward.5} parent=11 // pred_fallthru
          _
      $region12: #{tnet_forward.5} parent=5 // pred_fallthru
        _
      %p313 = scmp.lt.s32.totalorder %s18, 2
      // Predicated region
      $region37: #{tnet_forward.5} parent=5 // pred_check
        %p314 = pneg %p313
      $region38: #{tnet_forward.5} parent=5 // pred_check_branch
        %316 = sbr.rel (%p314) target = $region40
      $region39: #{tnet_forward.5} parent=5 // pred_region
        // Predicated region
        $region41: #{tnet_forward.5} parent=39 // pred_check
          %p317 = pneg %p52
        $region42: #{tnet_forward.5} parent=39 // pred_check_branch
          %319 = sbr.rel (%p317) target = $region44
        $region43: #{tnet_forward.5} parent=39 // pred_region
          %s320 = smul.u32 2, %s26
          %p321 = scmp.lt.s32.totalorder %s25, 1
          %s322 = scalar_select %p321, %s25, 1
          %p323 = scmp.lt.s32.totalorder %s320, 1
          %s324 = scalar_select %p323, %s320, 1
          %s325 = smul.addr %s322, 2
          %s326 = sadd.s32 %s324, %s325
          %s327 = smul.addr %s326, 8
          %s328 = scalar_lea.vmem %s0, %s327
          %s329 = smul.u32 2, %s26
        $region44: #{tnet_forward.5} parent=39 // pred_fallthru
          _
      $region40: #{tnet_forward.5} parent=5 // pred_fallthru
        _
      %p330 = scmp.le.s32.totalorder 1, %s18
      %p331 = scmp.lt.s32.totalorder %s18, 3
      %p332 = pnand %p330, %p331
      %p333 = pneg %p332
      // Predicated region
      $region45: #{tnet_forward.5} parent=5 // pred_check
        _
      $region46: #{tnet_forward.5} parent=5 // pred_check_branch
        %335 = sbr.rel (%p332) target = $region48
      $region47: #{tnet_forward.5} parent=5 // pred_region
        %s336 = ssub.s32 %s18, 1
        // Predicated region
        $region49: #{tnet_forward.5} parent=47 // pred_check
          %p337 = pneg %p142
        $region50: #{tnet_forward.5} parent=47 // pred_check_branch
          %339 = sbr.rel (%p337) target = $region52
        $region51: #{tnet_forward.5} parent=47 // pred_region
          %340 = dma.done [#allocation3], 16
        $region52: #{tnet_forward.5} parent=47 // pred_fallthru
          _
        // Predicated region
        $region53: #{tnet_forward.5} parent=47 // pred_check
          %p341 = pneg %p184
        $region54: #{tnet_forward.5} parent=47 // pred_check_branch
          %343 = sbr.rel (%p341) target = $region56
        $region55: #{tnet_forward.5} parent=47 // pred_region
          %344 = dma.done [#allocation5], 16
        $region56: #{tnet_forward.5} parent=47 // pred_fallthru
          _
        %s345 = smul.u32 2, %s28
        %p346 = scmp.lt.s32.totalorder %s27, 1
        %s347 = scalar_select %p346, %s27, 1
        %p348 = scmp.lt.s32.totalorder %s345, 1
        %s349 = scalar_select %p348, %s345, 1
        %s350 = smul.addr %s347, 2
        %s351 = sadd.s32 %s349, %s350
        %s352 = smul.addr %s351, 8
        %s353 = scalar_lea.vmem %s0, %s352
        %p354 = pneg %p58
        %p355 = pneg %p55
        %p356 = pneg %p79
        %p357 = pneg %p76
        %p358 = pneg %p100
        %p359 = pneg %p97
        %p360 = pneg %p121
        %p361 = pneg %p118
        %p362 = pneg %p142
        %p363 = pneg %p139
        %p364 = pneg %p163
        %p365 = pneg %p160
        %p366 = pneg %p184
        %p367 = pneg %p181
        %p368 = pneg %p212
        %p369 = pneg %p209
        %s370 = smul.u32 2, %s28
        %p371 = scmp.lt.s32.totalorder %s27, 1
        %s372 = scalar_select %p371, %s27, 1
        %p373 = scmp.lt.s32.totalorder %s370, 1
        %s374 = scalar_select %p373, %s370, 1
        %s375 = smul.addr %s372, 2
        %s376 = sadd.s32 %s374, %s375
        %s377 = smul.addr %s376, 4
        %s378 = scalar_lea.vmem %s7, %s377
        %p379 = pneg %p238
        %p380 = pneg %p235
        %p381 = scmp.lt.s32.totalorder %s27, 1
        %s382 = scalar_select %p381, %s27, 1
        %s383 = scalar_lea.vmem %s8, %s382
        %p384 = pneg %p264
        %p385 = pneg %p261
        %p386 = scmp.lt.s32.totalorder %s27, 1
        %s387 = scalar_select %p386, %s27, 1
        %s388 = scalar_lea.vmem %s9, %s387
        %s389 = smul.u32 2, %s28
        %p390 = scmp.lt.s32.totalorder %s27, 1
        %s391 = scalar_select %p390, %s27, 1
        %p392 = scmp.lt.s32.totalorder %s389, 1
        %s393 = scalar_select %p392, %s389, 1
        %s394 = smul.addr %s391, 2
        %s395 = sadd.s32 %s393, %s394
        %s396 = smul.addr %s395, 8
        %s397 = scalar_lea.vmem %s0, %s396
        %s398 = smul.u32 2, %s28
        %s399 = smul.u32 2, %s28
        %p400 = scmp.lt.s32.totalorder %s27, 1
        %s401 = scalar_select %p400, %s27, 1
        %p402 = scmp.lt.s32.totalorder %s399, 1
        %s403 = scalar_select %p402, %s399, 1
        %s404 = smul.addr %s401, 2
        %s405 = sadd.s32 %s403, %s404
        %s406 = smul.addr %s405, 4
        %s407 = scalar_lea.vmem %s7, %s406
        %s408 = smul.u32 2, %s28
        %p409 = scmp.lt.s32.totalorder %s27, 1
        %s410 = scalar_select %p409, %s27, 1
        %s411 = scalar_lea.vmem %s8, %s410
        %p412 = scmp.lt.s32.totalorder %s27, 1
        %s413 = scalar_select %p412, %s27, 1
        %s414 = scalar_lea.vmem %s9, %s413
        %v416 = vld [vmem:[%s397] sm:$0xff]
        %v417 = vld [vmem:[%s397 + $0x8] sm:$0xff]
        %v418 = vpack.c.bf16 %v417, %v416
        %v419 = vld [vmem:[%s3] sm:$0xf]
        %v420 = vld [vmem:[#allocation2] sm:$0x1]
        %v422 = vlaneseq
        %v423 = vshrl.u32 %v422, 7
        %v424 = vsub.s32 0, %v423
        %v425 = vrot.slane %v420, %v424
        %vm427 = vcmask 64512
        %v429 = vsel %vm427, %v418, 0
        %vm431 = vcmask 1043456
        %v433 = vsel %vm431, %v419, 0
        %435 = vmatprep.subr.bf16.mxu0 0
        %436 = vmatpush1.bf16.msra.mxu0 %v433
        %437 = vmatprep.subr.bf16.mxu0 0
        %438 = vmatpush1.bf16.msra.mxu0 0
        %439 = vmatprep.subr.bf16.mxu0 0
        %440 = vmatpush1.bf16.msra.mxu0 0
        %441 = vmatprep.subr.bf16.mxu0 0
        %442 = vmatpush1.bf16.msra.mxu0 0
        %443 = vmatprep.subr.bf16.mxu0 0
        %444 = vmatpush1.bf16.msra.mxu0 0
        %445 = vmatprep.subr.bf16.mxu0 0
        %446 = vmatpush1.bf16.msra.mxu0 0
        %447 = vmatprep.subr.bf16.mxu0 0
        %448 = vmatpush1.bf16.msra.mxu0 0
        %449 = vmatprep.subr.bf16.mxu0 0
        %450 = vmatpush1.bf16.msra.mxu0 0
        %451 = vmatprep.subr.bf16.mxu0 0
        %452 = vmatpush1.bf16.msra.mxu0 0
        %453 = vmatprep.subr.bf16.mxu0 0
        %454 = vmatpush1.bf16.msra.mxu0 0
        %455 = vmatprep.subr.bf16.mxu0 0
        %456 = vmatpush1.bf16.msra.mxu0 0
        %457 = vmatprep.subr.bf16.mxu0 0
        %458 = vmatpush1.bf16.msra.mxu0 0
        %459 = vmatprep.subr.bf16.mxu0 0
        %460 = vmatpush1.bf16.msra.mxu0 0
        %461 = vmatprep.subr.bf16.mxu0 0
        %462 = vmatpush1.bf16.msra.mxu0 0
        %463 = vmatprep.subr.bf16.mxu0 0
        %464 = vmatpush1.bf16.msra.mxu0 0
        %465 = vmatprep.subr.bf16.mxu0 0
        %466 = vmatpush1.bf16.msra.mxu0 0
        %467 = vmatprep.mubr.bf16.mxu0 0
        %468 = vmatmul.mubr.bf16.gmra.mrb[0].mxu0 %v429
        %v469 = vpop.f32.mrb[0].mxu0
        %v470 = vadd.f32 %v425, %v469
        %v471 = vpop.f32.mrb[0].mxu0
        %v472 = vpop.f32.mrb[0].mxu0
        %v473 = vadd.f32 %v425, %v472
        %v474 = vpop.f32.mrb[0].mxu0
        %475 = vdwg.mxu0
        %v476 = vld [vmem:[%s1] sm:$0x1]
        %v478 = vlaneseq
        %v479 = vshrl.u32 %v478, 7
        %v480 = vsub.s32 0, %v479
        %v481 = vrot.slane %v476, %v480
        %v483 = vmul.f32 %v470, %v481
        %v484 = vmul.f32 %v473, %v481
        %v485 = vld [vmem:[%s2] sm:$0x1]
        %v487 = vlaneseq
        %v488 = vshrl.u32 %v487, 7
        %v489 = vsub.s32 0, %v488
        %v490 = vrot.slane %v485, %v489
        %v492 = vadd.f32 %v483, %v490
        %v493 = vadd.f32 %v484, %v490
        %v494 = vmax.f32 %v492, 0.0
        %v495 = vmax.f32 %v493, 0.0
        %v496 = vpack.c.bf16 %v495, %v494
        %v497 = vld [vmem:[%s5] sm:$0xf]
        %v498 = vld [vmem:[%s5 + $0x4] sm:$0xf]
        %v499 = vld [vmem:[%s5 + $0x8] sm:$0xf]
        %v500 = vld [vmem:[%s5 + $0xc] sm:$0xf]
        %v501 = vld [vmem:[%s5 + $0x10] sm:$0xf]
        %v502 = vld [vmem:[%s5 + $0x14] sm:$0xf]
        %v503 = vld [vmem:[%s5 + $0x18] sm:$0xf]
        %v504 = vld [vmem:[%s5 + $0x1c] sm:$0xf]
        %v505 = vld [vmem:[#allocation4] sm:$0x1]
        %v507 = vlaneseq
        %v508 = vshrl.u32 %v507, 7
        %v509 = vsub.s32 0, %v508
        %v510 = vrot.slane %v505, %v509
        %v520 = vunpack.c.l.b16 %v497
        %v521 = vunpack.c.l.b16 %v498
        %v522 = vunpack.c.l.b16 %v499
        %v523 = vunpack.c.l.b16 %v500
        %v524 = vunpack.c.l.b16 %v501
        %v525 = vunpack.c.l.b16 %v502
        %v526 = vunpack.c.l.b16 %v503
        %v527 = vunpack.c.l.b16 %v504
        %v528 = vpack.c.b16 %v521, %v520
        %v529 = vpack.c.b16 %v523, %v522
        %v530 = vpack.c.b16 %v525, %v524
        %v531 = vpack.c.b16 %v527, %v526
        %vm536 = vcmask 523264
        %v538 = vsel %vm536, %v496, 0
        %540 = vmatprep.subr.bf16.mxu0 0
        %541 = vmatpush1.bf16.msra.mxu0 %v528
        %542 = vmatprep.subr.bf16.mxu0 0
        %543 = vmatpush1.bf16.msra.mxu0 %v529
        %544 = vmatprep.subr.bf16.mxu0 0
        %545 = vmatpush1.bf16.msra.mxu0 %v530
        %546 = vmatprep.subr.bf16.mxu0 0
        %547 = vmatpush1.bf16.msra.mxu0 %v531
        %548 = vmatprep.subr.bf16.mxu0 0
        %549 = vmatpush1.bf16.msra.mxu0 0
        %550 = vmatprep.subr.bf16.mxu0 0
        %551 = vmatpush1.bf16.msra.mxu0 0
        %552 = vmatprep.subr.bf16.mxu0 0
        %553 = vmatpush1.bf16.msra.mxu0 0
        %554 = vmatprep.subr.bf16.mxu0 0
        %555 = vmatpush1.bf16.msra.mxu0 0
        %556 = vmatprep.subr.bf16.mxu0 0
        %557 = vmatpush1.bf16.msra.mxu0 0
        %558 = vmatprep.subr.bf16.mxu0 0
        %559 = vmatpush1.bf16.msra.mxu0 0
        %560 = vmatprep.subr.bf16.mxu0 0
        %561 = vmatpush1.bf16.msra.mxu0 0
        %562 = vmatprep.subr.bf16.mxu0 0
        %563 = vmatpush1.bf16.msra.mxu0 0
        %564 = vmatprep.subr.bf16.mxu0 0
        %565 = vmatpush1.bf16.msra.mxu0 0
        %566 = vmatprep.subr.bf16.mxu0 0
        %567 = vmatpush1.bf16.msra.mxu0 0
        %568 = vmatprep.subr.bf16.mxu0 0
        %569 = vmatpush1.bf16.msra.mxu0 0
        %570 = vmatprep.subr.bf16.mxu0 0
        %571 = vmatpush1.bf16.msra.mxu0 0
        %572 = vmatprep.mubr.bf16.mxu0 0
        %573 = vmatmul.mubr.bf16.gmra.mrb[0].mxu0 %v538
        %v574 = vpop.f32.mrb[0].mxu0
        %v575 = vadd.f32 %v510, %v574
        %v576 = vpop.f32.mrb[0].mxu0
        %v577 = vpop.f32.mrb[0].mxu0
        %v578 = vadd.f32 %v510, %v577
        %v579 = vpop.f32.mrb[0].mxu0
        %580 = vdwg.mxu0
        %v581 = vpack.c.bf16 %v578, %v575
        %v583 = vunpack.c.l.b16 %v581
        %v584 = vunpack.c.h.b16 %v581
        %v585 = vpack.c.b16 %v583, %v583
        %v586 = vpack.c.b16 %v584, %v584
        %589 = vst [vmem:[%s407] sm:$0xf] %v585
        %590 = vst [vmem:[%s407 + $0x4] sm:$0xf] %v586
        %p591 = scmp.eq.s32.totalorder %s28, 0
        // Predicated region
        $region57: #{tnet_forward.5} parent=47 // pred_check
          %p592 = pneg %p591
        $region58: #{tnet_forward.5} parent=47 // pred_check_branch
          %594 = sbr.rel (%p592) target = $region60
        $region59: #{tnet_forward.5} parent=47 // pred_region
          %595 = vst [vmem:[%s411] sm:$0x1] 0.0
          %596 = vst [vmem:[%s414] sm:$0x1] 0.0
        $region60: #{tnet_forward.5} parent=47 // pred_fallthru
          _
        %v597 = vld [vmem:[%s411] sm:$0x1]
        %v598 = vadd.f32 %v575, %v578
        %v599 = vrot.slane %v598, 4
        %v600 = vadd.f32 %v598, %v599
        %v601 = vrot.slane %v600, 2
        %v602 = vadd.f32 %v600, %v601
        %v603 = vrot.slane %v602, 1
        %v604 = vadd.f32 %v602, %v603
        %v605 = vadd.f32 %v597, %v604
        %606 = vst [vmem:[%s411] sm:$0x1] %v605
        %v607 = vld [vmem:[%s414] sm:$0x1]
        %v608 = vmul.f32 %v575, %v575
        %v609 = vmul.f32 %v578, %v578
        %v610 = vadd.f32 %v608, %v609
        %v611 = vrot.slane %v610, 4
        %v612 = vadd.f32 %v610, %v611
        %v613 = vrot.slane %v612, 2
        %v614 = vadd.f32 %v612, %v613
        %v615 = vrot.slane %v614, 1
        %v616 = vadd.f32 %v614, %v615
        %v617 = vadd.f32 %v607, %v616
        %618 = vst [vmem:[%s414] sm:$0x1] %v617
        %s619 = smul.u32 2, %s28
        %p620 = scmp.lt.s32.totalorder %s27, 1
        %s621 = scalar_select %p620, %s27, 1
        %p622 = scmp.lt.s32.totalorder %s619, 1
        %s623 = scalar_select %p622, %s619, 1
        %s624 = smul.addr %s621, 2
        %s625 = sadd.s32 %s623, %s624
        %s626 = smul.addr %s625, 4
        %s627 = scalar_lea.vmem %s7, %s626
        %p628 = scmp.lt.s32.totalorder %s27, 1
        %s629 = scalar_select %p628, %s27, 1
        %s630 = scalar_lea.vmem %s8, %s629
        %p631 = scmp.lt.s32.totalorder %s27, 1
        %s632 = scalar_select %p631, %s27, 1
        %s633 = scalar_lea.vmem %s9, %s632
        // Predicated region
        $region61: #{tnet_forward.5} parent=47 // pred_check
          %p634 = pneg %p209
        $region62: #{tnet_forward.5} parent=47 // pred_check_branch
          %636 = sbr.rel (%p634) target = $region64
        $region63: #{tnet_forward.5} parent=47 // pred_region
          %s637 = smul.u32 2, %s28
        $region64: #{tnet_forward.5} parent=47 // pred_fallthru
          _
        // Predicated region
        $region65: #{tnet_forward.5} parent=47 // pred_check
          %p638 = pneg %p235
        $region66: #{tnet_forward.5} parent=47 // pred_check_branch
          %640 = sbr.rel (%p638) target = $region68
        $region67: #{tnet_forward.5} parent=47 // pred_region
          _
        $region68: #{tnet_forward.5} parent=47 // pred_fallthru
          _
        // Predicated region
        $region69: #{tnet_forward.5} parent=47 // pred_check
          %p641 = pneg %p261
        $region70: #{tnet_forward.5} parent=47 // pred_check_branch
          %643 = sbr.rel (%p641) target = $region72
        $region71: #{tnet_forward.5} parent=47 // pred_region
          _
        $region72: #{tnet_forward.5} parent=47 // pred_fallthru
          _
      $region48: #{tnet_forward.5} parent=5 // pred_fallthru
        _
      %p644 = scmp.le.s32.totalorder 2, %s18
      // Predicated region
      $region73: #{tnet_forward.5} parent=5 // pred_check
        %p645 = pneg %p644
      $region74: #{tnet_forward.5} parent=5 // pred_check_branch
        %647 = sbr.rel (%p645) target = $region76
      $region75: #{tnet_forward.5} parent=5 // pred_region
        %s648 = ssub.s32 %s18, 2
        // Predicated region
        $region77: #{tnet_forward.5} parent=75 // pred_check
          %p649 = pneg %p215
        $region78: #{tnet_forward.5} parent=75 // pred_check_branch
          %651 = sbr.rel (%p649) target = $region80
        $region79: #{tnet_forward.5} parent=75 // pred_region
          %s652 = smul.u32 2, %s30
          %p653 = scmp.lt.s32.totalorder %s29, 1
          %s654 = scalar_select %p653, %s29, 1
          %p655 = scmp.lt.s32.totalorder %s652, 1
          %s656 = scalar_select %p655, %s652, 1
          %s657 = smul.addr %s654, 2
          %s658 = sadd.s32 %s656, %s657
          %s659 = smul.addr %s658, 4
          %s660 = scalar_lea.vmem %s7, %s659
        $region80: #{tnet_forward.5} parent=75 // pred_fallthru
          _
        // Predicated region
        $region81: #{tnet_forward.5} parent=75 // pred_check
          %p661 = pneg %p241
        $region82: #{tnet_forward.5} parent=75 // pred_check_branch
          %663 = sbr.rel (%p661) target = $region84
        $region83: #{tnet_forward.5} parent=75 // pred_region
          %p664 = scmp.lt.s32.totalorder %s29, 1
          %s665 = scalar_select %p664, %s29, 1
          %s666 = scalar_lea.vmem %s8, %s665
        $region84: #{tnet_forward.5} parent=75 // pred_fallthru
          _
        // Predicated region
        $region85: #{tnet_forward.5} parent=75 // pred_check
          %p667 = pneg %p267
        $region86: #{tnet_forward.5} parent=75 // pred_check_branch
          %669 = sbr.rel (%p667) target = $region88
        $region87: #{tnet_forward.5} parent=75 // pred_region
          %p670 = scmp.lt.s32.totalorder %s29, 1
          %s671 = scalar_select %p670, %s29, 1
          %s672 = scalar_lea.vmem %s9, %s671
        $region88: #{tnet_forward.5} parent=75 // pred_fallthru
          _
      $region76: #{tnet_forward.5} parent=5 // pred_fallthru
        _
    $region6: #{tnet_forward.5} parent=1 // loop_footer
      %s22 = sadd.s32 1, %s18
    $region7: #{tnet_forward.5} parent=1 // loop_footer_branch
      %17 = sbr.rel target = $region3
    $region8: #{tnet_forward.5} parent=1 // loop_exit
      _
    %673 = vsyncpa [#allocation3], 1
    %s674 = scalar_lea.sflag [#allocation3], 1
    %675 = vsyncpa %s674, 1
    %676 = vsyncpa [#allocation5], 1

// kernel: tnet_forward.4
$region0: #{tnet_forward.4}
  #allocation0 [shape = 'u32[]', space=smem, size = 0x4, offset = 0x4, fixed_abs, tag = 'smem constant byte address 0x4 - core index']
  #allocation1 [shape = 'u32[144,128]{1,0:T(1,128)}', space=vmem, size = 0x12000, scoped, tag = 'internal scratch']
  %s0 = inlined_call_operand.vmem [shape: f32[2,16,8], index: 0, kind: input, shape index: {}]
  %s1 = inlined_call_operand.vmem [shape: bf16[8,64], index: 1, kind: input, shape index: {}]
  %s2 = inlined_call_operand.hbm [shape: f32[1,64], index: 2, kind: input, shape index: {}]
  %s3 = inlined_call_operand.vmem [shape: f32[2,1,64], index: 3, kind: output, shape index: {0}]
  %s4 = inlined_call_operand.vmem [shape: f32[2,1,64], index: 4, kind: output, shape index: {1}]
  %5 = xla_tuple %s3, %s4
  %s6 = sld [smem:[#allocation0]]
  $region61: #{tnet_forward.4} parent=0
    _
  %s8 = ssub.s32 1, %s6
  %s9 = scalar_select 0, %s8, %s6
  $region1: #{tnet_forward.4} parent=0
    #allocation2 [shape = 'u8[512]{0}', space=vmem, size = 0x400, scoped, tag = 'input window, operand 2, single buffered']
    #allocation3 [shape = 's32[2]{0}', space=sflag, size = 0x8, scoped, tag = 'scoped memory for tnet_forward.4']
    %10 = vsyncpa [#allocation3], 0
    loop: start=0, step=1, limit=4
    $region2: #{tnet_forward.4} parent=1 // loop_pre_header
      _
    $region3: #{tnet_forward.4} parent=1 // loop_header
      %s12 = sphi 0, %s16
      %p13 = scmp.ge.s32.totalorder %s12, 4
      %s19 = sphi 0, %s31
      %s20 = sphi 0, %s27
      %s21 = sphi 0, %s19
      %s22 = sphi 0, %s20
      %s23 = sphi 0, %s21
      %s24 = sphi 0, %s22
      %s36 = sphi 0, %s38
      %s39 = sphi 0, %s36
      %s40 = sphi 0, %s39
      %s56 = sphi 0, %s40
      %s60 = sphi 0, %s60
      %s62 = sphi 0, %s60
      %s63 = sphi 0, %s62
      %s77 = sphi 0, %s63
      %s81 = sphi 0, %s81
      %s83 = sphi 0, %s81
      %s84 = sphi 0, %s83
      %s98 = sphi 0, %s84
      %s104 = sphi 0, %s106
      %s107 = sphi 0, %s104
      %s108 = sphi 0, %s107
      %s124 = sphi 0, %s108
      %s130 = sphi 0, %s132
      %s133 = sphi 0, %s130
      %s134 = sphi 0, %s133
      %s150 = sphi 0, %s134
    $region4: #{tnet_forward.4} parent=1 // loop_header_branch
      %15 = sbr.rel (%p13) target = $region8
    $region5: #{tnet_forward.4} parent=1 // loop_body
      %s17 = ssub.s32 %s12, 1
      %s18 = ssub.s32 %s12, 2
      %s25 = sadd.s32 1, %s20
      %p26 = scmp.ge.s32.totalorder %s25, 1
      %s27 = scalar_select %p26, 0, %s25
      %s28 = sadd.s32 1, %s19
      %s29 = scalar_select %p26, %s28, %s19
      %p30 = scmp.ge.s32.totalorder %s29, 2
      %s31 = scalar_select %p30, 0, %s29
      %s32 = ssub.s32 %s19, %s31
      %s33 = ssub.s32 %s20, %s27
      %s34 = sor.u32 %s32, %s33
      %p35 = scmp.eq.s32.totalorder %s34, 0
      %s37 = sadd.s32 %s36, 1
      %s38 = scalar_select %p35, %s36, %s37
      %p41 = pneg %p35
      %p42 = scmp.eq.s32.totalorder %s12, 1
      %p43 = por %p41, %p42
      %p44 = scmp.ne.s32.totalorder %s36, %s39
      %p45 = scmp.eq.s32.totalorder %s12, 0
      %p46 = por %p44, %p45
      %p47 = scmp.ne.s32.totalorder %s36, %s39
      %p48 = scmp.eq.s32.totalorder %s17, 1
      %p49 = por %p47, %p48
      %p50 = scmp.ne.s32.totalorder %s39, %s40
      %p51 = scmp.eq.s32.totalorder %s17, 0
      %p52 = por %p50, %p51
      %p53 = scmp.ne.s32.totalorder %s39, %s40
      %p54 = scmp.eq.s32.totalorder %s18, 1
      %p55 = por %p53, %p54
      %p57 = scmp.ne.s32.totalorder %s40, %s56
      %p58 = scmp.eq.s32.totalorder %s18, 0
      %p59 = por %p57, %p58
      %s61 = sadd.s32 %s60, 1
      %p64 = scmp.eq.s32.totalorder %s12, 1
      %p65 = scmp.ne.s32.totalorder %s60, %s62
      %p66 = scmp.eq.s32.totalorder %s12, 0
      %p67 = por %p65, %p66
      %p68 = scmp.ne.s32.totalorder %s60, %s62
      %p69 = scmp.eq.s32.totalorder %s17, 1
      %p70 = por %p68, %p69
      %p71 = scmp.ne.s32.totalorder %s62, %s63
      %p72 = scmp.eq.s32.totalorder %s17, 0
      %p73 = por %p71, %p72
      %p74 = scmp.ne.s32.totalorder %s62, %s63
      %p75 = scmp.eq.s32.totalorder %s18, 1
      %p76 = por %p74, %p75
      %p78 = scmp.ne.s32.totalorder %s63, %s77
      %p79 = scmp.eq.s32.totalorder %s18, 0
      %p80 = por %p78, %p79
      %s82 = sadd.s32 %s81, 1
      %p85 = scmp.eq.s32.totalorder %s12, 1
      %p86 = scmp.ne.s32.totalorder %s81, %s83
      %p87 = scmp.eq.s32.totalorder %s12, 0
      %p88 = por %p86, %p87
      %p89 = scmp.ne.s32.totalorder %s81, %s83
      %p90 = scmp.eq.s32.totalorder %s17, 1
      %p91 = por %p89, %p90
      %p92 = scmp.ne.s32.totalorder %s83, %s84
      %p93 = scmp.eq.s32.totalorder %s17, 0
      %p94 = por %p92, %p93
      %p95 = scmp.ne.s32.totalorder %s83, %s84
      %p96 = scmp.eq.s32.totalorder %s18, 1
      %p97 = por %p95, %p96
      %p99 = scmp.ne.s32.totalorder %s84, %s98
      %p100 = scmp.eq.s32.totalorder %s18, 0
      %p101 = por %p99, %p100
      %s102 = ssub.s32 %s19, %s31
      %p103 = scmp.eq.s32.totalorder %s102, 0
      %s105 = sadd.s32 %s104, 1
      %s106 = scalar_select %p103, %s104, %s105
      %p109 = pneg %p103
      %p110 = scmp.eq.s32.totalorder %s12, 1
      %p111 = por %p109, %p110
      %p112 = scmp.ne.s32.totalorder %s104, %s107
      %p113 = scmp.eq.s32.totalorder %s12, 0
      %p114 = por %p112, %p113
      %p115 = scmp.ne.s32.totalorder %s104, %s107
      %p116 = scmp.eq.s32.totalorder %s17, 1
      %p117 = por %p115, %p116
      %p118 = scmp.ne.s32.totalorder %s107, %s108
      %p119 = scmp.eq.s32.totalorder %s17, 0
      %p120 = por %p118, %p119
      %p121 = scmp.ne.s32.totalorder %s107, %s108
      %p122 = scmp.eq.s32.totalorder %s18, 1
      %p123 = por %p121, %p122
      %p125 = scmp.ne.s32.totalorder %s108, %s124
      %p126 = scmp.eq.s32.totalorder %s18, 0
      %p127 = por %p125, %p126
      %s128 = ssub.s32 %s19, %s31
      %p129 = scmp.eq.s32.totalorder %s128, 0
      %s131 = sadd.s32 %s130, 1
      %s132 = scalar_select %p129, %s130, %s131
      %p135 = pneg %p129
      %p136 = scmp.eq.s32.totalorder %s12, 1
      %p137 = por %p135, %p136
      %p138 = scmp.ne.s32.totalorder %s130, %s133
      %p139 = scmp.eq.s32.totalorder %s12, 0
      %p140 = por %p138, %p139
      %p141 = scmp.ne.s32.totalorder %s130, %s133
      %p142 = scmp.eq.s32.totalorder %s17, 1
      %p143 = por %p141, %p142
      %p144 = scmp.ne.s32.totalorder %s133, %s134
      %p145 = scmp.eq.s32.totalorder %s17, 0
      %p146 = por %p144, %p145
      %p147 = scmp.ne.s32.totalorder %s133, %s134
      %p148 = scmp.eq.s32.totalorder %s18, 1
      %p149 = por %p147, %p148
      %p151 = scmp.ne.s32.totalorder %s134, %s150
      %p152 = scmp.eq.s32.totalorder %s18, 0
      %p153 = por %p151, %p152
      %p154 = scmp.le.s32.totalorder 1, %s12
      %p155 = scmp.lt.s32.totalorder %s12, 3
      %p156 = pnand %p154, %p155
      %p157 = pneg %p156
      // Predicated region
      $region9: #{tnet_forward.4} parent=5 // pred_check
        _
      $region10: #{tnet_forward.4} parent=5 // pred_check_branch
        %159 = sbr.rel (%p156) target = $region12
      $region11: #{tnet_forward.4} parent=5 // pred_region
        %s160 = ssub.s32 %s12, 1
        // Predicated region
        $region13: #{tnet_forward.4} parent=11 // pred_check
          %p161 = pneg %p73
        $region14: #{tnet_forward.4} parent=11 // pred_check_branch
          %163 = sbr.rel (%p161) target = $region16
        $region15: #{tnet_forward.4} parent=11 // pred_region
          _
        $region16: #{tnet_forward.4} parent=11 // pred_fallthru
          _
        // Predicated region
        $region17: #{tnet_forward.4} parent=11 // pred_check
          %p164 = pneg %p94
        $region18: #{tnet_forward.4} parent=11 // pred_check_branch
          %166 = sbr.rel (%p164) target = $region20
        $region19: #{tnet_forward.4} parent=11 // pred_region
          %s168 = ssub.s32 16, 16
          %169 = vsyncadd [#allocation3], %s168
          %s171 = sshll.u32 [#allocation2], 4
          %s172 = int_to_ptr.vmem [resolvable:$true] %s171
          %174 = dma.hbm_to_vmem [thread:$0]  %s2, 16, %s172, [#allocation3]
        $region20: #{tnet_forward.4} parent=11 // pred_fallthru
          _
      $region12: #{tnet_forward.4} parent=5 // pred_fallthru
        _
      %p175 = scmp.lt.s32.totalorder %s12, 2
      // Predicated region
      $region21: #{tnet_forward.4} parent=5 // pred_check
        %p176 = pneg %p175
      $region22: #{tnet_forward.4} parent=5 // pred_check_branch
        %178 = sbr.rel (%p176) target = $region24
      $region23: #{tnet_forward.4} parent=5 // pred_region
        // Predicated region
        $region25: #{tnet_forward.4} parent=23 // pred_check
          %p179 = pneg %p46
        $region26: #{tnet_forward.4} parent=23 // pred_check_branch
          %181 = sbr.rel (%p179) target = $region28
        $region27: #{tnet_forward.4} parent=23 // pred_region
          %s182 = smul.u32 2, %s20
          %p183 = scmp.lt.s32.totalorder %s19, 1
          %s184 = scalar_select %p183, %s19, 1
          %p185 = scmp.lt.s32.totalorder %s182, 1
          %s186 = scalar_select %p185, %s182, 1
          %s187 = smul.addr %s184, 2
          %s188 = sadd.s32 %s186, %s187
          %s189 = smul.addr %s188, 8
          %s190 = scalar_lea.vmem %s0, %s189
          %s191 = smul.u32 2, %s20
        $region28: #{tnet_forward.4} parent=23 // pred_fallthru
          _
      $region24: #{tnet_forward.4} parent=5 // pred_fallthru
        _
      %p192 = scmp.le.s32.totalorder 1, %s12
      %p193 = scmp.lt.s32.totalorder %s12, 3
      %p194 = pnand %p192, %p193
      %p195 = pneg %p194
      // Predicated region
      $region29: #{tnet_forward.4} parent=5 // pred_check
        _
      $region30: #{tnet_forward.4} parent=5 // pred_check_branch
        %197 = sbr.rel (%p194) target = $region32
      $region31: #{tnet_forward.4} parent=5 // pred_region
        %s198 = ssub.s32 %s12, 1
        // Predicated region
        $region33: #{tnet_forward.4} parent=31 // pred_check
          %p199 = pneg %p94
        $region34: #{tnet_forward.4} parent=31 // pred_check_branch
          %201 = sbr.rel (%p199) target = $region36
        $region35: #{tnet_forward.4} parent=31 // pred_region
          %202 = dma.done [#allocation3], 16
        $region36: #{tnet_forward.4} parent=31 // pred_fallthru
          _
        %s203 = smul.u32 2, %s22
        %p204 = scmp.lt.s32.totalorder %s21, 1
        %s205 = scalar_select %p204, %s21, 1
        %p206 = scmp.lt.s32.totalorder %s203, 1
        %s207 = scalar_select %p206, %s203, 1
        %s208 = smul.addr %s205, 2
        %s209 = sadd.s32 %s207, %s208
        %s210 = smul.addr %s209, 8
        %s211 = scalar_lea.vmem %s0, %s210
        %p212 = pneg %p52
        %p213 = pneg %p49
        %p214 = pneg %p73
        %p215 = pneg %p70
        %p216 = pneg %p94
        %p217 = pneg %p91
        %p218 = pneg %p120
        %p219 = pneg %p117
        %p220 = scmp.lt.s32.totalorder %s21, 1
        %s221 = scalar_select %p220, %s21, 1
        %s222 = scalar_lea.vmem %s3, %s221
        %p223 = pneg %p146
        %p224 = pneg %p143
        %p225 = scmp.lt.s32.totalorder %s21, 1
        %s226 = scalar_select %p225, %s21, 1
        %s227 = scalar_lea.vmem %s4, %s226
        %s228 = smul.u32 2, %s22
        %p229 = scmp.lt.s32.totalorder %s21, 1
        %s230 = scalar_select %p229, %s21, 1
        %p231 = scmp.lt.s32.totalorder %s228, 1
        %s232 = scalar_select %p231, %s228, 1
        %s233 = smul.addr %s230, 2
        %s234 = sadd.s32 %s232, %s233
        %s235 = smul.addr %s234, 8
        %s236 = scalar_lea.vmem %s0, %s235
        %s237 = smul.u32 2, %s22
        %p238 = scmp.lt.s32.totalorder %s21, 1
        %s239 = scalar_select %p238, %s21, 1
        %s240 = scalar_lea.vmem %s3, %s239
        %p241 = scmp.lt.s32.totalorder %s21, 1
        %s242 = scalar_select %p241, %s21, 1
        %s243 = scalar_lea.vmem %s4, %s242
        %v245 = vld [vmem:[%s236] sm:$0xff]
        %v246 = vld [vmem:[%s236 + $0x8] sm:$0xff]
        %v247 = vpack.c.bf16 %v246, %v245
        %v248 = vld [vmem:[%s1] sm:$0xf]
        %v249 = vld [vmem:[#allocation2] sm:$0x1]
        %v251 = vlaneseq
        %v252 = vshrl.u32 %v251, 7
        %v253 = vsub.s32 0, %v252
        %v254 = vrot.slane %v249, %v253
        %vm256 = vcmask 64512
        %v258 = vsel %vm256, %v247, 0
        %vm260 = vcmask 1043456
        %v262 = vsel %vm260, %v248, 0
        %264 = vmatprep.subr.bf16.mxu0 0
        %265 = vmatpush1.bf16.msra.mxu0 %v262
        %266 = vmatprep.subr.bf16.mxu0 0
        %267 = vmatpush1.bf16.msra.mxu0 0
        %268 = vmatprep.subr.bf16.mxu0 0
        %269 = vmatpush1.bf16.msra.mxu0 0
        %270 = vmatprep.subr.bf16.mxu0 0
        %271 = vmatpush1.bf16.msra.mxu0 0
        %272 = vmatprep.subr.bf16.mxu0 0
        %273 = vmatpush1.bf16.msra.mxu0 0
        %274 = vmatprep.subr.bf16.mxu0 0
        %275 = vmatpush1.bf16.msra.mxu0 0
        %276 = vmatprep.subr.bf16.mxu0 0
        %277 = vmatpush1.bf16.msra.mxu0 0
        %278 = vmatprep.subr.bf16.mxu0 0
        %279 = vmatpush1.bf16.msra.mxu0 0
        %280 = vmatprep.subr.bf16.mxu0 0
        %281 = vmatpush1.bf16.msra.mxu0 0
        %282 = vmatprep.subr.bf16.mxu0 0
        %283 = vmatpush1.bf16.msra.mxu0 0
        %284 = vmatprep.subr.bf16.mxu0 0
        %285 = vmatpush1.bf16.msra.mxu0 0
        %286 = vmatprep.subr.bf16.mxu0 0
        %287 = vmatpush1.bf16.msra.mxu0 0
        %288 = vmatprep.subr.bf16.mxu0 0
        %289 = vmatpush1.bf16.msra.mxu0 0
        %290 = vmatprep.subr.bf16.mxu0 0
        %291 = vmatpush1.bf16.msra.mxu0 0
        %292 = vmatprep.subr.bf16.mxu0 0
        %293 = vmatpush1.bf16.msra.mxu0 0
        %294 = vmatprep.subr.bf16.mxu0 0
        %295 = vmatpush1.bf16.msra.mxu0 0
        %296 = vmatprep.mubr.bf16.mxu0 0
        %297 = vmatmul.mubr.bf16.gmra.mrb[0].mxu0 %v258
        %v298 = vpop.f32.mrb[0].mxu0
        %v299 = vadd.f32 %v254, %v298
        %v300 = vpop.f32.mrb[0].mxu0
        %v301 = vpop.f32.mrb[0].mxu0
        %v302 = vadd.f32 %v254, %v301
        %v303 = vpop.f32.mrb[0].mxu0
        %304 = vdwg.mxu0
        %p305 = scmp.eq.s32.totalorder %s22, 0
        // Predicated region
        $region37: #{tnet_forward.4} parent=31 // pred_check
          %p306 = pneg %p305
        $region38: #{tnet_forward.4} parent=31 // pred_check_branch
          %308 = sbr.rel (%p306) target = $region40
        $region39: #{tnet_forward.4} parent=31 // pred_region
          %vm309 = vcmask 516096
          %310 = vst.msk [vmem:[%s240] sm:$0x1] %vm309, 0.0
          %311 = vst.msk [vmem:[%s243] sm:$0x1] %vm309, 0.0
        $region40: #{tnet_forward.4} parent=31 // pred_fallthru
          _
        %v312 = vld [vmem:[%s240] sm:$0x1]
        %vm313 = vcmask 523264
        %v314 = vsel %vm313, %v299, 0.0
        %v315 = vsel %vm313, %v302, 0.0
        %v316 = vadd.f32 %v314, %v315
        %v317 = vrot.slane %v316, 4
        %v318 = vadd.f32 %v316, %v317
        %v319 = vrot.slane %v318, 2
        %v320 = vadd.f32 %v318, %v319
        %v321 = vrot.slane %v320, 1
        %v322 = vadd.f32 %v320, %v321
        %v323 = vadd.f32 %v312, %v322
        %vm324 = vcmask 516096
        %325 = vst.msk [vmem:[%s240] sm:$0x1] %vm324, %v323
        %v326 = vld [vmem:[%s243] sm:$0x1]
        %v327 = vmul.f32 %v299, %v299
        %v328 = vmul.f32 %v302, %v302
        %v329 = vsel %vm313, %v327, 0.0
        %v330 = vsel %vm313, %v328, 0.0
        %v331 = vadd.f32 %v329, %v330
        %v332 = vrot.slane %v331, 4
        %v333 = vadd.f32 %v331, %v332
        %v334 = vrot.slane %v333, 2
        %v335 = vadd.f32 %v333, %v334
        %v336 = vrot.slane %v335, 1
        %v337 = vadd.f32 %v335, %v336
        %v338 = vadd.f32 %v326, %v337
        %339 = vst.msk [vmem:[%s243] sm:$0x1] %vm324, %v338
        %p340 = scmp.lt.s32.totalorder %s21, 1
        %s341 = scalar_select %p340, %s21, 1
        %s342 = scalar_lea.vmem %s3, %s341
        %p343 = scmp.lt.s32.totalorder %s21, 1
        %s344 = scalar_select %p343, %s21, 1
        %s345 = scalar_lea.vmem %s4, %s344
        // Predicated region
        $region41: #{tnet_forward.4} parent=31 // pred_check
          %p346 = pneg %p117
        $region42: #{tnet_forward.4} parent=31 // pred_check_branch
          %348 = sbr.rel (%p346) target = $region44
        $region43: #{tnet_forward.4} parent=31 // pred_region
          _
        $region44: #{tnet_forward.4} parent=31 // pred_fallthru
          _
        // Predicated region
        $region45: #{tnet_forward.4} parent=31 // pred_check
          %p349 = pneg %p143
        $region46: #{tnet_forward.4} parent=31 // pred_check_branch
          %351 = sbr.rel (%p349) target = $region48
        $region47: #{tnet_forward.4} parent=31 // pred_region
          _
        $region48: #{tnet_forward.4} parent=31 // pred_fallthru
          _
      $region32: #{tnet_forward.4} parent=5 // pred_fallthru
        _
      %p352 = scmp.le.s32.totalorder 2, %s12
      // Predicated region
      $region49: #{tnet_forward.4} parent=5 // pred_check
        %p353 = pneg %p352
      $region50: #{tnet_forward.4} parent=5 // pred_check_branch
        %355 = sbr.rel (%p353) target = $region52
      $region51: #{tnet_forward.4} parent=5 // pred_region
        %s356 = ssub.s32 %s12, 2
        // Predicated region
        $region53: #{tnet_forward.4} parent=51 // pred_check
          %p357 = pneg %p123
        $region54: #{tnet_forward.4} parent=51 // pred_check_branch
          %359 = sbr.rel (%p357) target = $region56
        $region55: #{tnet_forward.4} parent=51 // pred_region
          %p360 = scmp.lt.s32.totalorder %s23, 1
          %s361 = scalar_select %p360, %s23, 1
          %s362 = scalar_lea.vmem %s3, %s361
        $region56: #{tnet_forward.4} parent=51 // pred_fallthru
          _
        // Predicated region
        $region57: #{tnet_forward.4} parent=51 // pred_check
          %p363 = pneg %p149
        $region58: #{tnet_forward.4} parent=51 // pred_check_branch
          %365 = sbr.rel (%p363) target = $region60
        $region59: #{tnet_forward.4} parent=51 // pred_region
          %p366 = scmp.lt.s32.totalorder %s23, 1
          %s367 = scalar_select %p366, %s23, 1
          %s368 = scalar_lea.vmem %s4, %s367
        $region60: #{tnet_forward.4} parent=51 // pred_fallthru
          _
      $region52: #{tnet_forward.4} parent=5 // pred_fallthru
        _
    $region6: #{tnet_forward.4} parent=1 // loop_footer
      %s16 = sadd.s32 1, %s12
    $region7: #{tnet_forward.4} parent=1 // loop_footer_branch
      %11 = sbr.rel target = $region3
    $region8: #{tnet_forward.4} parent=1 // loop_exit
      _
    %369 = vsyncpa [#allocation3], 1
    %s370 = scalar_lea.sflag [#allocation3], 1
    %371 = vsyncpa %s370, 1

// kernel: tnet_forward.6
$region0: #{tnet_forward.6}
  #allocation0 [shape = 'u32[]', space=smem, size = 0x4, offset = 0x4, fixed_abs, tag = 'smem constant byte address 0x4 - core index']
  #allocation1 [shape = 'u32[144,128]{1,0:T(1,128)}', space=vmem, size = 0x12000, scoped, tag = 'internal scratch']
  %s0 = inlined_call_operand.vmem [shape: bf16[2,16,128], index: 0, kind: input, shape index: {}]
  %s1 = inlined_call_operand.vmem [shape: f32[1,128], index: 1, kind: input, shape index: {}]
  %s2 = inlined_call_operand.vmem [shape: f32[1,128], index: 2, kind: input, shape index: {}]
  %s3 = inlined_call_operand.vmem [shape: bf16[128,1024], index: 3, kind: input, shape index: {}]
  %s4 = inlined_call_operand.hbm [shape: f32[1,1024], index: 4, kind: input, shape index: {}]
  %s5 = inlined_call_operand.vmem [shape: f32[2,1,1024], index: 5, kind: output, shape index: {0}]
  %s6 = inlined_call_operand.vmem [shape: f32[2,1,1024], index: 6, kind: output, shape index: {1}]
  %s7 = inlined_call_operand.vmem [shape: f32[2,1,1024], index: 7, kind: output, shape index: {2}]
  %s8 = inlined_call_operand.vmem [shape: f32[2,1,1024], index: 8, kind: output, shape index: {3}]
  %9 = xla_tuple %s5, %s6, %s7, %s8
  %s10 = sld [smem:[#allocation0]]
  $region85: #{tnet_forward.6} parent=0
    _
  %s12 = ssub.s32 1, %s10
  %s13 = scalar_select 0, %s12, %s10
  $region1: #{tnet_forward.6} parent=0
    #allocation2 [shape = 'u8[4096]{0}', space=vmem, size = 0x1000, scoped, tag = 'input window, operand 4, single buffered']
    #allocation3 [shape = 's32[2]{0}', space=sflag, size = 0x8, scoped, tag = 'scoped memory for tnet_forward.6']
    %14 = vsyncpa [#allocation3], 0
    loop: start=0, step=1, limit=4
    $region2: #{tnet_forward.6} parent=1 // loop_pre_header
      _
    $region3: #{tnet_forward.6} parent=1 // loop_header
      %s16 = sphi 0, %s20
      %p17 = scmp.ge.s32.totalorder %s16, 4
      %s23 = sphi 0, %s35
      %s24 = sphi 0, %s31
      %s25 = sphi 0, %s23
      %s26 = sphi 0, %s24
      %s27 = sphi 0, %s25
      %s28 = sphi 0, %s26
      %s40 = sphi 0, %s42
      %s43 = sphi 0, %s40
      %s44 = sphi 0, %s43
      %s60 = sphi 0, %s44
      %s64 = sphi 0, %s64
      %s66 = sphi 0, %s64
      %s67 = sphi 0, %s66
      %s81 = sphi 0, %s67
      %s85 = sphi 0, %s85
      %s87 = sphi 0, %s85
      %s88 = sphi 0, %s87
      %s102 = sphi 0, %s88
      %s106 = sphi 0, %s106
      %s108 = sphi 0, %s106
      %s109 = sphi 0, %s108
      %s123 = sphi 0, %s109
      %s127 = sphi 0, %s127
      %s129 = sphi 0, %s127
      %s130 = sphi 0, %s129
      %s144 = sphi 0, %s130
      %s150 = sphi 0, %s152
      %s153 = sphi 0, %s150
      %s154 = sphi 0, %s153
      %s170 = sphi 0, %s154
      %s176 = sphi 0, %s178
      %s179 = sphi 0, %s176
      %s180 = sphi 0, %s179
      %s196 = sphi 0, %s180
      %s202 = sphi 0, %s204
      %s205 = sphi 0, %s202
      %s206 = sphi 0, %s205
      %s222 = sphi 0, %s206
      %s228 = sphi 0, %s230
      %s231 = sphi 0, %s228
      %s232 = sphi 0, %s231
      %s248 = sphi 0, %s232
    $region4: #{tnet_forward.6} parent=1 // loop_header_branch
      %19 = sbr.rel (%p17) target = $region8
    $region5: #{tnet_forward.6} parent=1 // loop_body
      %s21 = ssub.s32 %s16, 1
      %s22 = ssub.s32 %s16, 2
      %s29 = sadd.s32 1, %s24
      %p30 = scmp.ge.s32.totalorder %s29, 1
      %s31 = scalar_select %p30, 0, %s29
      %s32 = sadd.s32 1, %s23
      %s33 = scalar_select %p30, %s32, %s23
      %p34 = scmp.ge.s32.totalorder %s33, 2
      %s35 = scalar_select %p34, 0, %s33
      %s36 = ssub.s32 %s23, %s35
      %s37 = ssub.s32 %s24, %s31
      %s38 = sor.u32 %s36, %s37
      %p39 = scmp.eq.s32.totalorder %s38, 0
      %s41 = sadd.s32 %s40, 1
      %s42 = scalar_select %p39, %s40, %s41
      %p45 = pneg %p39
      %p46 = scmp.eq.s32.totalorder %s16, 1
      %p47 = por %p45, %p46
      %p48 = scmp.ne.s32.totalorder %s40, %s43
      %p49 = scmp.eq.s32.totalorder %s16, 0
      %p50 = por %p48, %p49
      %p51 = scmp.ne.s32.totalorder %s40, %s43
      %p52 = scmp.eq.s32.totalorder %s21, 1
      %p53 = por %p51, %p52
      %p54 = scmp.ne.s32.totalorder %s43, %s44
      %p55 = scmp.eq.s32.totalorder %s21, 0
      %p56 = por %p54, %p55
      %p57 = scmp.ne.s32.totalorder %s43, %s44
      %p58 = scmp.eq.s32.totalorder %s22, 1
      %p59 = por %p57, %p58
      %p61 = scmp.ne.s32.totalorder %s44, %s60
      %p62 = scmp.eq.s32.totalorder %s22, 0
      %p63 = por %p61, %p62
      %s65 = sadd.s32 %s64, 1
      %p68 = scmp.eq.s32.totalorder %s16, 1
      %p69 = scmp.ne.s32.totalorder %s64, %s66
      %p70 = scmp.eq.s32.totalorder %s16, 0
      %p71 = por %p69, %p70
      %p72 = scmp.ne.s32.totalorder %s64, %s66
      %p73 = scmp.eq.s32.totalorder %s21, 1
      %p74 = por %p72, %p73
      %p75 = scmp.ne.s32.totalorder %s66, %s67
      %p76 = scmp.eq.s32.totalorder %s21, 0
      %p77 = por %p75, %p76
      %p78 = scmp.ne.s32.totalorder %s66, %s67
      %p79 = scmp.eq.s32.totalorder %s22, 1
      %p80 = por %p78, %p79
      %p82 = scmp.ne.s32.totalorder %s67, %s81
      %p83 = scmp.eq.s32.totalorder %s22, 0
      %p84 = por %p82, %p83
      %s86 = sadd.s32 %s85, 1
      %p89 = scmp.eq.s32.totalorder %s16, 1
      %p90 = scmp.ne.s32.totalorder %s85, %s87
      %p91 = scmp.eq.s32.totalorder %s16, 0
      %p92 = por %p90, %p91
      %p93 = scmp.ne.s32.totalorder %s85, %s87
      %p94 = scmp.eq.s32.totalorder %s21, 1
      %p95 = por %p93, %p94
      %p96 = scmp.ne.s32.totalorder %s87, %s88
      %p97 = scmp.eq.s32.totalorder %s21, 0
      %p98 = por %p96, %p97
      %p99 = scmp.ne.s32.totalorder %s87, %s88
      %p100 = scmp.eq.s32.totalorder %s22, 1
      %p101 = por %p99, %p100
      %p103 = scmp.ne.s32.totalorder %s88, %s102
      %p104 = scmp.eq.s32.totalorder %s22, 0
      %p105 = por %p103, %p104
      %s107 = sadd.s32 %s106, 1
      %p110 = scmp.eq.s32.totalorder %s16, 1
      %p111 = scmp.ne.s32.totalorder %s106, %s108
      %p112 = scmp.eq.s32.totalorder %s16, 0
      %p113 = por %p111, %p112
      %p114 = scmp.ne.s32.totalorder %s106, %s108
      %p115 = scmp.eq.s32.totalorder %s21, 1
      %p116 = por %p114, %p115
      %p117 = scmp.ne.s32.totalorder %s108, %s109
      %p118 = scmp.eq.s32.totalorder %s21, 0
      %p119 = por %p117, %p118
      %p120 = scmp.ne.s32.totalorder %s108, %s109
      %p121 = scmp.eq.s32.totalorder %s22, 1
      %p122 = por %p120, %p121
      %p124 = scmp.ne.s32.totalorder %s109, %s123
      %p125 = scmp.eq.s32.totalorder %s22, 0
      %p126 = por %p124, %p125
      %s128 = sadd.s32 %s127, 1
      %p131 = scmp.eq.s32.totalorder %s16, 1
      %p132 = scmp.ne.s32.totalorder %s127, %s129
      %p133 = scmp.eq.s32.totalorder %s16, 0
      %p134 = por %p132, %p133
      %p135 = scmp.ne.s32.totalorder %s127, %s129
      %p136 = scmp.eq.s32.totalorder %s21, 1
      %p137 = por %p135, %p136
      %p138 = scmp.ne.s32.totalorder %s129, %s130
      %p139 = scmp.eq.s32.totalorder %s21, 0
      %p140 = por %p138, %p139
      %p141 = scmp.ne.s32.totalorder %s129, %s130
      %p142 = scmp.eq.s32.totalorder %s22, 1
      %p143 = por %p141, %p142
      %p145 = scmp.ne.s32.totalorder %s130, %s144
      %p146 = scmp.eq.s32.totalorder %s22, 0
      %p147 = por %p145, %p146
      %s148 = ssub.s32 %s23, %s35
      %p149 = scmp.eq.s32.totalorder %s148, 0
      %s151 = sadd.s32 %s150, 1
      %s152 = scalar_select %p149, %s150, %s151
      %p155 = pneg %p149
      %p156 = scmp.eq.s32.totalorder %s16, 1
      %p157 = por %p155, %p156
      %p158 = scmp.ne.s32.totalorder %s150, %s153
      %p159 = scmp.eq.s32.totalorder %s16, 0
      %p160 = por %p158, %p159
      %p161 = scmp.ne.s32.totalorder %s150, %s153
      %p162 = scmp.eq.s32.totalorder %s21, 1
      %p163 = por %p161, %p162
      %p164 = scmp.ne.s32.totalorder %s153, %s154
      %p165 = scmp.eq.s32.totalorder %s21, 0
      %p166 = por %p164, %p165
      %p167 = scmp.ne.s32.totalorder %s153, %s154
      %p168 = scmp.eq.s32.totalorder %s22, 1
      %p169 = por %p167, %p168
      %p171 = scmp.ne.s32.totalorder %s154, %s170
      %p172 = scmp.eq.s32.totalorder %s22, 0
      %p173 = por %p171, %p172
      %s174 = ssub.s32 %s23, %s35
      %p175 = scmp.eq.s32.totalorder %s174, 0
      %s177 = sadd.s32 %s176, 1
      %s178 = scalar_select %p175, %s176, %s177
      %p181 = pneg %p175
      %p182 = scmp.eq.s32.totalorder %s16, 1
      %p183 = por %p181, %p182
      %p184 = scmp.ne.s32.totalorder %s176, %s179
      %p185 = scmp.eq.s32.totalorder %s16, 0
      %p186 = por %p184, %p185
      %p187 = scmp.ne.s32.totalorder %s176, %s179
      %p188 = scmp.eq.s32.totalorder %s21, 1
      %p189 = por %p187, %p188
      %p190 = scmp.ne.s32.totalorder %s179, %s180
      %p191 = scmp.eq.s32.totalorder %s21, 0
      %p192 = por %p190, %p191
      %p193 = scmp.ne.s32.totalorder %s179, %s180
      %p194 = scmp.eq.s32.totalorder %s22, 1
      %p195 = por %p193, %p194
      %p197 = scmp.ne.s32.totalorder %s180, %s196
      %p198 = scmp.eq.s32.totalorder %s22, 0
      %p199 = por %p197, %p198
      %s200 = ssub.s32 %s23, %s35
      %p201 = scmp.eq.s32.totalorder %s200, 0
      %s203 = sadd.s32 %s202, 1
      %s204 = scalar_select %p201, %s202, %s203
      %p207 = pneg %p201
      %p208 = scmp.eq.s32.totalorder %s16, 1
      %p209 = por %p207, %p208
      %p210 = scmp.ne.s32.totalorder %s202, %s205
      %p211 = scmp.eq.s32.totalorder %s16, 0
      %p212 = por %p210, %p211
      %p213 = scmp.ne.s32.totalorder %s202, %s205
      %p214 = scmp.eq.s32.totalorder %s21, 1
      %p215 = por %p213, %p214
      %p216 = scmp.ne.s32.totalorder %s205, %s206
      %p217 = scmp.eq.s32.totalorder %s21, 0
      %p218 = por %p216, %p217
      %p219 = scmp.ne.s32.totalorder %s205, %s206
      %p220 = scmp.eq.s32.totalorder %s22, 1
      %p221 = por %p219, %p220
      %p223 = scmp.ne.s32.totalorder %s206, %s222
      %p224 = scmp.eq.s32.totalorder %s22, 0
      %p225 = por %p223, %p224
      %s226 = ssub.s32 %s23, %s35
      %p227 = scmp.eq.s32.totalorder %s226, 0
      %s229 = sadd.s32 %s228, 1
      %s230 = scalar_select %p227, %s228, %s229
      %p233 = pneg %p227
      %p234 = scmp.eq.s32.totalorder %s16, 1
      %p235 = por %p233, %p234
      %p236 = scmp.ne.s32.totalorder %s228, %s231
      %p237 = scmp.eq.s32.totalorder %s16, 0
      %p238 = por %p236, %p237
      %p239 = scmp.ne.s32.totalorder %s228, %s231
      %p240 = scmp.eq.s32.totalorder %s21, 1
      %p241 = por %p239, %p240
      %p242 = scmp.ne.s32.totalorder %s231, %s232
      %p243 = scmp.eq.s32.totalorder %s21, 0
      %p244 = por %p242, %p243
      %p245 = scmp.ne.s32.totalorder %s231, %s232
      %p246 = scmp.eq.s32.totalorder %s22, 1
      %p247 = por %p245, %p246
      %p249 = scmp.ne.s32.totalorder %s232, %s248
      %p250 = scmp.eq.s32.totalorder %s22, 0
      %p251 = por %p249, %p250
      %p252 = scmp.le.s32.totalorder 1, %s16
      %p253 = scmp.lt.s32.totalorder %s16, 3
      %p254 = pnand %p252, %p253
      %p255 = pneg %p254
      // Predicated region
      $region9: #{tnet_forward.6} parent=5 // pred_check
        _
      $region10: #{tnet_forward.6} parent=5 // pred_check_branch
        %257 = sbr.rel (%p254) target = $region12
      $region11: #{tnet_forward.6} parent=5 // pred_region
        %s258 = ssub.s32 %s16, 1
        // Predicated region
        $region13: #{tnet_forward.6} parent=11 // pred_check
          %p259 = pneg %p77
        $region14: #{tnet_forward.6} parent=11 // pred_check_branch
          %261 = sbr.rel (%p259) target = $region16
        $region15: #{tnet_forward.6} parent=11 // pred_region
          _
        $region16: #{tnet_forward.6} parent=11 // pred_fallthru
          _
        // Predicated region
        $region17: #{tnet_forward.6} parent=11 // pred_check
          %p262 = pneg %p98
        $region18: #{tnet_forward.6} parent=11 // pred_check_branch
          %264 = sbr.rel (%p262) target = $region20
        $region19: #{tnet_forward.6} parent=11 // pred_region
          _
        $region20: #{tnet_forward.6} parent=11 // pred_fallthru
          _
        // Predicated region
        $region21: #{tnet_forward.6} parent=11 // pred_check
          %p265 = pneg %p119
        $region22: #{tnet_forward.6} parent=11 // pred_check_branch
          %267 = sbr.rel (%p265) target = $region24
        $region23: #{tnet_forward.6} parent=11 // pred_region
          _
        $region24: #{tnet_forward.6} parent=11 // pred_fallthru
          _
        // Predicated region
        $region25: #{tnet_forward.6} parent=11 // pred_check
          %p268 = pneg %p140
        $region26: #{tnet_forward.6} parent=11 // pred_check_branch
          %270 = sbr.rel (%p268) target = $region28
        $region27: #{tnet_forward.6} parent=11 // pred_region
          %s272 = ssub.s32 128, 128
          %273 = vsyncadd [#allocation3], %s272
          %s275 = sshll.u32 [#allocation2], 4
          %s276 = int_to_ptr.vmem [resolvable:$true] %s275
          %278 = dma.hbm_to_vmem [thread:$0]  %s4, 128, %s276, [#allocation3]
        $region28: #{tnet_forward.6} parent=11 // pred_fallthru
          _
      $region12: #{tnet_forward.6} parent=5 // pred_fallthru
        _
      %p279 = scmp.lt.s32.totalorder %s16, 2
      // Predicated region
      $region29: #{tnet_forward.6} parent=5 // pred_check
        %p280 = pneg %p279
      $region30: #{tnet_forward.6} parent=5 // pred_check_branch
        %282 = sbr.rel (%p280) target = $region32
      $region31: #{tnet_forward.6} parent=5 // pred_region
        // Predicated region
        $region33: #{tnet_forward.6} parent=31 // pred_check
          %p283 = pneg %p50
        $region34: #{tnet_forward.6} parent=31 // pred_check_branch
          %285 = sbr.rel (%p283) target = $region36
        $region35: #{tnet_forward.6} parent=31 // pred_region
          %s286 = smul.u32 2, %s24
          %p287 = scmp.lt.s32.totalorder %s23, 1
          %s288 = scalar_select %p287, %s23, 1
          %p289 = scmp.lt.s32.totalorder %s286, 1
          %s290 = scalar_select %p289, %s286, 1
          %s291 = smul.addr %s288, 2
          %s292 = sadd.s32 %s290, %s291
          %s293 = smul.addr %s292, 4
          %s294 = scalar_lea.vmem %s0, %s293
          %s295 = smul.u32 2, %s24
        $region36: #{tnet_forward.6} parent=31 // pred_fallthru
          _
      $region32: #{tnet_forward.6} parent=5 // pred_fallthru
        _
      %p296 = scmp.le.s32.totalorder 1, %s16
      %p297 = scmp.lt.s32.totalorder %s16, 3
      %p298 = pnand %p296, %p297
      %p299 = pneg %p298
      // Predicated region
      $region37: #{tnet_forward.6} parent=5 // pred_check
        _
      $region38: #{tnet_forward.6} parent=5 // pred_check_branch
        %301 = sbr.rel (%p298) target = $region40
      $region39: #{tnet_forward.6} parent=5 // pred_region
        %s302 = ssub.s32 %s16, 1
        // Predicated region
        $region41: #{tnet_forward.6} parent=39 // pred_check
          %p303 = pneg %p140
        $region42: #{tnet_forward.6} parent=39 // pred_check_branch
          %305 = sbr.rel (%p303) target = $region44
        $region43: #{tnet_forward.6} parent=39 // pred_region
          %306 = dma.done [#allocation3], 128
        $region44: #{tnet_forward.6} parent=39 // pred_fallthru
          _
        %s307 = smul.u32 2, %s26
        %p308 = scmp.lt.s32.totalorder %s25, 1
        %s309 = scalar_select %p308, %s25, 1
        %p310 = scmp.lt.s32.totalorder %s307, 1
        %s311 = scalar_select %p310, %s307, 1
        %s312 = smul.addr %s309, 2
        %s313 = sadd.s32 %s311, %s312
        %s314 = smul.addr %s313, 4
        %s315 = scalar_lea.vmem %s0, %s314
        %p316 = pneg %p56
        %p317 = pneg %p53
        %p318 = pneg %p77
        %p319 = pneg %p74
        %p320 = pneg %p98
        %p321 = pneg %p95
        %p322 = pneg %p119
        %p323 = pneg %p116
        %p324 = pneg %p140
        %p325 = pneg %p137
        %p326 = pneg %p166
        %p327 = pneg %p163
        %p328 = scmp.lt.s32.totalorder %s25, 1
        %s329 = scalar_select %p328, %s25, 1
        %s330 = smul.addr %s329, 8
        %s331 = scalar_lea.vmem %s5, %s330
        %p332 = pneg %p192
        %p333 = pneg %p189
        %p334 = scmp.lt.s32.totalorder %s25, 1
        %s335 = scalar_select %p334, %s25, 1
        %s336 = smul.addr %s335, 8
        %s337 = scalar_lea.vmem %s6, %s336
        %p338 = pneg %p218
        %p339 = pneg %p215
        %p340 = scmp.lt.s32.totalorder %s25, 1
        %s341 = scalar_select %p340, %s25, 1
        %s342 = smul.addr %s341, 8
        %s343 = scalar_lea.vmem %s7, %s342
        %p344 = pneg %p244
        %p345 = pneg %p241
        %p346 = scmp.lt.s32.totalorder %s25, 1
        %s347 = scalar_select %p346, %s25, 1
        %s348 = smul.addr %s347, 8
        %s349 = scalar_lea.vmem %s8, %s348
        %s350 = smul.u32 2, %s26
        %p351 = scmp.lt.s32.totalorder %s25, 1
        %s352 = scalar_select %p351, %s25, 1
        %p353 = scmp.lt.s32.totalorder %s350, 1
        %s354 = scalar_select %p353, %s350, 1
        %s355 = smul.addr %s352, 2
        %s356 = sadd.s32 %s354, %s355
        %s357 = smul.addr %s356, 4
        %s358 = scalar_lea.vmem %s0, %s357
        %s359 = smul.u32 2, %s26
        %p360 = scmp.lt.s32.totalorder %s25, 1
        %s361 = scalar_select %p360, %s25, 1
        %s362 = smul.addr %s361, 8
        %s363 = scalar_lea.vmem %s5, %s362
        %p364 = scmp.lt.s32.totalorder %s25, 1
        %s365 = scalar_select %p364, %s25, 1
        %s366 = smul.addr %s365, 8
        %s367 = scalar_lea.vmem %s6, %s366
        %p368 = scmp.lt.s32.totalorder %s25, 1
        %s369 = scalar_select %p368, %s25, 1
        %s370 = smul.addr %s369, 8
        %s371 = scalar_lea.vmem %s7, %s370
        %p372 = scmp.lt.s32.totalorder %s25, 1
        %s373 = scalar_select %p372, %s25, 1
        %s374 = smul.addr %s373, 8
        %s375 = scalar_lea.vmem %s8, %s374
        %v377 = vld [vmem:[%s358] sm:$0xf]
        %v378 = vld [vmem:[%s358 + $0x4] sm:$0xf]
        %v379 = vunpack.c.l.bf16 %v377
        %v380 = vunpack.c.l.bf16 %v378
        %v381 = vld [vmem:[%s1] sm:$0x1]
        %v383 = vlaneseq
        %v384 = vshrl.u32 %v383, 7
        %v385 = vsub.s32 0, %v384
        %v386 = vrot.slane %v381, %v385
        %v388 = vmul.f32 %v379, %v386
        %v389 = vmul.f32 %v380, %v386
        %v390 = vld [vmem:[%s2] sm:$0x1]
        %v392 = vlaneseq
        %v393 = vshrl.u32 %v392, 7
        %v394 = vsub.s32 0, %v393
        %v395 = vrot.slane %v390, %v394
        %v397 = vadd.f32 %v388, %v395
        %v398 = vadd.f32 %v389, %v395
        %v399 = vmax.f32 %v397, 0.0
        %v400 = vmax.f32 %v398, 0.0
        %v401 = vpack.c.bf16 %v400, %v399
        %v402 = vld [vmem:[%s3] sm:$0xff]
        %v403 = vld [vmem:[%s3 + $0x8] sm:$0xff]
        %v404 = vld [vmem:[%s3 + $0x10] sm:$0xff]
        %v405 = vld [vmem:[%s3 + $0x18] sm:$0xff]
        %v406 = vld [vmem:[%s3 + $0x20] sm:$0xff]
        %v407 = vld [vmem:[%s3 + $0x28] sm:$0xff]
        %v408 = vld [vmem:[%s3 + $0x30] sm:$0xff]
        %v409 = vld [vmem:[%s3 + $0x38] sm:$0xff]
        %v410 = vld [vmem:[%s3 + $0x40] sm:$0xff]
        %v411 = vld [vmem:[%s3 + $0x48] sm:$0xff]
        %v412 = vld [vmem:[%s3 + $0x50] sm:$0xff]
        %v413 = vld [vmem:[%s3 + $0x58] sm:$0xff]
        %v414 = vld [vmem:[%s3 + $0x60] sm:$0xff]
        %v415 = vld [vmem:[%s3 + $0x68] sm:$0xff]
        %v416 = vld [vmem:[%s3 + $0x70] sm:$0xff]
        %v417 = vld [vmem:[%s3 + $0x78] sm:$0xff]
        %v418 = vld [vmem:[%s3 + $0x80] sm:$0xff]
        %v419 = vld [vmem:[%s3 + $0x88] sm:$0xff]
        %v420 = vld [vmem:[%s3 + $0x90] sm:$0xff]
        %v421 = vld [vmem:[%s3 + $0x98] sm:$0xff]
        %v422 = vld [vmem:[%s3 + $0xa0] sm:$0xff]
        %v423 = vld [vmem:[%s3 + $0xa8] sm:$0xff]
        %v424 = vld [vmem:[%s3 + $0xb0] sm:$0xff]
        %v425 = vld [vmem:[%s3 + $0xb8] sm:$0xff]
        %v426 = vld [vmem:[%s3 + $0xc0] sm:$0xff]
        %v427 = vld [vmem:[%s3 + $0xc8] sm:$0xff]
        %v428 = vld [vmem:[%s3 + $0xd0] sm:$0xff]
        %v429 = vld [vmem:[%s3 + $0xd8] sm:$0xff]
        %v430 = vld [vmem:[%s3 + $0xe0] sm:$0xff]
        %v431 = vld [vmem:[%s3 + $0xe8] sm:$0xff]
        %v432 = vld [vmem:[%s3 + $0xf0] sm:$0xff]
        %v433 = vld [vmem:[%s3 + $0xf8] sm:$0xff]
        %v434 = vld [vmem:[%s3 + $0x100] sm:$0xff]
        %v435 = vld [vmem:[%s3 + $0x108] sm:$0xff]
        %v436 = vld [vmem:[%s3 + $0x110] sm:$0xff]
        %v437 = vld [vmem:[%s3 + $0x118] sm:$0xff]
        %v438 = vld [vmem:[%s3 + $0x120] sm:$0xff]
        %v439 = vld [vmem:[%s3 + $0x128] sm:$0xff]
        %v440 = vld [vmem:[%s3 + $0x130] sm:$0xff]
        %v441 = vld [vmem:[%s3 + $0x138] sm:$0xff]
        %v442 = vld [vmem:[%s3 + $0x140] sm:$0xff]
        %v443 = vld [vmem:[%s3 + $0x148] sm:$0xff]
        %v444 = vld [vmem:[%s3 + $0x150] sm:$0xff]
        %v445 = vld [vmem:[%s3 + $0x158] sm:$0xff]
        %v446 = vld [vmem:[%s3 + $0x160] sm:$0xff]
        %v447 = vld [vmem:[%s3 + $0x168] sm:$0xff]
        %v448 = vld [vmem:[%s3 + $0x170] sm:$0xff]
        %v449 = vld [vmem:[%s3 + $0x178] sm:$0xff]
        %v450 = vld [vmem:[%s3 + $0x180] sm:$0xff]
        %v451 = vld [vmem:[%s3 + $0x188] sm:$0xff]
        %v452 = vld [vmem:[%s3 + $0x190] sm:$0xff]
        %v453 = vld [vmem:[%s3 + $0x198] sm:$0xff]
        %v454 = vld [vmem:[%s3 + $0x1a0] sm:$0xff]
        %v455 = vld [vmem:[%s3 + $0x1a8] sm:$0xff]
        %v456 = vld [vmem:[%s3 + $0x1b0] sm:$0xff]
        %v457 = vld [vmem:[%s3 + $0x1b8] sm:$0xff]
        %v458 = vld [vmem:[%s3 + $0x1c0] sm:$0xff]
        %v459 = vld [vmem:[%s3 + $0x1c8] sm:$0xff]
        %v460 = vld [vmem:[%s3 + $0x1d0] sm:$0xff]
        %v461 = vld [vmem:[%s3 + $0x1d8] sm:$0xff]
        %v462 = vld [vmem:[%s3 + $0x1e0] sm:$0xff]
        %v463 = vld [vmem:[%s3 + $0x1e8] sm:$0xff]
        %v464 = vld [vmem:[%s3 + $0x1f0] sm:$0xff]
        %v465 = vld [vmem:[%s3 + $0x1f8] sm:$0xff]
        %v466 = vld [vmem:[#allocation2] sm:$0xff]
        %v468 = vlaneseq
        %v469 = vshrl.u32 %v468, 7
        %v470 = vsub.s32 0, %v469
        %v471 = vrot.slane %v466, %v470
        %v472 = vlaneseq
        %v473 = vshrl.u32 %v472, 7
        %v474 = vsub.s32 1, %v473
        %v475 = vrot.slane %v466, %v474
        %v476 = vlaneseq
        %v477 = vshrl.u32 %v476, 7
        %v478 = vsub.s32 2, %v477
        %v479 = vrot.slane %v466, %v478
        %v480 = vlaneseq
        %v481 = vshrl.u32 %v480, 7
        %v482 = vsub.s32 3, %v481
        %v483 = vrot.slane %v466, %v482
        %v484 = vlaneseq
        %v485 = vshrl.u32 %v484, 7
        %v486 = vsub.s32 4, %v485
        %v487 = vrot.slane %v466, %v486
        %v488 = vlaneseq
        %v489 = vshrl.u32 %v488, 7
        %v490 = vsub.s32 5, %v489
        %v491 = vrot.slane %v466, %v490
        %v492 = vlaneseq
        %v493 = vshrl.u32 %v492, 7
        %v494 = vsub.s32 6, %v493
        %v495 = vrot.slane %v466, %v494
        %v496 = vlaneseq
        %v497 = vshrl.u32 %v496, 7
        %v498 = vsub.s32 7, %v497
        %v499 = vrot.slane %v466, %v498
        %v572 = vunpack.c.l.b16 %v402
        %v573 = vunpack.c.h.b16 %v402
        %v574 = vunpack.c.l.b16 %v403
        %v575 = vunpack.c.h.b16 %v403
        %v576 = vunpack.c.l.b16 %v404
        %v577 = vunpack.c.h.b16 %v404
        %v578 = vunpack.c.l.b16 %v405
        %v579 = vunpack.c.h.b16 %v405
        %v580 = vunpack.c.l.b16 %v406
        %v581 = vunpack.c.h.b16 %v406
        %v582 = vunpack.c.l.b16 %v407
        %v583 = vunpack.c.h.b16 %v407
        %v584 = vunpack.c.l.b16 %v408
        %v585 = vunpack.c.h.b16 %v408
        %v586 = vunpack.c.l.b16 %v409
        %v587 = vunpack.c.h.b16 %v409
        %v588 = vunpack.c.l.b16 %v410
        %v589 = vunpack.c.h.b16 %v410
        %v590 = vunpack.c.l.b16 %v411
        %v591 = vunpack.c.h.b16 %v411
        %v592 = vunpack.c.l.b16 %v412
        %v593 = vunpack.c.h.b16 %v412
        %v594 = vunpack.c.l.b16 %v413
        %v595 = vunpack.c.h.b16 %v413
        %v596 = vunpack.c.l.b16 %v414
        %v597 = vunpack.c.h.b16 %v414
        %v598 = vunpack.c.l.b16 %v415
        %v599 = vunpack.c.h.b16 %v415
        %v600 = vunpack.c.l.b16 %v416
        %v601 = vunpack.c.h.b16 %v416
        %v602 = vunpack.c.l.b16 %v417
        %v603 = vunpack.c.h.b16 %v417
        %v604 = vunpack.c.l.b16 %v418
        %v605 = vunpack.c.h.b16 %v418
        %v606 = vunpack.c.l.b16 %v419
        %v607 = vunpack.c.h.b16 %v419
        %v608 = vunpack.c.l.b16 %v420
        %v609 = vunpack.c.h.b16 %v420
        %v610 = vunpack.c.l.b16 %v421
        %v611 = vunpack.c.h.b16 %v421
        %v612 = vunpack.c.l.b16 %v422
        %v613 = vunpack.c.h.b16 %v422
        %v614 = vunpack.c.l.b16 %v423
        %v615 = vunpack.c.h.b16 %v423
        %v616 = vunpack.c.l.b16 %v424
        %v617 = vunpack.c.h.b16 %v424
        %v618 = vunpack.c.l.b16 %v425
        %v619 = vunpack.c.h.b16 %v425
        %v620 = vunpack.c.l.b16 %v426
        %v621 = vunpack.c.h.b16 %v426
        %v622 = vunpack.c.l.b16 %v427
        %v623 = vunpack.c.h.b16 %v427
        %v624 = vunpack.c.l.b16 %v428
        %v625 = vunpack.c.h.b16 %v428
        %v626 = vunpack.c.l.b16 %v429
        %v627 = vunpack.c.h.b16 %v429
        %v628 = vunpack.c.l.b16 %v430
        %v629 = vunpack.c.h.b16 %v430
        %v630 = vunpack.c.l.b16 %v431
        %v631 = vunpack.c.h.b16 %v431
        %v632 = vunpack.c.l.b16 %v432
        %v633 = vunpack.c.h.b16 %v432
        %v634 = vunpack.c.l.b16 %v433
        %v635 = vunpack.c.h.b16 %v433
        %v636 = vunpack.c.l.b16 %v434
        %v637 = vunpack.c.h.b16 %v434
        %v638 = vunpack.c.l.b16 %v435
        %v639 = vunpack.c.h.b16 %v435
        %v640 = vunpack.c.l.b16 %v436
        %v641 = vunpack.c.h.b16 %v436
        %v642 = vunpack.c.l.b16 %v437
        %v643 = vunpack.c.h.b16 %v437
        %v644 = vunpack.c.l.b16 %v438
        %v645 = vunpack.c.h.b16 %v438
        %v646 = vunpack.c.l.b16 %v439
        %v647 = vunpack.c.h.b16 %v439
        %v648 = vunpack.c.l.b16 %v440
        %v649 = vunpack.c.h.b16 %v440
        %v650 = vunpack.c.l.b16 %v441
        %v651 = vunpack.c.h.b16 %v441
        %v652 = vunpack.c.l.b16 %v442
        %v653 = vunpack.c.h.b16 %v442
        %v654 = vunpack.c.l.b16 %v443
        %v655 = vunpack.c.h.b16 %v443
        %v656 = vunpack.c.l.b16 %v444
        %v657 = vunpack.c.h.b16 %v444
        %v658 = vunpack.c.l.b16 %v445
        %v659 = vunpack.c.h.b16 %v445
        %v660 = vunpack.c.l.b16 %v446
        %v661 = vunpack.c.h.b16 %v446
        %v662 = vunpack.c.l.b16 %v447
        %v663 = vunpack.c.h.b16 %v447
        %v664 = vunpack.c.l.b16 %v448
        %v665 = vunpack.c.h.b16 %v448
        %v666 = vunpack.c.l.b16 %v449
        %v667 = vunpack.c.h.b16 %v449
        %v668 = vunpack.c.l.b16 %v450
        %v669 = vunpack.c.h.b16 %v450
        %v670 = vunpack.c.l.b16 %v451
        %v671 = vunpack.c.h.b16 %v451
        %v672 = vunpack.c.l.b16 %v452
        %v673 = vunpack.c.h.b16 %v452
        %v674 = vunpack.c.l.b16 %v453
        %v675 = vunpack.c.h.b16 %v453
        %v676 = vunpack.c.l.b16 %v454
        %v677 = vunpack.c.h.b16 %v454
        %v678 = vunpack.c.l.b16 %v455
        %v679 = vunpack.c.h.b16 %v455
        %v680 = vunpack.c.l.b16 %v456
        %v681 = vunpack.c.h.b16 %v456
        %v682 = vunpack.c.l.b16 %v457
        %v683 = vunpack.c.h.b16 %v457
        %v684 = vunpack.c.l.b16 %v458
        %v685 = vunpack.c.h.b16 %v458
        %v686 = vunpack.c.l.b16 %v459
        %v687 = vunpack.c.h.b16 %v459
        %v688 = vunpack.c.l.b16 %v460
        %v689 = vunpack.c.h.b16 %v460
        %v690 = vunpack.c.l.b16 %v461
        %v691 = vunpack.c.h.b16 %v461
        %v692 = vunpack.c.l.b16 %v462
        %v693 = vunpack.c.h.b16 %v462
        %v694 = vunpack.c.l.b16 %v463
        %v695 = vunpack.c.h.b16 %v463
        %v696 = vunpack.c.l.b16 %v464
        %v697 = vunpack.c.h.b16 %v464
        %v698 = vunpack.c.l.b16 %v465
        %v699 = vunpack.c.h.b16 %v465
        %v700 = vpack.c.b16 %v580, %v572
        %v701 = vpack.c.b16 %v581, %v573
        %v702 = vpack.c.b16 %v582, %v574
        %v703 = vpack.c.b16 %v583, %v575
        %v704 = vpack.c.b16 %v584, %v576
        %v705 = vpack.c.b16 %v585, %v577
        %v706 = vpack.c.b16 %v586, %v578
        %v707 = vpack.c.b16 %v587, %v579
        %v708 = vpack.c.b16 %v596, %v588
        %v709 = vpack.c.b16 %v597, %v589
        %v710 = vpack.c.b16 %v598, %v590
        %v711 = vpack.c.b16 %v599, %v591
        %v712 = vpack.c.b16 %v600, %v592
        %v713 = vpack.c.b16 %v601, %v593
        %v714 = vpack.c.b16 %v602, %v594
        %v715 = vpack.c.b16 %v603, %v595
        %v716 = vpack.c.b16 %v612, %v604
        %v717 = vpack.c.b16 %v613, %v605
        %v718 = vpack.c.b16 %v614, %v606
        %v719 = vpack.c.b16 %v615, %v607
        %v720 = vpack.c.b16 %v616, %v608
        %v721 = vpack.c.b16 %v617, %v609
        %v722 = vpack.c.b16 %v618, %v610
        %v723 = vpack.c.b16 %v619, %v611
        %v724 = vpack.c.b16 %v628, %v620
        %v725 = vpack.c.b16 %v629, %v621
        %v726 = vpack.c.b16 %v630, %v622
        %v727 = vpack.c.b16 %v631, %v623
        %v728 = vpack.c.b16 %v632, %v624
        %v729 = vpack.c.b16 %v633, %v625
        %v730 = vpack.c.b16 %v634, %v626
        %v731 = vpack.c.b16 %v635, %v627
        %v732 = vpack.c.b16 %v644, %v636
        %v733 = vpack.c.b16 %v645, %v637
        %v734 = vpack.c.b16 %v646, %v638
        %v735 = vpack.c.b16 %v647, %v639
        %v736 = vpack.c.b16 %v648, %v640
        %v737 = vpack.c.b16 %v649, %v641
        %v738 = vpack.c.b16 %v650, %v642
        %v739 = vpack.c.b16 %v651, %v643
        %v740 = vpack.c.b16 %v660, %v652
        %v741 = vpack.c.b16 %v661, %v653
        %v742 = vpack.c.b16 %v662, %v654
        %v743 = vpack.c.b16 %v663, %v655
        %v744 = vpack.c.b16 %v664, %v656
        %v745 = vpack.c.b16 %v665, %v657
        %v746 = vpack.c.b16 %v666, %v658
        %v747 = vpack.c.b16 %v667, %v659
        %v748 = vpack.c.b16 %v676, %v668
        %v749 = vpack.c.b16 %v677, %v669
        %v750 = vpack.c.b16 %v678, %v670
        %v751 = vpack.c.b16 %v679, %v671
        %v752 = vpack.c.b16 %v680, %v672
        %v753 = vpack.c.b16 %v681, %v673
        %v754 = vpack.c.b16 %v682, %v674
        %v755 = vpack.c.b16 %v683, %v675
        %v756 = vpack.c.b16 %v692, %v684
        %v757 = vpack.c.b16 %v693, %v685
        %v758 = vpack.c.b16 %v694, %v686
        %v759 = vpack.c.b16 %v695, %v687
        %v760 = vpack.c.b16 %v696, %v688
        %v761 = vpack.c.b16 %v697, %v689
        %v762 = vpack.c.b16 %v698, %v690
        %v763 = vpack.c.b16 %v699, %v691
        %828 = vmatprep.subr.bf16.mxu0 %v701
        %829 = vmatpush1.bf16.msra.mxu0 %v700
        %830 = vmatprep.subr.bf16.mxu0 %v709
        %831 = vmatpush1.bf16.msra.mxu0 %v708
        %832 = vmatprep.subr.bf16.mxu0 %v717
        %833 = vmatpush1.bf16.msra.mxu0 %v716
        %834 = vmatprep.subr.bf16.mxu0 %v725
        %835 = vmatpush1.bf16.msra.mxu0 %v724
        %836 = vmatprep.subr.bf16.mxu0 %v733
        %837 = vmatpush1.bf16.msra.mxu0 %v732
        %838 = vmatprep.subr.bf16.mxu0 %v741
        %839 = vmatpush1.bf16.msra.mxu0 %v740
        %840 = vmatprep.subr.bf16.mxu0 %v749
        %841 = vmatpush1.bf16.msra.mxu0 %v748
        %842 = vmatprep.subr.bf16.mxu0 %v757
        %843 = vmatpush1.bf16.msra.mxu0 %v756
        %844 = vmatprep.subr.bf16.mxu0 0
        %845 = vmatpush1.bf16.msra.mxu0 0
        %846 = vmatprep.subr.bf16.mxu0 0
        %847 = vmatpush1.bf16.msra.mxu0 0
        %848 = vmatprep.subr.bf16.mxu0 0
        %849 = vmatpush1.bf16.msra.mxu0 0
        %850 = vmatprep.subr.bf16.mxu0 0
        %851 = vmatpush1.bf16.msra.mxu0 0
        %852 = vmatprep.subr.bf16.mxu0 0
        %853 = vmatpush1.bf16.msra.mxu0 0
        %854 = vmatprep.subr.bf16.mxu0 0
        %855 = vmatpush1.bf16.msra.mxu0 0
        %856 = vmatprep.subr.bf16.mxu0 0
        %857 = vmatpush1.bf16.msra.mxu0 0
        %858 = vmatprep.subr.bf16.mxu0 0
        %859 = vmatpush1.bf16.msra.mxu0 0
        %860 = vmatprep.mubr.bf16.mxu0 0
        %861 = vmatmul.mubr.bf16.gmra.mrb[0].mxu0 %v401
        %v862 = vpop.f32.mrb[0].mxu0
        %v863 = vadd.f32 %v471, %v862
        %v864 = vpop.f32.mrb[0].mxu0
        %v865 = vadd.f32 %v475, %v864
        %v866 = vpop.f32.mrb[0].mxu0
        %v867 = vadd.f32 %v471, %v866
        %v868 = vpop.f32.mrb[0].mxu0
        %v869 = vadd.f32 %v475, %v868
        %870 = vdwg.mxu0
        %871 = vmatprep.subr.bf16.mxu0 %v703
        %872 = vmatpush1.bf16.msra.mxu0 %v702
        %873 = vmatprep.subr.bf16.mxu0 %v711
        %874 = vmatpush1.bf16.msra.mxu0 %v710
        %875 = vmatprep.subr.bf16.mxu0 %v719
        %876 = vmatpush1.bf16.msra.mxu0 %v718
        %877 = vmatprep.subr.bf16.mxu0 %v727
        %878 = vmatpush1.bf16.msra.mxu0 %v726
        %879 = vmatprep.subr.bf16.mxu0 %v735
        %880 = vmatpush1.bf16.msra.mxu0 %v734
        %881 = vmatprep.subr.bf16.mxu0 %v743
        %882 = vmatpush1.bf16.msra.mxu0 %v742
        %883 = vmatprep.subr.bf16.mxu0 %v751
        %884 = vmatpush1.bf16.msra.mxu0 %v750
        %885 = vmatprep.subr.bf16.mxu0 %v759
        %886 = vmatpush1.bf16.msra.mxu0 %v758
        %887 = vmatprep.subr.bf16.mxu0 0
        %888 = vmatpush1.bf16.msra.mxu0 0
        %889 = vmatprep.subr.bf16.mxu0 0
        %890 = vmatpush1.bf16.msra.mxu0 0
        %891 = vmatprep.subr.bf16.mxu0 0
        %892 = vmatpush1.bf16.msra.mxu0 0
        %893 = vmatprep.subr.bf16.mxu0 0
        %894 = vmatpush1.bf16.msra.mxu0 0
        %895 = vmatprep.subr.bf16.mxu0 0
        %896 = vmatpush1.bf16.msra.mxu0 0
        %897 = vmatprep.subr.bf16.mxu0 0
        %898 = vmatpush1.bf16.msra.mxu0 0
        %899 = vmatprep.subr.bf16.mxu0 0
        %900 = vmatpush1.bf16.msra.mxu0 0
        %901 = vmatprep.subr.bf16.mxu0 0
        %902 = vmatpush1.bf16.msra.mxu0 0
        %903 = vmatprep.mubr.bf16.mxu0 0
        %904 = vmatmul.mubr.bf16.gmra.mrb[0].mxu0 %v401
        %v905 = vpop.f32.mrb[0].mxu0
        %v906 = vadd.f32 %v479, %v905
        %v907 = vpop.f32.mrb[0].mxu0
        %v908 = vadd.f32 %v483, %v907
        %v909 = vpop.f32.mrb[0].mxu0
        %v910 = vadd.f32 %v479, %v909
        %v911 = vpop.f32.mrb[0].mxu0
        %v912 = vadd.f32 %v483, %v911
        %913 = vdwg.mxu0
        %914 = vmatprep.subr.bf16.mxu0 %v705
        %915 = vmatpush1.bf16.msra.mxu0 %v704
        %916 = vmatprep.subr.bf16.mxu0 %v713
        %917 = vmatpush1.bf16.msra.mxu0 %v712
        %918 = vmatprep.subr.bf16.mxu0 %v721
        %919 = vmatpush1.bf16.msra.mxu0 %v720
        %920 = vmatprep.subr.bf16.mxu0 %v729
        %921 = vmatpush1.bf16.msra.mxu0 %v728
        %922 = vmatprep.subr.bf16.mxu0 %v737
        %923 = vmatpush1.bf16.msra.mxu0 %v736
        %924 = vmatprep.subr.bf16.mxu0 %v745
        %925 = vmatpush1.bf16.msra.mxu0 %v744
        %926 = vmatprep.subr.bf16.mxu0 %v753
        %927 = vmatpush1.bf16.msra.mxu0 %v752
        %928 = vmatprep.subr.bf16.mxu0 %v761
        %929 = vmatpush1.bf16.msra.mxu0 %v760
        %930 = vmatprep.subr.bf16.mxu0 0
        %931 = vmatpush1.bf16.msra.mxu0 0
        %932 = vmatprep.subr.bf16.mxu0 0
        %933 = vmatpush1.bf16.msra.mxu0 0
        %934 = vmatprep.subr.bf16.mxu0 0
        %935 = vmatpush1.bf16.msra.mxu0 0
        %936 = vmatprep.subr.bf16.mxu0 0
        %937 = vmatpush1.bf16.msra.mxu0 0
        %938 = vmatprep.subr.bf16.mxu0 0
        %939 = vmatpush1.bf16.msra.mxu0 0
        %940 = vmatprep.subr.bf16.mxu0 0
        %941 = vmatpush1.bf16.msra.mxu0 0
        %942 = vmatprep.subr.bf16.mxu0 0
        %943 = vmatpush1.bf16.msra.mxu0 0
        %944 = vmatprep.subr.bf16.mxu0 0
        %945 = vmatpush1.bf16.msra.mxu0 0
        %946 = vmatprep.mubr.bf16.mxu0 0
        %947 = vmatmul.mubr.bf16.gmra.mrb[0].mxu0 %v401
        %v948 = vpop.f32.mrb[0].mxu0
        %v949 = vadd.f32 %v487, %v948
        %v950 = vpop.f32.mrb[0].mxu0
        %v951 = vadd.f32 %v491, %v950
        %v952 = vpop.f32.mrb[0].mxu0
        %v953 = vadd.f32 %v487, %v952
        %v954 = vpop.f32.mrb[0].mxu0
        %v955 = vadd.f32 %v491, %v954
        %956 = vdwg.mxu0
        %957 = vmatprep.subr.bf16.mxu0 %v707
        %958 = vmatpush1.bf16.msra.mxu0 %v706
        %959 = vmatprep.subr.bf16.mxu0 %v715
        %960 = vmatpush1.bf16.msra.mxu0 %v714
        %961 = vmatprep.subr.bf16.mxu0 %v723
        %962 = vmatpush1.bf16.msra.mxu0 %v722
        %963 = vmatprep.subr.bf16.mxu0 %v731
        %964 = vmatpush1.bf16.msra.mxu0 %v730
        %965 = vmatprep.subr.bf16.mxu0 %v739
        %966 = vmatpush1.bf16.msra.mxu0 %v738
        %967 = vmatprep.subr.bf16.mxu0 %v747
        %968 = vmatpush1.bf16.msra.mxu0 %v746
        %969 = vmatprep.subr.bf16.mxu0 %v755
        %970 = vmatpush1.bf16.msra.mxu0 %v754
        %971 = vmatprep.subr.bf16.mxu0 %v763
        %972 = vmatpush1.bf16.msra.mxu0 %v762
        %973 = vmatprep.subr.bf16.mxu0 0
        %974 = vmatpush1.bf16.msra.mxu0 0
        %975 = vmatprep.subr.bf16.mxu0 0
        %976 = vmatpush1.bf16.msra.mxu0 0
        %977 = vmatprep.subr.bf16.mxu0 0
        %978 = vmatpush1.bf16.msra.mxu0 0
        %979 = vmatprep.subr.bf16.mxu0 0
        %980 = vmatpush1.bf16.msra.mxu0 0
        %981 = vmatprep.subr.bf16.mxu0 0
        %982 = vmatpush1.bf16.msra.mxu0 0
        %983 = vmatprep.subr.bf16.mxu0 0
        %984 = vmatpush1.bf16.msra.mxu0 0
        %985 = vmatprep.subr.bf16.mxu0 0
        %986 = vmatpush1.bf16.msra.mxu0 0
        %987 = vmatprep.subr.bf16.mxu0 0
        %988 = vmatpush1.bf16.msra.mxu0 0
        %989 = vmatprep.mubr.bf16.mxu0 0
        %990 = vmatmul.mubr.bf16.gmra.mrb[0].mxu0 %v401
        %v991 = vpop.f32.mrb[0].mxu0
        %v992 = vadd.f32 %v495, %v991
        %v993 = vpop.f32.mrb[0].mxu0
        %v994 = vadd.f32 %v499, %v993
        %v995 = vpop.f32.mrb[0].mxu0
        %v996 = vadd.f32 %v495, %v995
        %v997 = vpop.f32.mrb[0].mxu0
        %v998 = vadd.f32 %v499, %v997
        %999 = vdwg.mxu0
        %p1000 = scmp.eq.s32.totalorder %s26, 0
        // Predicated region
        $region45: #{tnet_forward.6} parent=39 // pred_check
          %p1001 = pneg %p1000
        $region46: #{tnet_forward.6} parent=39 // pred_check_branch
          %1003 = sbr.rel (%p1001) target = $region48
        $region47: #{tnet_forward.6} parent=39 // pred_region
          %1004 = vst [vmem:[%s363] sm:$0xff] 0.0
          %1005 = vst [vmem:[%s367] sm:$0xff] 0.0
          %1006 = vst [vmem:[%s371] sm:$0xff] -inf
          %1007 = vst [vmem:[%s375] sm:$0xff] inf
        $region48: #{tnet_forward.6} parent=39 // pred_fallthru
          _
        %v1008 = vld [vmem:[%s363] sm:$0xff]
        %v1009 = vadd.f32 %v863, %v867
        %v1010 = vrot.slane %v1009, 4
        %v1011 = vadd.f32 %v1009, %v1010
        %v1012 = vrot.slane %v1011, 2
        %v1013 = vadd.f32 %v1011, %v1012
        %v1014 = vrot.slane %v1013, 1
        %v1015 = vadd.f32 %v1013, %v1014
        %v1016 = vadd.f32 %v865, %v869
        %v1017 = vrot.slane %v1016, 4
        %v1018 = vadd.f32 %v1016, %v1017
        %v1019 = vrot.slane %v1018, 2
        %v1020 = vadd.f32 %v1018, %v1019
        %v1021 = vrot.slane %v1020, 1
        %v1022 = vadd.f32 %v1020, %v1021
        %v1023 = vadd.f32 %v906, %v910
        %v1024 = vrot.slane %v1023, 4
        %v1025 = vadd.f32 %v1023, %v1024
        %v1026 = vrot.slane %v1025, 2
        %v1027 = vadd.f32 %v1025, %v1026
        %v1028 = vrot.slane %v1027, 1
        %v1029 = vadd.f32 %v1027, %v1028
        %v1030 = vadd.f32 %v908, %v912
        %v1031 = vrot.slane %v1030, 4
        %v1032 = vadd.f32 %v1030, %v1031
        %v1033 = vrot.slane %v1032, 2
        %v1034 = vadd.f32 %v1032, %v1033
        %v1035 = vrot.slane %v1034, 1
        %v1036 = vadd.f32 %v1034, %v1035
        %v1037 = vadd.f32 %v949, %v953
        %v1038 = vrot.slane %v1037, 4
        %v1039 = vadd.f32 %v1037, %v1038
        %v1040 = vrot.slane %v1039, 2
        %v1041 = vadd.f32 %v1039, %v1040
        %v1042 = vrot.slane %v1041, 1
        %v1043 = vadd.f32 %v1041, %v1042
        %v1044 = vadd.f32 %v951, %v955
        %v1045 = vrot.slane %v1044, 4
        %v1046 = vadd.f32 %v1044, %v1045
        %v1047 = vrot.slane %v1046, 2
        %v1048 = vadd.f32 %v1046, %v1047
        %v1049 = vrot.slane %v1048, 1
        %v1050 = vadd.f32 %v1048, %v1049
        %v1051 = vadd.f32 %v992, %v996
        %v1052 = vrot.slane %v1051, 4
        %v1053 = vadd.f32 %v1051, %v1052
        %v1054 = vrot.slane %v1053, 2
        %v1055 = vadd.f32 %v1053, %v1054
        %v1056 = vrot.slane %v1055, 1
        %v1057 = vadd.f32 %v1055, %v1056
        %v1058 = vadd.f32 %v994, %v998
        %v1059 = vrot.slane %v1058, 4
        %v1060 = vadd.f32 %v1058, %v1059
        %v1061 = vrot.slane %v1060, 2
        %v1062 = vadd.f32 %v1060, %v1061
        %v1063 = vrot.slane %v1062, 1
        %v1064 = vadd.f32 %v1062, %v1063
        %v1073 = vcombine.low %v1015, %v1022
        %v1074 = vcombine.low %v1029, %v1036
        %v1075 = vcombine.low %v1043, %v1050
        %v1076 = vcombine.low %v1057, %v1064
        %v1078 = vunpack.c.l.s4 1966171168
        %v1079 = vunpack.c.0.s8 %v1078
        %v1080 = vlaneseq
        %v1081 = vshrl.u32 %v1080, 7
        %v1082 = vsub.s32 %v1079, %v1081
        %v1083 = vrot.slane %v1073, %v1082
        %v1085 = vunpack.c.l.s4 1966171168
        %v1086 = vunpack.c.0.s8 %v1085
        %v1087 = vlaneseq
        %v1088 = vshrl.u32 %v1087, 7
        %v1089 = vsub.s32 %v1086, %v1088
        %v1090 = vrot.slane %v1074, %v1089
        %v1092 = vunpack.c.l.s4 1966171168
        %v1093 = vunpack.c.0.s8 %v1092
        %v1094 = vlaneseq
        %v1095 = vshrl.u32 %v1094, 7
        %v1096 = vsub.s32 %v1093, %v1095
        %v1097 = vrot.slane %v1075, %v1096
        %v1099 = vunpack.c.l.s4 1966171168
        %v1100 = vunpack.c.0.s8 %v1099
        %v1101 = vlaneseq
        %v1102 = vshrl.u32 %v1101, 7
        %v1103 = vsub.s32 %v1100, %v1102
        %v1104 = vrot.slane %v1076, %v1103
        %v1105 = vcombine.low %v1083, %v1090
        %v1106 = vcombine.low %v1097, %v1104
        %v1108 = vunpack.c.l.s4 1966171168
        %v1109 = vunpack.c.0.s8 %v1108
        %v1110 = vlaneseq
        %v1111 = vshrl.u32 %v1110, 7
        %v1112 = vsub.s32 %v1109, %v1111
        %v1113 = vrot.slane %v1105, %v1112
        %v1115 = vunpack.c.l.s4 1966171168
        %v1116 = vunpack.c.0.s8 %v1115
        %v1117 = vlaneseq
        %v1118 = vshrl.u32 %v1117, 7
        %v1119 = vsub.s32 %v1116, %v1118
        %v1120 = vrot.slane %v1106, %v1119
        %v1121 = vcombine.low %v1113, %v1120
        %v1123 = vadd.f32 %v1008, %v1121
        %1124 = vst [vmem:[%s363] sm:$0xff] %v1123
        %v1125 = vld [vmem:[%s367] sm:$0xff]
        %v1126 = vmul.f32 %v863, %v863
        %v1127 = vmul.f32 %v865, %v865
        %v1128 = vmul.f32 %v906, %v906
        %v1129 = vmul.f32 %v908, %v908
        %v1130 = vmul.f32 %v949, %v949
        %v1131 = vmul.f32 %v951, %v951
        %v1132 = vmul.f32 %v992, %v992
        %v1133 = vmul.f32 %v994, %v994
        %v1134 = vmul.f32 %v867, %v867
        %v1135 = vmul.f32 %v869, %v869
        %v1136 = vmul.f32 %v910, %v910
        %v1137 = vmul.f32 %v912, %v912
        %v1138 = vmul.f32 %v953, %v953
        %v1139 = vmul.f32 %v955, %v955
        %v1140 = vmul.f32 %v996, %v996
        %v1141 = vmul.f32 %v998, %v998
        %v1142 = vadd.f32 %v1126, %v1134
        %v1143 = vrot.slane %v1142, 4
        %v1144 = vadd.f32 %v1142, %v1143
        %v1145 = vrot.slane %v1144, 2
        %v1146 = vadd.f32 %v1144, %v1145
        %v1147 = vrot.slane %v1146, 1
        %v1148 = vadd.f32 %v1146, %v1147
        %v1149 = vadd.f32 %v1127, %v1135
        %v1150 = vrot.slane %v1149, 4
        %v1151 = vadd.f32 %v1149, %v1150
        %v1152 = vrot.slane %v1151, 2
        %v1153 = vadd.f32 %v1151, %v1152
        %v1154 = vrot.slane %v1153, 1
        %v1155 = vadd.f32 %v1153, %v1154
        %v1156 = vadd.f32 %v1128, %v1136
        %v1157 = vrot.slane %v1156, 4
        %v1158 = vadd.f32 %v1156, %v1157
        %v1159 = vrot.slane %v1158, 2
        %v1160 = vadd.f32 %v1158, %v1159
        %v1161 = vrot.slane %v1160, 1
        %v1162 = vadd.f32 %v1160, %v1161
        %v1163 = vadd.f32 %v1129, %v1137
        %v1164 = vrot.slane %v1163, 4
        %v1165 = vadd.f32 %v1163, %v1164
        %v1166 = vrot.slane %v1165, 2
        %v1167 = vadd.f32 %v1165, %v1166
        %v1168 = vrot.slane %v1167, 1
        %v1169 = vadd.f32 %v1167, %v1168
        %v1170 = vadd.f32 %v1130, %v1138
        %v1171 = vrot.slane %v1170, 4
        %v1172 = vadd.f32 %v1170, %v1171
        %v1173 = vrot.slane %v1172, 2
        %v1174 = vadd.f32 %v1172, %v1173
        %v1175 = vrot.slane %v1174, 1
        %v1176 = vadd.f32 %v1174, %v1175
        %v1177 = vadd.f32 %v1131, %v1139
        %v1178 = vrot.slane %v1177, 4
        %v1179 = vadd.f32 %v1177, %v1178
        %v1180 = vrot.slane %v1179, 2
        %v1181 = vadd.f32 %v1179, %v1180
        %v1182 = vrot.slane %v1181, 1
        %v1183 = vadd.f32 %v1181, %v1182
        %v1184 = vadd.f32 %v1132, %v1140
        %v1185 = vrot.slane %v1184, 4
        %v1186 = vadd.f32 %v1184, %v1185
        %v1187 = vrot.slane %v1186, 2
        %v1188 = vadd.f32 %v1186, %v1187
        %v1189 = vrot.slane %v1188, 1
        %v1190 = vadd.f32 %v1188, %v1189
        %v1191 = vadd.f32 %v1133, %v1141
        %v1192 = vrot.slane %v1191, 4
        %v1193 = vadd.f32 %v1191, %v1192
        %v1194 = vrot.slane %v1193, 2
        %v1195 = vadd.f32 %v1193, %v1194
        %v1196 = vrot.slane %v1195, 1
        %v1197 = vadd.f32 %v1195, %v1196
        %v1206 = vcombine.low %v1148, %v1155
        %v1207 = vcombine.low %v1162, %v1169
        %v1208 = vcombine.low %v1176, %v1183
        %v1209 = vcombine.low %v1190, %v1197
        %v1211 = vunpack.c.l.s4 1966171168
        %v1212 = vunpack.c.0.s8 %v1211
        %v1213 = vlaneseq
        %v1214 = vshrl.u32 %v1213, 7
        %v1215 = vsub.s32 %v1212, %v1214
        %v1216 = vrot.slane %v1206, %v1215
        %v1218 = vunpack.c.l.s4 1966171168
        %v1219 = vunpack.c.0.s8 %v1218
        %v1220 = vlaneseq
        %v1221 = vshrl.u32 %v1220, 7
        %v1222 = vsub.s32 %v1219, %v1221
        %v1223 = vrot.slane %v1207, %v1222
        %v1225 = vunpack.c.l.s4 1966171168
        %v1226 = vunpack.c.0.s8 %v1225
        %v1227 = vlaneseq
        %v1228 = vshrl.u32 %v1227, 7
        %v1229 = vsub.s32 %v1226, %v1228
        %v1230 = vrot.slane %v1208, %v1229
        %v1232 = vunpack.c.l.s4 1966171168
        %v1233 = vunpack.c.0.s8 %v1232
        %v1234 = vlaneseq
        %v1235 = vshrl.u32 %v1234, 7
        %v1236 = vsub.s32 %v1233, %v1235
        %v1237 = vrot.slane %v1209, %v1236
        %v1238 = vcombine.low %v1216, %v1223
        %v1239 = vcombine.low %v1230, %v1237
        %v1241 = vunpack.c.l.s4 1966171168
        %v1242 = vunpack.c.0.s8 %v1241
        %v1243 = vlaneseq
        %v1244 = vshrl.u32 %v1243, 7
        %v1245 = vsub.s32 %v1242, %v1244
        %v1246 = vrot.slane %v1238, %v1245
        %v1248 = vunpack.c.l.s4 1966171168
        %v1249 = vunpack.c.0.s8 %v1248
        %v1250 = vlaneseq
        %v1251 = vshrl.u32 %v1250, 7
        %v1252 = vsub.s32 %v1249, %v1251
        %v1253 = vrot.slane %v1239, %v1252
        %v1254 = vcombine.low %v1246, %v1253
        %v1256 = vadd.f32 %v1125, %v1254
        %1257 = vst [vmem:[%s367] sm:$0xff] %v1256
        %v1258 = vld [vmem:[%s371] sm:$0xff]
        %v1259 = vmax.f32 %v863, %v867
        %v1260 = vrot.slane %v1259, 4
        %v1261 = vmax.f32 %v1259, %v1260
        %v1262 = vrot.slane %v1261, 2
        %v1263 = vmax.f32 %v1261, %v1262
        %v1264 = vrot.slane %v1263, 1
        %v1265 = vmax.f32 %v1263, %v1264
        %v1266 = vmax.f32 %v865, %v869
        %v1267 = vrot.slane %v1266, 4
        %v1268 = vmax.f32 %v1266, %v1267
        %v1269 = vrot.slane %v1268, 2
        %v1270 = vmax.f32 %v1268, %v1269
        %v1271 = vrot.slane %v1270, 1
        %v1272 = vmax.f32 %v1270, %v1271
        %v1273 = vmax.f32 %v906, %v910
        %v1274 = vrot.slane %v1273, 4
        %v1275 = vmax.f32 %v1273, %v1274
        %v1276 = vrot.slane %v1275, 2
        %v1277 = vmax.f32 %v1275, %v1276
        %v1278 = vrot.slane %v1277, 1
        %v1279 = vmax.f32 %v1277, %v1278
        %v1280 = vmax.f32 %v908, %v912
        %v1281 = vrot.slane %v1280, 4
        %v1282 = vmax.f32 %v1280, %v1281
        %v1283 = vrot.slane %v1282, 2
        %v1284 = vmax.f32 %v1282, %v1283
        %v1285 = vrot.slane %v1284, 1
        %v1286 = vmax.f32 %v1284, %v1285
        %v1287 = vmax.f32 %v949, %v953
        %v1288 = vrot.slane %v1287, 4
        %v1289 = vmax.f32 %v1287, %v1288
        %v1290 = vrot.slane %v1289, 2
        %v1291 = vmax.f32 %v1289, %v1290
        %v1292 = vrot.slane %v1291, 1
        %v1293 = vmax.f32 %v1291, %v1292
        %v1294 = vmax.f32 %v951, %v955
        %v1295 = vrot.slane %v1294, 4
        %v1296 = vmax.f32 %v1294, %v1295
        %v1297 = vrot.slane %v1296, 2
        %v1298 = vmax.f32 %v1296, %v1297
        %v1299 = vrot.slane %v1298, 1
        %v1300 = vmax.f32 %v1298, %v1299
        %v1301 = vmax.f32 %v992, %v996
        %v1302 = vrot.slane %v1301, 4
        %v1303 = vmax.f32 %v1301, %v1302
        %v1304 = vrot.slane %v1303, 2
        %v1305 = vmax.f32 %v1303, %v1304
        %v1306 = vrot.slane %v1305, 1
        %v1307 = vmax.f32 %v1305, %v1306
        %v1308 = vmax.f32 %v994, %v998
        %v1309 = vrot.slane %v1308, 4
        %v1310 = vmax.f32 %v1308, %v1309
        %v1311 = vrot.slane %v1310, 2
        %v1312 = vmax.f32 %v1310, %v1311
        %v1313 = vrot.slane %v1312, 1
        %v1314 = vmax.f32 %v1312, %v1313
        %v1323 = vcombine.low %v1265, %v1272
        %v1324 = vcombine.low %v1279, %v1286
        %v1325 = vcombine.low %v1293, %v1300
        %v1326 = vcombine.low %v1307, %v1314
        %v1328 = vunpack.c.l.s4 1966171168
        %v1329 = vunpack.c.0.s8 %v1328
        %v1330 = vlaneseq
        %v1331 = vshrl.u32 %v1330, 7
        %v1332 = vsub.s32 %v1329, %v1331
        %v1333 = vrot.slane %v1323, %v1332
        %v1335 = vunpack.c.l.s4 1966171168
        %v1336 = vunpack.c.0.s8 %v1335
        %v1337 = vlaneseq
        %v1338 = vshrl.u32 %v1337, 7
        %v1339 = vsub.s32 %v1336, %v1338
        %v1340 = vrot.slane %v1324, %v1339
        %v1342 = vunpack.c.l.s4 1966171168
        %v1343 = vunpack.c.0.s8 %v1342
        %v1344 = vlaneseq
        %v1345 = vshrl.u32 %v1344, 7
        %v1346 = vsub.s32 %v1343, %v1345
        %v1347 = vrot.slane %v1325, %v1346
        %v1349 = vunpack.c.l.s4 1966171168
        %v1350 = vunpack.c.0.s8 %v1349
        %v1351 = vlaneseq
        %v1352 = vshrl.u32 %v1351, 7
        %v1353 = vsub.s32 %v1350, %v1352
        %v1354 = vrot.slane %v1326, %v1353
        %v1355 = vcombine.low %v1333, %v1340
        %v1356 = vcombine.low %v1347, %v1354
        %v1358 = vunpack.c.l.s4 1966171168
        %v1359 = vunpack.c.0.s8 %v1358
        %v1360 = vlaneseq
        %v1361 = vshrl.u32 %v1360, 7
        %v1362 = vsub.s32 %v1359, %v1361
        %v1363 = vrot.slane %v1355, %v1362
        %v1365 = vunpack.c.l.s4 1966171168
        %v1366 = vunpack.c.0.s8 %v1365
        %v1367 = vlaneseq
        %v1368 = vshrl.u32 %v1367, 7
        %v1369 = vsub.s32 %v1366, %v1368
        %v1370 = vrot.slane %v1356, %v1369
        %v1371 = vcombine.low %v1363, %v1370
        %v1373 = vmax.f32 %v1258, %v1371
        %1374 = vst [vmem:[%s371] sm:$0xff] %v1373
        %v1375 = vld [vmem:[%s375] sm:$0xff]
        %v1376 = vmin.f32 %v863, %v867
        %v1377 = vrot.slane %v1376, 4
        %v1378 = vmin.f32 %v1376, %v1377
        %v1379 = vrot.slane %v1378, 2
        %v1380 = vmin.f32 %v1378, %v1379
        %v1381 = vrot.slane %v1380, 1
        %v1382 = vmin.f32 %v1380, %v1381
        %v1383 = vmin.f32 %v865, %v869
        %v1384 = vrot.slane %v1383, 4
        %v1385 = vmin.f32 %v1383, %v1384
        %v1386 = vrot.slane %v1385, 2
        %v1387 = vmin.f32 %v1385, %v1386
        %v1388 = vrot.slane %v1387, 1
        %v1389 = vmin.f32 %v1387, %v1388
        %v1390 = vmin.f32 %v906, %v910
        %v1391 = vrot.slane %v1390, 4
        %v1392 = vmin.f32 %v1390, %v1391
        %v1393 = vrot.slane %v1392, 2
        %v1394 = vmin.f32 %v1392, %v1393
        %v1395 = vrot.slane %v1394, 1
        %v1396 = vmin.f32 %v1394, %v1395
        %v1397 = vmin.f32 %v908, %v912
        %v1398 = vrot.slane %v1397, 4
        %v1399 = vmin.f32 %v1397, %v1398
        %v1400 = vrot.slane %v1399, 2
        %v1401 = vmin.f32 %v1399, %v1400
        %v1402 = vrot.slane %v1401, 1
        %v1403 = vmin.f32 %v1401, %v1402
        %v1404 = vmin.f32 %v949, %v953
        %v1405 = vrot.slane %v1404, 4
        %v1406 = vmin.f32 %v1404, %v1405
        %v1407 = vrot.slane %v1406, 2
        %v1408 = vmin.f32 %v1406, %v1407
        %v1409 = vrot.slane %v1408, 1
        %v1410 = vmin.f32 %v1408, %v1409
        %v1411 = vmin.f32 %v951, %v955
        %v1412 = vrot.slane %v1411, 4
        %v1413 = vmin.f32 %v1411, %v1412
        %v1414 = vrot.slane %v1413, 2
        %v1415 = vmin.f32 %v1413, %v1414
        %v1416 = vrot.slane %v1415, 1
        %v1417 = vmin.f32 %v1415, %v1416
        %v1418 = vmin.f32 %v992, %v996
        %v1419 = vrot.slane %v1418, 4
        %v1420 = vmin.f32 %v1418, %v1419
        %v1421 = vrot.slane %v1420, 2
        %v1422 = vmin.f32 %v1420, %v1421
        %v1423 = vrot.slane %v1422, 1
        %v1424 = vmin.f32 %v1422, %v1423
        %v1425 = vmin.f32 %v994, %v998
        %v1426 = vrot.slane %v1425, 4
        %v1427 = vmin.f32 %v1425, %v1426
        %v1428 = vrot.slane %v1427, 2
        %v1429 = vmin.f32 %v1427, %v1428
        %v1430 = vrot.slane %v1429, 1
        %v1431 = vmin.f32 %v1429, %v1430
        %v1440 = vcombine.low %v1382, %v1389
        %v1441 = vcombine.low %v1396, %v1403
        %v1442 = vcombine.low %v1410, %v1417
        %v1443 = vcombine.low %v1424, %v1431
        %v1445 = vunpack.c.l.s4 1966171168
        %v1446 = vunpack.c.0.s8 %v1445
        %v1447 = vlaneseq
        %v1448 = vshrl.u32 %v1447, 7
        %v1449 = vsub.s32 %v1446, %v1448
        %v1450 = vrot.slane %v1440, %v1449
        %v1452 = vunpack.c.l.s4 1966171168
        %v1453 = vunpack.c.0.s8 %v1452
        %v1454 = vlaneseq
        %v1455 = vshrl.u32 %v1454, 7
        %v1456 = vsub.s32 %v1453, %v1455
        %v1457 = vrot.slane %v1441, %v1456
        %v1459 = vunpack.c.l.s4 1966171168
        %v1460 = vunpack.c.0.s8 %v1459
        %v1461 = vlaneseq
        %v1462 = vshrl.u32 %v1461, 7
        %v1463 = vsub.s32 %v1460, %v1462
        %v1464 = vrot.slane %v1442, %v1463
        %v1466 = vunpack.c.l.s4 1966171168
        %v1467 = vunpack.c.0.s8 %v1466
        %v1468 = vlaneseq
        %v1469 = vshrl.u32 %v1468, 7
        %v1470 = vsub.s32 %v1467, %v1469
        %v1471 = vrot.slane %v1443, %v1470
        %v1472 = vcombine.low %v1450, %v1457
        %v1473 = vcombine.low %v1464, %v1471
        %v1475 = vunpack.c.l.s4 1966171168
        %v1476 = vunpack.c.0.s8 %v1475
        %v1477 = vlaneseq
        %v1478 = vshrl.u32 %v1477, 7
        %v1479 = vsub.s32 %v1476, %v1478
        %v1480 = vrot.slane %v1472, %v1479
        %v1482 = vunpack.c.l.s4 1966171168
        %v1483 = vunpack.c.0.s8 %v1482
        %v1484 = vlaneseq
        %v1485 = vshrl.u32 %v1484, 7
        %v1486 = vsub.s32 %v1483, %v1485
        %v1487 = vrot.slane %v1473, %v1486
        %v1488 = vcombine.low %v1480, %v1487
        %v1490 = vmin.f32 %v1375, %v1488
        %1491 = vst [vmem:[%s375] sm:$0xff] %v1490
        %p1492 = scmp.lt.s32.totalorder %s25, 1
        %s1493 = scalar_select %p1492, %s25, 1
        %s1494 = smul.addr %s1493, 8
        %s1495 = scalar_lea.vmem %s5, %s1494
        %p1496 = scmp.lt.s32.totalorder %s25, 1
        %s1497 = scalar_select %p1496, %s25, 1
        %s1498 = smul.addr %s1497, 8
        %s1499 = scalar_lea.vmem %s6, %s1498
        %p1500 = scmp.lt.s32.totalorder %s25, 1
        %s1501 = scalar_select %p1500, %s25, 1
        %s1502 = smul.addr %s1501, 8
        %s1503 = scalar_lea.vmem %s7, %s1502
        %p1504 = scmp.lt.s32.totalorder %s25, 1
        %s1505 = scalar_select %p1504, %s25, 1
        %s1506 = smul.addr %s1505, 8
        %s1507 = scalar_lea.vmem %s8, %s1506
        // Predicated region
        $region49: #{tnet_forward.6} parent=39 // pred_check
          %p1508 = pneg %p163
        $region50: #{tnet_forward.6} parent=39 // pred_check_branch
          %1510 = sbr.rel (%p1508) target = $region52
        $region51: #{tnet_forward.6} parent=39 // pred_region
          _
        $region52: #{tnet_forward.6} parent=39 // pred_fallthru
          _
        // Predicated region
        $region53: #{tnet_forward.6} parent=39 // pred_check
          %p1511 = pneg %p189
        $region54: #{tnet_forward.6} parent=39 // pred_check_branch
          %1513 = sbr.rel (%p1511) target = $region56
        $region55: #{tnet_forward.6} parent=39 // pred_region
          _
        $region56: #{tnet_forward.6} parent=39 // pred_fallthru
          _
        // Predicated region
        $region57: #{tnet_forward.6} parent=39 // pred_check
          %p1514 = pneg %p215
        $region58: #{tnet_forward.6} parent=39 // pred_check_branch
          %1516 = sbr.rel (%p1514) target = $region60
        $region59: #{tnet_forward.6} parent=39 // pred_region
          _
        $region60: #{tnet_forward.6} parent=39 // pred_fallthru
          _
        // Predicated region
        $region61: #{tnet_forward.6} parent=39 // pred_check
          %p1517 = pneg %p241
        $region62: #{tnet_forward.6} parent=39 // pred_check_branch
          %1519 = sbr.rel (%p1517) target = $region64
        $region63: #{tnet_forward.6} parent=39 // pred_region
          _
        $region64: #{tnet_forward.6} parent=39 // pred_fallthru
          _
      $region40: #{tnet_forward.6} parent=5 // pred_fallthru
        _
      %p1520 = scmp.le.s32.totalorder 2, %s16
      // Predicated region
      $region65: #{tnet_forward.6} parent=5 // pred_check
        %p1521 = pneg %p1520
      $region66: #{tnet_forward.6} parent=5 // pred_check_branch
        %1523 = sbr.rel (%p1521) target = $region68
      $region67: #{tnet_forward.6} parent=5 // pred_region
        %s1524 = ssub.s32 %s16, 2
        // Predicated region
        $region69: #{tnet_forward.6} parent=67 // pred_check
          %p1525 = pneg %p169
        $region70: #{tnet_forward.6} parent=67 // pred_check_branch
          %1527 = sbr.rel (%p1525) target = $region72
        $region71: #{tnet_forward.6} parent=67 // pred_region
          %p1528 = scmp.lt.s32.totalorder %s27, 1
          %s1529 = scalar_select %p1528, %s27, 1
          %s1530 = smul.addr %s1529, 8
          %s1531 = scalar_lea.vmem %s5, %s1530
        $region72: #{tnet_forward.6} parent=67 // pred_fallthru
          _
        // Predicated region
        $region73: #{tnet_forward.6} parent=67 // pred_check
          %p1532 = pneg %p195
        $region74: #{tnet_forward.6} parent=67 // pred_check_branch
          %1534 = sbr.rel (%p1532) target = $region76
        $region75: #{tnet_forward.6} parent=67 // pred_region
          %p1535 = scmp.lt.s32.totalorder %s27, 1
          %s1536 = scalar_select %p1535, %s27, 1
          %s1537 = smul.addr %s1536, 8
          %s1538 = scalar_lea.vmem %s6, %s1537
        $region76: #{tnet_forward.6} parent=67 // pred_fallthru
          _
        // Predicated region
        $region77: #{tnet_forward.6} parent=67 // pred_check
          %p1539 = pneg %p221
        $region78: #{tnet_forward.6} parent=67 // pred_check_branch
          %1541 = sbr.rel (%p1539) target = $region80
        $region79: #{tnet_forward.6} parent=67 // pred_region
          %p1542 = scmp.lt.s32.totalorder %s27, 1
          %s1543 = scalar_select %p1542, %s27, 1
          %s1544 = smul.addr %s1543, 8
          %s1545 = scalar_lea.vmem %s7, %s1544
        $region80: #{tnet_forward.6} parent=67 // pred_fallthru
          _
        // Predicated region
        $region81: #{tnet_forward.6} parent=67 // pred_check
          %p1546 = pneg %p247
        $region82: #{tnet_forward.6} parent=67 // pred_check_branch
          %1548 = sbr.rel (%p1546) target = $region84
        $region83: #{tnet_forward.6} parent=67 // pred_region
          %p1549 = scmp.lt.s32.totalorder %s27, 1
          %s1550 = scalar_select %p1549, %s27, 1
          %s1551 = smul.addr %s1550, 8
          %s1552 = scalar_lea.vmem %s8, %s1551
        $region84: #{tnet_forward.6} parent=67 // pred_fallthru
          _
      $region68: #{tnet_forward.6} parent=5 // pred_fallthru
        _
    $region6: #{tnet_forward.6} parent=1 // loop_footer
      %s20 = sadd.s32 1, %s16
    $region7: #{tnet_forward.6} parent=1 // loop_footer_branch
      %15 = sbr.rel target = $region3
    $region8: #{tnet_forward.6} parent=1 // loop_exit
      _
    %1553 = vsyncpa [#allocation3], 1
    %s1554 = scalar_lea.sflag [#allocation3], 1
    %1555 = vsyncpa %s1554, 1

// kernel: tnet_forward.7
$region0: #{tnet_forward.7}
  #allocation0 [shape = 'u32[]', space=smem, size = 0x4, offset = 0x4, fixed_abs, tag = 'smem constant byte address 0x4 - core index']
  #allocation1 [shape = 'u32[144,128]{1,0:T(1,128)}', space=vmem, size = 0x12000, scoped, tag = 'internal scratch']
  %s0 = inlined_call_operand.vmem [shape: f32[2,1024], index: 0, kind: input, shape index: {}]
  %s1 = inlined_call_operand.vmem [shape: f32[2,1024], index: 1, kind: input, shape index: {}]
  %s2 = inlined_call_operand.vmem [shape: f32[1,1024], index: 2, kind: input, shape index: {}]
  %s3 = inlined_call_operand.vmem [shape: f32[1,1024], index: 3, kind: input, shape index: {}]
  %s4 = inlined_call_operand.vmem [shape: bf16[1024,512], index: 4, kind: input, shape index: {}]
  %s5 = inlined_call_operand.vmem [shape: f32[1,512], index: 5, kind: input, shape index: {}]
  %s6 = inlined_call_operand.vmem [shape: bf16[512,256], index: 6, kind: input, shape index: {}]
  %s7 = inlined_call_operand.vmem [shape: f32[1,256], index: 7, kind: input, shape index: {}]
  %s8 = inlined_call_operand.vmem [shape: bf16[256,128], index: 8, kind: input, shape index: {}]
  %s9 = inlined_call_operand.vmem [shape: f32[1,128], index: 9, kind: input, shape index: {}]
  %s10 = inlined_call_operand.vmem [shape: f32[1,128], index: 10, kind: input, shape index: {}]
  %s11 = inlined_call_operand.vmem [shape: f32[2,128], index: 11, kind: output, shape index: {}]
  %s12 = sld [smem:[#allocation0]]
  $region54: #{tnet_forward.7} parent=0
    _
  %s14 = ssub.s32 1, %s12
  %s15 = scalar_select 0, %s14, %s12
  // Predicated region
  $region2: #{tnet_forward.7} parent=0 // pred_check
    _
  $region3: #{tnet_forward.7} parent=0 // pred_check_branch
    %17 = sbr.rel (0) target = $region5
  $region4: #{tnet_forward.7} parent=0 // pred_region
    _
  $region5: #{tnet_forward.7} parent=0 // pred_fallthru
    _
  // Predicated region
  $region6: #{tnet_forward.7} parent=0 // pred_check
    _
  $region7: #{tnet_forward.7} parent=0 // pred_check_branch
    %19 = sbr.rel (0) target = $region9
  $region8: #{tnet_forward.7} parent=0 // pred_region
    _
  $region9: #{tnet_forward.7} parent=0 // pred_fallthru
    _
  // Predicated region
  $region10: #{tnet_forward.7} parent=0 // pred_check
    _
  $region11: #{tnet_forward.7} parent=0 // pred_check_branch
    %21 = sbr.rel (0) target = $region13
  $region12: #{tnet_forward.7} parent=0 // pred_region
    _
  $region13: #{tnet_forward.7} parent=0 // pred_fallthru
    _
  // Predicated region
  $region14: #{tnet_forward.7} parent=0 // pred_check
    _
  $region15: #{tnet_forward.7} parent=0 // pred_check_branch
    %23 = sbr.rel (0) target = $region17
  $region16: #{tnet_forward.7} parent=0 // pred_region
    _
  $region17: #{tnet_forward.7} parent=0 // pred_fallthru
    _
  // Predicated region
  $region18: #{tnet_forward.7} parent=0 // pred_check
    _
  $region19: #{tnet_forward.7} parent=0 // pred_check_branch
    %25 = sbr.rel (0) target = $region21
  $region20: #{tnet_forward.7} parent=0 // pred_region
    _
  $region21: #{tnet_forward.7} parent=0 // pred_fallthru
    _
  // Predicated region
  $region22: #{tnet_forward.7} parent=0 // pred_check
    _
  $region23: #{tnet_forward.7} parent=0 // pred_check_branch
    %27 = sbr.rel (0) target = $region25
  $region24: #{tnet_forward.7} parent=0 // pred_region
    _
  $region25: #{tnet_forward.7} parent=0 // pred_fallthru
    _
  // Predicated region
  $region26: #{tnet_forward.7} parent=0 // pred_check
    _
  $region27: #{tnet_forward.7} parent=0 // pred_check_branch
    %29 = sbr.rel (0) target = $region29
  $region28: #{tnet_forward.7} parent=0 // pred_region
    _
  $region29: #{tnet_forward.7} parent=0 // pred_fallthru
    _
  // Predicated region
  $region30: #{tnet_forward.7} parent=0 // pred_check
    _
  $region31: #{tnet_forward.7} parent=0 // pred_check_branch
    %31 = sbr.rel (0) target = $region33
  $region32: #{tnet_forward.7} parent=0 // pred_region
    _
  $region33: #{tnet_forward.7} parent=0 // pred_fallthru
    _
  // Predicated region
  $region34: #{tnet_forward.7} parent=0 // pred_check
    _
  $region35: #{tnet_forward.7} parent=0 // pred_check_branch
    %33 = sbr.rel (0) target = $region37
  $region36: #{tnet_forward.7} parent=0 // pred_region
    _
  $region37: #{tnet_forward.7} parent=0 // pred_fallthru
    _
  // Predicated region
  $region38: #{tnet_forward.7} parent=0 // pred_check
    _
  $region39: #{tnet_forward.7} parent=0 // pred_check_branch
    %35 = sbr.rel (0) target = $region41
  $region40: #{tnet_forward.7} parent=0 // pred_region
    _
  $region41: #{tnet_forward.7} parent=0 // pred_fallthru
    _
  // Predicated region
  $region42: #{tnet_forward.7} parent=0 // pred_check
    _
  $region43: #{tnet_forward.7} parent=0 // pred_check_branch
    %37 = sbr.rel (0) target = $region45
  $region44: #{tnet_forward.7} parent=0 // pred_region
    _
  $region45: #{tnet_forward.7} parent=0 // pred_fallthru
    _
  %v39 = vld [vmem:[%s0] sm:$0xff]
  %v40 = vld [vmem:[%s0 + $0x8] sm:$0xff]
  %v41 = vld [vmem:[%s2] sm:$0xff]
  %v43 = vlaneseq
  %v44 = vshrl.u32 %v43, 7
  %v45 = vsub.s32 0, %v44
  %v46 = vrot.slane %v41, %v45
  %v47 = vlaneseq
  %v48 = vshrl.u32 %v47, 7
  %v49 = vsub.s32 1, %v48
  %v50 = vrot.slane %v41, %v49
  %v51 = vlaneseq
  %v52 = vshrl.u32 %v51, 7
  %v53 = vsub.s32 2, %v52
  %v54 = vrot.slane %v41, %v53
  %v55 = vlaneseq
  %v56 = vshrl.u32 %v55, 7
  %v57 = vsub.s32 3, %v56
  %v58 = vrot.slane %v41, %v57
  %v59 = vlaneseq
  %v60 = vshrl.u32 %v59, 7
  %v61 = vsub.s32 4, %v60
  %v62 = vrot.slane %v41, %v61
  %v63 = vlaneseq
  %v64 = vshrl.u32 %v63, 7
  %v65 = vsub.s32 5, %v64
  %v66 = vrot.slane %v41, %v65
  %v67 = vlaneseq
  %v68 = vshrl.u32 %v67, 7
  %v69 = vsub.s32 6, %v68
  %v70 = vrot.slane %v41, %v69
  %v71 = vlaneseq
  %v72 = vshrl.u32 %v71, 7
  %v73 = vsub.s32 7, %v72
  %v74 = vrot.slane %v41, %v73
  %v75 = vcombine.low %v46, %v50
  %v76 = vcombine.low %v54, %v58
  %v78 = vunpack.c.l.s4 1983009808
  %v79 = vunpack.c.0.s8 %v78
  %v80 = vlaneseq
  %v81 = vshrl.u32 %v80, 7
  %v82 = vsub.s32 %v79, %v81
  %v83 = vrot.slane %v75, %v82
  %v85 = vunpack.c.l.s4 1983009808
  %v86 = vunpack.c.0.s8 %v85
  %v87 = vlaneseq
  %v88 = vshrl.u32 %v87, 7
  %v89 = vsub.s32 %v86, %v88
  %v90 = vrot.slane %v76, %v89
  %v91 = vcombine.low %v83, %v90
  %v92 = vcombine.low %v62, %v66
  %v93 = vcombine.low %v70, %v74
  %v95 = vunpack.c.l.s4 1983009808
  %v96 = vunpack.c.0.s8 %v95
  %v97 = vlaneseq
  %v98 = vshrl.u32 %v97, 7
  %v99 = vsub.s32 %v96, %v98
  %v100 = vrot.slane %v92, %v99
  %v102 = vunpack.c.l.s4 1983009808
  %v103 = vunpack.c.0.s8 %v102
  %v104 = vlaneseq
  %v105 = vshrl.u32 %v104, 7
  %v106 = vsub.s32 %v103, %v105
  %v107 = vrot.slane %v93, %v106
  %v108 = vcombine.low %v100, %v107
  %v111 = vmul.f32 %v39, %v91
  %v112 = vmul.f32 %v40, %v108
  %v113 = vld [vmem:[%s3] sm:$0xff]
  %v115 = vlaneseq
  %v116 = vshrl.u32 %v115, 7
  %v117 = vsub.s32 0, %v116
  %v118 = vrot.slane %v113, %v117
  %v119 = vlaneseq
  %v120 = vshrl.u32 %v119, 7
  %v121 = vsub.s32 1, %v120
  %v122 = vrot.slane %v113, %v121
  %v123 = vlaneseq
  %v124 = vshrl.u32 %v123, 7
  %v125 = vsub.s32 2, %v124
  %v126 = vrot.slane %v113, %v125
  %v127 = vlaneseq
  %v128 = vshrl.u32 %v127, 7
  %v129 = vsub.s32 3, %v128
  %v130 = vrot.slane %v113, %v129
  %v131 = vlaneseq
  %v132 = vshrl.u32 %v131, 7
  %v133 = vsub.s32 4, %v132
  %v134 = vrot.slane %v113, %v133
  %v135 = vlaneseq
  %v136 = vshrl.u32 %v135, 7
  %v137 = vsub.s32 5, %v136
  %v138 = vrot.slane %v113, %v137
  %v139 = vlaneseq
  %v140 = vshrl.u32 %v139, 7
  %v141 = vsub.s32 6, %v140
  %v142 = vrot.slane %v113, %v141
  %v143 = vlaneseq
  %v144 = vshrl.u32 %v143, 7
  %v145 = vsub.s32 7, %v144
  %v146 = vrot.slane %v113, %v145
  %v147 = vcombine.low %v118, %v122
  %v148 = vcombine.low %v126, %v130
  %v150 = vunpack.c.l.s4 1983009808
  %v151 = vunpack.c.0.s8 %v150
  %v152 = vlaneseq
  %v153 = vshrl.u32 %v152, 7
  %v154 = vsub.s32 %v151, %v153
  %v155 = vrot.slane %v147, %v154
  %v157 = vunpack.c.l.s4 1983009808
  %v158 = vunpack.c.0.s8 %v157
  %v159 = vlaneseq
  %v160 = vshrl.u32 %v159, 7
  %v161 = vsub.s32 %v158, %v160
  %v162 = vrot.slane %v148, %v161
  %v163 = vcombine.low %v155, %v162
  %v164 = vcombine.low %v134, %v138
  %v165 = vcombine.low %v142, %v146
  %v167 = vunpack.c.l.s4 1983009808
  %v168 = vunpack.c.0.s8 %v167
  %v169 = vlaneseq
  %v170 = vshrl.u32 %v169, 7
  %v171 = vsub.s32 %v168, %v170
  %v172 = vrot.slane %v164, %v171
  %v174 = vunpack.c.l.s4 1983009808
  %v175 = vunpack.c.0.s8 %v174
  %v176 = vlaneseq
  %v177 = vshrl.u32 %v176, 7
  %v178 = vsub.s32 %v175, %v177
  %v179 = vrot.slane %v165, %v178
  %v180 = vcombine.low %v172, %v179
  %v183 = vadd.f32 %v111, %v163
  %v184 = vadd.f32 %v112, %v180
  %v185 = vmax.f32 %v183, 0.0
  %v186 = vmax.f32 %v184, 0.0
  %v187 = vld [vmem:[%s1] sm:$0xff]
  %v188 = vld [vmem:[%s1 + $0x8] sm:$0xff]
  %v189 = vmul.f32 %v187, %v91
  %v190 = vmul.f32 %v188, %v108
  %v191 = vadd.f32 %v189, %v163
  %v192 = vadd.f32 %v190, %v180
  %v193 = vmax.f32 %v191, 0.0
  %v194 = vmax.f32 %v192, 0.0
  %v195 = vmax.f32 %v185, %v193
  %v196 = vmax.f32 %v186, %v194
  %v199 = vcombine.high %v195, %v195
  %v201 = vunpack.c.l.s4 1983009808
  %v202 = vunpack.c.0.s8 %v201
  %v203 = vlaneseq
  %v204 = vshrl.u32 %v203, 7
  %v205 = vsub.s32 %v202, %v204
  %v206 = vrot.slane %v195, %v205
  %v208 = vunpack.c.l.s4 1983009808
  %v209 = vunpack.c.0.s8 %v208
  %v210 = vlaneseq
  %v211 = vshrl.u32 %v210, 7
  %v212 = vsub.s32 %v209, %v211
  %v213 = vrot.slane %v199, %v212
  %v214 = vcombine.high %v206, %v206
  %v215 = vcombine.high %v213, %v213
  %v216 = vcombine.high %v196, %v196
  %v218 = vunpack.c.l.s4 1983009808
  %v219 = vunpack.c.0.s8 %v218
  %v220 = vlaneseq
  %v221 = vshrl.u32 %v220, 7
  %v222 = vsub.s32 %v219, %v221
  %v223 = vrot.slane %v196, %v222
  %v225 = vunpack.c.l.s4 1983009808
  %v226 = vunpack.c.0.s8 %v225
  %v227 = vlaneseq
  %v228 = vshrl.u32 %v227, 7
  %v229 = vsub.s32 %v226, %v228
  %v230 = vrot.slane %v216, %v229
  %v231 = vcombine.high %v223, %v223
  %v232 = vcombine.high %v230, %v230
  %v241 = vpack.c.bf16 %v206, %v206
  %v242 = vpack.c.bf16 %v214, %v214
  %v243 = vpack.c.bf16 %v213, %v213
  %v244 = vpack.c.bf16 %v215, %v215
  %v245 = vpack.c.bf16 %v223, %v223
  %v246 = vpack.c.bf16 %v231, %v231
  %v247 = vpack.c.bf16 %v230, %v230
  %v248 = vpack.c.bf16 %v232, %v232
  %v249 = vld [vmem:[%s4] sm:$0xff]
  %v250 = vld [vmem:[%s4 + $0x8] sm:$0xff]
  %v251 = vld [vmem:[%s4 + $0x10] sm:$0xff]
  %v252 = vld [vmem:[%s4 + $0x18] sm:$0xff]
  %v253 = vld [vmem:[%s4 + $0x20] sm:$0xff]
  %v254 = vld [vmem:[%s4 + $0x28] sm:$0xff]
  %v255 = vld [vmem:[%s4 + $0x30] sm:$0xff]
  %v256 = vld [vmem:[%s4 + $0x38] sm:$0xff]
  %v257 = vld [vmem:[%s4 + $0x40] sm:$0xff]
  %v258 = vld [vmem:[%s4 + $0x48] sm:$0xff]
  %v259 = vld [vmem:[%s4 + $0x50] sm:$0xff]
  %v260 = vld [vmem:[%s4 + $0x58] sm:$0xff]
  %v261 = vld [vmem:[%s4 + $0x60] sm:$0xff]
  %v262 = vld [vmem:[%s4 + $0x68] sm:$0xff]
  %v263 = vld [vmem:[%s4 + $0x70] sm:$0xff]
  %v264 = vld [vmem:[%s4 + $0x78] sm:$0xff]
  %v265 = vld [vmem:[%s4 + $0x80] sm:$0xff]
  %v266 = vld [vmem:[%s4 + $0x88] sm:$0xff]
  %v267 = vld [vmem:[%s4 + $0x90] sm:$0xff]
  %v268 = vld [vmem:[%s4 + $0x98] sm:$0xff]
  %v269 = vld [vmem:[%s4 + $0xa0] sm:$0xff]
  %v270 = vld [vmem:[%s4 + $0xa8] sm:$0xff]
  %v271 = vld [vmem:[%s4 + $0xb0] sm:$0xff]
  %v272 = vld [vmem:[%s4 + $0xb8] sm:$0xff]
  %v273 = vld [vmem:[%s4 + $0xc0] sm:$0xff]
  %v274 = vld [vmem:[%s4 + $0xc8] sm:$0xff]
  %v275 = vld [vmem:[%s4 + $0xd0] sm:$0xff]
  %v276 = vld [vmem:[%s4 + $0xd8] sm:$0xff]
  %v277 = vld [vmem:[%s4 + $0xe0] sm:$0xff]
  %v278 = vld [vmem:[%s4 + $0xe8] sm:$0xff]
  %v279 = vld [vmem:[%s4 + $0xf0] sm:$0xff]
  %v280 = vld [vmem:[%s4 + $0xf8] sm:$0xff]
  %v281 = vld [vmem:[%s4 + $0x100] sm:$0xff]
  %v282 = vld [vmem:[%s4 + $0x108] sm:$0xff]
  %v283 = vld [vmem:[%s4 + $0x110] sm:$0xff]
  %v284 = vld [vmem:[%s4 + $0x118] sm:$0xff]
  %v285 = vld [vmem:[%s4 + $0x120] sm:$0xff]
  %v286 = vld [vmem:[%s4 + $0x128] sm:$0xff]
  %v287 = vld [vmem:[%s4 + $0x130] sm:$0xff]
  %v288 = vld [vmem:[%s4 + $0x138] sm:$0xff]
  %v289 = vld [vmem:[%s4 + $0x140] sm:$0xff]
  %v290 = vld [vmem:[%s4 + $0x148] sm:$0xff]
  %v291 = vld [vmem:[%s4 + $0x150] sm:$0xff]
  %v292 = vld [vmem:[%s4 + $0x158] sm:$0xff]
  %v293 = vld [vmem:[%s4 + $0x160] sm:$0xff]
  %v294 = vld [vmem:[%s4 + $0x168] sm:$0xff]
  %v295 = vld [vmem:[%s4 + $0x170] sm:$0xff]
  %v296 = vld [vmem:[%s4 + $0x178] sm:$0xff]
  %v297 = vld [vmem:[%s4 + $0x180] sm:$0xff]
  %v298 = vld [vmem:[%s4 + $0x188] sm:$0xff]
  %v299 = vld [vmem:[%s4 + $0x190] sm:$0xff]
  %v300 = vld [vmem:[%s4 + $0x198] sm:$0xff]
  %v301 = vld [vmem:[%s4 + $0x1a0] sm:$0xff]
  %v302 = vld [vmem:[%s4 + $0x1a8] sm:$0xff]
  %v303 = vld [vmem:[%s4 + $0x1b0] sm:$0xff]
  %v304 = vld [vmem:[%s4 + $0x1b8] sm:$0xff]
  %v305 = vld [vmem:[%s4 + $0x1c0] sm:$0xff]
  %v306 = vld [vmem:[%s4 + $0x1c8] sm:$0xff]
  %v307 = vld [vmem:[%s4 + $0x1d0] sm:$0xff]
  %v308 = vld [vmem:[%s4 + $0x1d8] sm:$0xff]
  %v309 = vld [vmem:[%s4 + $0x1e0] sm:$0xff]
  %v310 = vld [vmem:[%s4 + $0x1e8] sm:$0xff]
  %v311 = vld [vmem:[%s4 + $0x1f0] sm:$0xff]
  %v312 = vld [vmem:[%s4 + $0x1f8] sm:$0xff]
  %v313 = vld [vmem:[%s4 + $0x200] sm:$0xff]
  %v314 = vld [vmem:[%s4 + $0x208] sm:$0xff]
  %v315 = vld [vmem:[%s4 + $0x210] sm:$0xff]
  %v316 = vld [vmem:[%s4 + $0x218] sm:$0xff]
  %v317 = vld [vmem:[%s4 + $0x220] sm:$0xff]
  %v318 = vld [vmem:[%s4 + $0x228] sm:$0xff]
  %v319 = vld [vmem:[%s4 + $0x230] sm:$0xff]
  %v320 = vld [vmem:[%s4 + $0x238] sm:$0xff]
  %v321 = vld [vmem:[%s4 + $0x240] sm:$0xff]
  %v322 = vld [vmem:[%s4 + $0x248] sm:$0xff]
  %v323 = vld [vmem:[%s4 + $0x250] sm:$0xff]
  %v324 = vld [vmem:[%s4 + $0x258] sm:$0xff]
  %v325 = vld [vmem:[%s4 + $0x260] sm:$0xff]
  %v326 = vld [vmem:[%s4 + $0x268] sm:$0xff]
  %v327 = vld [vmem:[%s4 + $0x270] sm:$0xff]
  %v328 = vld [vmem:[%s4 + $0x278] sm:$0xff]
  %v329 = vld [vmem:[%s4 + $0x280] sm:$0xff]
  %v330 = vld [vmem:[%s4 + $0x288] sm:$0xff]
  %v331 = vld [vmem:[%s4 + $0x290] sm:$0xff]
  %v332 = vld [vmem:[%s4 + $0x298] sm:$0xff]
  %v333 = vld [vmem:[%s4 + $0x2a0] sm:$0xff]
  %v334 = vld [vmem:[%s4 + $0x2a8] sm:$0xff]
  %v335 = vld [vmem:[%s4 + $0x2b0] sm:$0xff]
  %v336 = vld [vmem:[%s4 + $0x2b8] sm:$0xff]
  %v337 = vld [vmem:[%s4 + $0x2c0] sm:$0xff]
  %v338 = vld [vmem:[%s4 + $0x2c8] sm:$0xff]
  %v339 = vld [vmem:[%s4 + $0x2d0] sm:$0xff]
  %v340 = vld [vmem:[%s4 + $0x2d8] sm:$0xff]
  %v341 = vld [vmem:[%s4 + $0x2e0] sm:$0xff]
  %v342 = vld [vmem:[%s4 + $0x2e8] sm:$0xff]
  %v343 = vld [vmem:[%s4 + $0x2f0] sm:$0xff]
  %v344 = vld [vmem:[%s4 + $0x2f8] sm:$0xff]
  %v345 = vld [vmem:[%s4 + $0x300] sm:$0xff]
  %v346 = vld [vmem:[%s4 + $0x308] sm:$0xff]
  %v347 = vld [vmem:[%s4 + $0x310] sm:$0xff]
  %v348 = vld [vmem:[%s4 + $0x318] sm:$0xff]
  %v349 = vld [vmem:[%s4 + $0x320] sm:$0xff]
  %v350 = vld [vmem:[%s4 + $0x328] sm:$0xff]
  %v351 = vld [vmem:[%s4 + $0x330] sm:$0xff]
  %v352 = vld [vmem:[%s4 + $0x338] sm:$0xff]
  %v353 = vld [vmem:[%s4 + $0x340] sm:$0xff]
  %v354 = vld [vmem:[%s4 + $0x348] sm:$0xff]
  %v355 = vld [vmem:[%s4 + $0x350] sm:$0xff]
  %v356 = vld [vmem:[%s4 + $0x358] sm:$0xff]
  %v357 = vld [vmem:[%s4 + $0x360] sm:$0xff]
  %v358 = vld [vmem:[%s4 + $0x368] sm:$0xff]
  %v359 = vld [vmem:[%s4 + $0x370] sm:$0xff]
  %v360 = vld [vmem:[%s4 + $0x378] sm:$0xff]
  %v361 = vld [vmem:[%s4 + $0x380] sm:$0xff]
  %v362 = vld [vmem:[%s4 + $0x388] sm:$0xff]
  %v363 = vld [vmem:[%s4 + $0x390] sm:$0xff]
  %v364 = vld [vmem:[%s4 + $0x398] sm:$0xff]
  %v365 = vld [vmem:[%s4 + $0x3a0] sm:$0xff]
  %v366 = vld [vmem:[%s4 + $0x3a8] sm:$0xff]
  %v367 = vld [vmem:[%s4 + $0x3b0] sm:$0xff]
  %v368 = vld [vmem:[%s4 + $0x3b8] sm:$0xff]
  %v369 = vld [vmem:[%s4 + $0x3c0] sm:$0xff]
  %v370 = vld [vmem:[%s4 + $0x3c8] sm:$0xff]
  %v371 = vld [vmem:[%s4 + $0x3d0] sm:$0xff]
  %v372 = vld [vmem:[%s4 + $0x3d8] sm:$0xff]
  %v373 = vld [vmem:[%s4 + $0x3e0] sm:$0xff]
  %v374 = vld [vmem:[%s4 + $0x3e8] sm:$0xff]
  %v375 = vld [vmem:[%s4 + $0x3f0] sm:$0xff]
  %v376 = vld [vmem:[%s4 + $0x3f8] sm:$0xff]
  %v377 = vld [vmem:[%s4 + $0x400] sm:$0xff]
  %v378 = vld [vmem:[%s4 + $0x408] sm:$0xff]
  %v379 = vld [vmem:[%s4 + $0x410] sm:$0xff]
  %v380 = vld [vmem:[%s4 + $0x418] sm:$0xff]
  %v381 = vld [vmem:[%s4 + $0x420] sm:$0xff]
  %v382 = vld [vmem:[%s4 + $0x428] sm:$0xff]
  %v383 = vld [vmem:[%s4 + $0x430] sm:$0xff]
  %v384 = vld [vmem:[%s4 + $0x438] sm:$0xff]
  %v385 = vld [vmem:[%s4 + $0x440] sm:$0xff]
  %v386 = vld [vmem:[%s4 + $0x448] sm:$0xff]
  %v387 = vld [vmem:[%s4 + $0x450] sm:$0xff]
  %v388 = vld [vmem:[%s4 + $0x458] sm:$0xff]
  %v389 = vld [vmem:[%s4 + $0x460] sm:$0xff]
  %v390 = vld [vmem:[%s4 + $0x468] sm:$0xff]
  %v391 = vld [vmem:[%s4 + $0x470] sm:$0xff]
  %v392 = vld [vmem:[%s4 + $0x478] sm:$0xff]
  %v393 = vld [vmem:[%s4 + $0x480] sm:$0xff]
  %v394 = vld [vmem:[%s4 + $0x488] sm:$0xff]
  %v395 = vld [vmem:[%s4 + $0x490] sm:$0xff]
  %v396 = vld [vmem:[%s4 + $0x498] sm:$0xff]
  %v397 = vld [vmem:[%s4 + $0x4a0] sm:$0xff]
  %v398 = vld [vmem:[%s4 + $0x4a8] sm:$0xff]
  %v399 = vld [vmem:[%s4 + $0x4b0] sm:$0xff]
  %v400 = vld [vmem:[%s4 + $0x4b8] sm:$0xff]
  %v401 = vld [vmem:[%s4 + $0x4c0] sm:$0xff]
  %v402 = vld [vmem:[%s4 + $0x4c8] sm:$0xff]
  %v403 = vld [vmem:[%s4 + $0x4d0] sm:$0xff]
  %v404 = vld [vmem:[%s4 + $0x4d8] sm:$0xff]
  %v405 = vld [vmem:[%s4 + $0x4e0] sm:$0xff]
  %v406 = vld [vmem:[%s4 + $0x4e8] sm:$0xff]
  %v407 = vld [vmem:[%s4 + $0x4f0] sm:$0xff]
  %v408 = vld [vmem:[%s4 + $0x4f8] sm:$0xff]
  %v409 = vld [vmem:[%s4 + $0x500] sm:$0xff]
  %v410 = vld [vmem:[%s4 + $0x508] sm:$0xff]
  %v411 = vld [vmem:[%s4 + $0x510] sm:$0xff]
  %v412 = vld [vmem:[%s4 + $0x518] sm:$0xff]
  %v413 = vld [vmem:[%s4 + $0x520] sm:$0xff]
  %v414 = vld [vmem:[%s4 + $0x528] sm:$0xff]
  %v415 = vld [vmem:[%s4 + $0x530] sm:$0xff]
  %v416 = vld [vmem:[%s4 + $0x538] sm:$0xff]
  %v417 = vld [vmem:[%s4 + $0x540] sm:$0xff]
  %v418 = vld [vmem:[%s4 + $0x548] sm:$0xff]
  %v419 = vld [vmem:[%s4 + $0x550] sm:$0xff]
  %v420 = vld [vmem:[%s4 + $0x558] sm:$0xff]
  %v421 = vld [vmem:[%s4 + $0x560] sm:$0xff]
  %v422 = vld [vmem:[%s4 + $0x568] sm:$0xff]
  %v423 = vld [vmem:[%s4 + $0x570] sm:$0xff]
  %v424 = vld [vmem:[%s4 + $0x578] sm:$0xff]
  %v425 = vld [vmem:[%s4 + $0x580] sm:$0xff]
  %v426 = vld [vmem:[%s4 + $0x588] sm:$0xff]
  %v427 = vld [vmem:[%s4 + $0x590] sm:$0xff]
  %v428 = vld [vmem:[%s4 + $0x598] sm:$0xff]
  %v429 = vld [vmem:[%s4 + $0x5a0] sm:$0xff]
  %v430 = vld [vmem:[%s4 + $0x5a8] sm:$0xff]
  %v431 = vld [vmem:[%s4 + $0x5b0] sm:$0xff]
  %v432 = vld [vmem:[%s4 + $0x5b8] sm:$0xff]
  %v433 = vld [vmem:[%s4 + $0x5c0] sm:$0xff]
  %v434 = vld [vmem:[%s4 + $0x5c8] sm:$0xff]
  %v435 = vld [vmem:[%s4 + $0x5d0] sm:$0xff]
  %v436 = vld [vmem:[%s4 + $0x5d8] sm:$0xff]
  %v437 = vld [vmem:[%s4 + $0x5e0] sm:$0xff]
  %v438 = vld [vmem:[%s4 + $0x5e8] sm:$0xff]
  %v439 = vld [vmem:[%s4 + $0x5f0] sm:$0xff]
  %v440 = vld [vmem:[%s4 + $0x5f8] sm:$0xff]
  %v441 = vld [vmem:[%s4 + $0x600] sm:$0xff]
  %v442 = vld [vmem:[%s4 + $0x608] sm:$0xff]
  %v443 = vld [vmem:[%s4 + $0x610] sm:$0xff]
  %v444 = vld [vmem:[%s4 + $0x618] sm:$0xff]
  %v445 = vld [vmem:[%s4 + $0x620] sm:$0xff]
  %v446 = vld [vmem:[%s4 + $0x628] sm:$0xff]
  %v447 = vld [vmem:[%s4 + $0x630] sm:$0xff]
  %v448 = vld [vmem:[%s4 + $0x638] sm:$0xff]
  %v449 = vld [vmem:[%s4 + $0x640] sm:$0xff]
  %v450 = vld [vmem:[%s4 + $0x648] sm:$0xff]
  %v451 = vld [vmem:[%s4 + $0x650] sm:$0xff]
  %v452 = vld [vmem:[%s4 + $0x658] sm:$0xff]
  %v453 = vld [vmem:[%s4 + $0x660] sm:$0xff]
  %v454 = vld [vmem:[%s4 + $0x668] sm:$0xff]
  %v455 = vld [vmem:[%s4 + $0x670] sm:$0xff]
  %v456 = vld [vmem:[%s4 + $0x678] sm:$0xff]
  %v457 = vld [vmem:[%s4 + $0x680] sm:$0xff]
  %v458 = vld [vmem:[%s4 + $0x688] sm:$0xff]
  %v459 = vld [vmem:[%s4 + $0x690] sm:$0xff]
  %v460 = vld [vmem:[%s4 + $0x698] sm:$0xff]
  %v461 = vld [vmem:[%s4 + $0x6a0] sm:$0xff]
  %v462 = vld [vmem:[%s4 + $0x6a8] sm:$0xff]
  %v463 = vld [vmem:[%s4 + $0x6b0] sm:$0xff]
  %v464 = vld [vmem:[%s4 + $0x6b8] sm:$0xff]
  %v465 = vld [vmem:[%s4 + $0x6c0] sm:$0xff]
  %v466 = vld [vmem:[%s4 + $0x6c8] sm:$0xff]
  %v467 = vld [vmem:[%s4 + $0x6d0] sm:$0xff]
  %v468 = vld [vmem:[%s4 + $0x6d8] sm:$0xff]
  %v469 = vld [vmem:[%s4 + $0x6e0] sm:$0xff]
  %v470 = vld [vmem:[%s4 + $0x6e8] sm:$0xff]
  %v471 = vld [vmem:[%s4 + $0x6f0] sm:$0xff]
  %v472 = vld [vmem:[%s4 + $0x6f8] sm:$0xff]
  %v473 = vld [vmem:[%s4 + $0x700] sm:$0xff]
  %v474 = vld [vmem:[%s4 + $0x708] sm:$0xff]
  %v475 = vld [vmem:[%s4 + $0x710] sm:$0xff]
  %v476 = vld [vmem:[%s4 + $0x718] sm:$0xff]
  %v477 = vld [vmem:[%s4 + $0x720] sm:$0xff]
  %v478 = vld [vmem:[%s4 + $0x728] sm:$0xff]
  %v479 = vld [vmem:[%s4 + $0x730] sm:$0xff]
  %v480 = vld [vmem:[%s4 + $0x738] sm:$0xff]
  %v481 = vld [vmem:[%s4 + $0x740] sm:$0xff]
  %v482 = vld [vmem:[%s4 + $0x748] sm:$0xff]
  %v483 = vld [vmem:[%s4 + $0x750] sm:$0xff]
  %v484 = vld [vmem:[%s4 + $0x758] sm:$0xff]
  %v485 = vld [vmem:[%s4 + $0x760] sm:$0xff]
  %v486 = vld [vmem:[%s4 + $0x768] sm:$0xff]
  %v487 = vld [vmem:[%s4 + $0x770] sm:$0xff]
  %v488 = vld [vmem:[%s4 + $0x778] sm:$0xff]
  %v489 = vld [vmem:[%s4 + $0x780] sm:$0xff]
  %v490 = vld [vmem:[%s4 + $0x788] sm:$0xff]
  %v491 = vld [vmem:[%s4 + $0x790] sm:$0xff]
  %v492 = vld [vmem:[%s4 + $0x798] sm:$0xff]
  %v493 = vld [vmem:[%s4 + $0x7a0] sm:$0xff]
  %v494 = vld [vmem:[%s4 + $0x7a8] sm:$0xff]
  %v495 = vld [vmem:[%s4 + $0x7b0] sm:$0xff]
  %v496 = vld [vmem:[%s4 + $0x7b8] sm:$0xff]
  %v497 = vld [vmem:[%s4 + $0x7c0] sm:$0xff]
  %v498 = vld [vmem:[%s4 + $0x7c8] sm:$0xff]
  %v499 = vld [vmem:[%s4 + $0x7d0] sm:$0xff]
  %v500 = vld [vmem:[%s4 + $0x7d8] sm:$0xff]
  %v501 = vld [vmem:[%s4 + $0x7e0] sm:$0xff]
  %v502 = vld [vmem:[%s4 + $0x7e8] sm:$0xff]
  %v503 = vld [vmem:[%s4 + $0x7f0] sm:$0xff]
  %v504 = vld [vmem:[%s4 + $0x7f8] sm:$0xff]
  %v505 = vld [vmem:[%s5] sm:$0xf]
  %v507 = vlaneseq
  %v508 = vshrl.u32 %v507, 7
  %v509 = vsub.s32 0, %v508
  %v510 = vrot.slane %v505, %v509
  %v511 = vlaneseq
  %v512 = vshrl.u32 %v511, 7
  %v513 = vsub.s32 1, %v512
  %v514 = vrot.slane %v505, %v513
  %v515 = vlaneseq
  %v516 = vshrl.u32 %v515, 7
  %v517 = vsub.s32 2, %v516
  %v518 = vrot.slane %v505, %v517
  %v519 = vlaneseq
  %v520 = vshrl.u32 %v519, 7
  %v521 = vsub.s32 3, %v520
  %v522 = vrot.slane %v505, %v521
  %v783 = vunpack.c.l.b16 %v249
  %v784 = vunpack.c.h.b16 %v249
  %v785 = vunpack.c.l.b16 %v250
  %v786 = vunpack.c.h.b16 %v250
  %v787 = vunpack.c.l.b16 %v251
  %v788 = vunpack.c.h.b16 %v251
  %v789 = vunpack.c.l.b16 %v252
  %v790 = vunpack.c.h.b16 %v252
  %v791 = vunpack.c.l.b16 %v253
  %v792 = vunpack.c.h.b16 %v253
  %v793 = vunpack.c.l.b16 %v254
  %v794 = vunpack.c.h.b16 %v254
  %v795 = vunpack.c.l.b16 %v255
  %v796 = vunpack.c.h.b16 %v255
  %v797 = vunpack.c.l.b16 %v256
  %v798 = vunpack.c.h.b16 %v256
  %v799 = vunpack.c.l.b16 %v257
  %v800 = vunpack.c.h.b16 %v257
  %v801 = vunpack.c.l.b16 %v258
  %v802 = vunpack.c.h.b16 %v258
  %v803 = vunpack.c.l.b16 %v259
  %v804 = vunpack.c.h.b16 %v259
  %v805 = vunpack.c.l.b16 %v260
  %v806 = vunpack.c.h.b16 %v260
  %v807 = vunpack.c.l.b16 %v261
  %v808 = vunpack.c.h.b16 %v261
  %v809 = vunpack.c.l.b16 %v262
  %v810 = vunpack.c.h.b16 %v262
  %v811 = vunpack.c.l.b16 %v263
  %v812 = vunpack.c.h.b16 %v263
  %v813 = vunpack.c.l.b16 %v264
  %v814 = vunpack.c.h.b16 %v264
  %v815 = vunpack.c.l.b16 %v265
  %v816 = vunpack.c.h.b16 %v265
  %v817 = vunpack.c.l.b16 %v266
  %v818 = vunpack.c.h.b16 %v266
  %v819 = vunpack.c.l.b16 %v267
  %v820 = vunpack.c.h.b16 %v267
  %v821 = vunpack.c.l.b16 %v268
  %v822 = vunpack.c.h.b16 %v268
  %v823 = vunpack.c.l.b16 %v269
  %v824 = vunpack.c.h.b16 %v269
  %v825 = vunpack.c.l.b16 %v270
  %v826 = vunpack.c.h.b16 %v270
  %v827 = vunpack.c.l.b16 %v271
  %v828 = vunpack.c.h.b16 %v271
  %v829 = vunpack.c.l.b16 %v272
  %v830 = vunpack.c.h.b16 %v272
  %v831 = vunpack.c.l.b16 %v273
  %v832 = vunpack.c.h.b16 %v273
  %v833 = vunpack.c.l.b16 %v274
  %v834 = vunpack.c.h.b16 %v274
  %v835 = vunpack.c.l.b16 %v275
  %v836 = vunpack.c.h.b16 %v275
  %v837 = vunpack.c.l.b16 %v276
  %v838 = vunpack.c.h.b16 %v276
  %v839 = vunpack.c.l.b16 %v277
  %v840 = vunpack.c.h.b16 %v277
  %v841 = vunpack.c.l.b16 %v278
  %v842 = vunpack.c.h.b16 %v278
  %v843 = vunpack.c.l.b16 %v279
  %v844 = vunpack.c.h.b16 %v279
  %v845 = vunpack.c.l.b16 %v280
  %v846 = vunpack.c.h.b16 %v280
  %v847 = vunpack.c.l.b16 %v281
  %v848 = vunpack.c.h.b16 %v281
  %v849 = vunpack.c.l.b16 %v282
  %v850 = vunpack.c.h.b16 %v282
  %v851 = vunpack.c.l.b16 %v283
  %v852 = vunpack.c.h.b16 %v283
  %v853 = vunpack.c.l.b16 %v284
  %v854 = vunpack.c.h.b16 %v284
  %v855 = vunpack.c.l.b16 %v285
  %v856 = vunpack.c.h.b16 %v285
  %v857 = vunpack.c.l.b16 %v286
  %v858 = vunpack.c.h.b16 %v286
  %v859 = vunpack.c.l.b16 %v287
  %v860 = vunpack.c.h.b16 %v287
  %v861 = vunpack.c.l.b16 %v288
  %v862 = vunpack.c.h.b16 %v288
  %v863 = vunpack.c.l.b16 %v289
  %v864 = vunpack.c.h.b16 %v289
  %v865 = vunpack.c.l.b16 %v290
  %v866 = vunpack.c.h.b16 %v290
  %v867 = vunpack.c.l.b16 %v291
  %v868 = vunpack.c.h.b16 %v291
  %v869 = vunpack.c.l.b16 %v292
  %v870 = vunpack.c.h.b16 %v292
  %v871 = vunpack.c.l.b16 %v293
  %v872 = vunpack.c.h.b16 %v293
  %v873 = vunpack.c.l.b16 %v294
  %v874 = vunpack.c.h.b16 %v294
  %v875 = vunpack.c.l.b16 %v295
  %v876 = vunpack.c.h.b16 %v295
  %v877 = vunpack.c.l.b16 %v296
  %v878 = vunpack.c.h.b16 %v296
  %v879 = vunpack.c.l.b16 %v297
  %v880 = vunpack.c.h.b16 %v297
  %v881 = vunpack.c.l.b16 %v298
  %v882 = vunpack.c.h.b16 %v298
  %v883 = vunpack.c.l.b16 %v299
  %v884 = vunpack.c.h.b16 %v299
  %v885 = vunpack.c.l.b16 %v300
  %v886 = vunpack.c.h.b16 %v300
  %v887 = vunpack.c.l.b16 %v301
  %v888 = vunpack.c.h.b16 %v301
  %v889 = vunpack.c.l.b16 %v302
  %v890 = vunpack.c.h.b16 %v302
  %v891 = vunpack.c.l.b16 %v303
  %v892 = vunpack.c.h.b16 %v303
  %v893 = vunpack.c.l.b16 %v304
  %v894 = vunpack.c.h.b16 %v304
  %v895 = vunpack.c.l.b16 %v305
  %v896 = vunpack.c.h.b16 %v305
  %v897 = vunpack.c.l.b16 %v306
  %v898 = vunpack.c.h.b16 %v306
  %v899 = vunpack.c.l.b16 %v307
  %v900 = vunpack.c.h.b16 %v307
  %v901 = vunpack.c.l.b16 %v308
  %v902 = vunpack.c.h.b16 %v308
  %v903 = vunpack.c.l.b16 %v309
  %v904 = vunpack.c.h.b16 %v309
  %v905 = vunpack.c.l.b16 %v310
  %v906 = vunpack.c.h.b16 %v310
  %v907 = vunpack.c.l.b16 %v311
  %v908 = vunpack.c.h.b16 %v311
  %v909 = vunpack.c.l.b16 %v312
  %v910 = vunpack.c.h.b16 %v312
  %v911 = vunpack.c.l.b16 %v313
  %v912 = vunpack.c.h.b16 %v313
  %v913 = vunpack.c.l.b16 %v314
  %v914 = vunpack.c.h.b16 %v314
  %v915 = vunpack.c.l.b16 %v315
  %v916 = vunpack.c.h.b16 %v315
  %v917 = vunpack.c.l.b16 %v316
  %v918 = vunpack.c.h.b16 %v316
  %v919 = vunpack.c.l.b16 %v317
  %v920 = vunpack.c.h.b16 %v317
  %v921 = vunpack.c.l.b16 %v318
  %v922 = vunpack.c.h.b16 %v318
  %v923 = vunpack.c.l.b16 %v319
  %v924 = vunpack.c.h.b16 %v319
  %v925 = vunpack.c.l.b16 %v320
  %v926 = vunpack.c.h.b16 %v320
  %v927 = vunpack.c.l.b16 %v321
  %v928 = vunpack.c.h.b16 %v321
  %v929 = vunpack.c.l.b16 %v322
  %v930 = vunpack.c.h.b16 %v322
  %v931 = vunpack.c.l.b16 %v323
  %v932 = vunpack.c.h.b16 %v323
  %v933 = vunpack.c.l.b16 %v324
  %v934 = vunpack.c.h.b16 %v324
  %v935 = vunpack.c.l.b16 %v325
  %v936 = vunpack.c.h.b16 %v325
  %v937 = vunpack.c.l.b16 %v326
  %v938 = vunpack.c.h.b16 %v326
  %v939 = vunpack.c.l.b16 %v327
  %v940 = vunpack.c.h.b16 %v327
  %v941 = vunpack.c.l.b16 %v328
  %v942 = vunpack.c.h.b16 %v328
  %v943 = vunpack.c.l.b16 %v329
  %v944 = vunpack.c.h.b16 %v329
  %v945 = vunpack.c.l.b16 %v330
  %v946 = vunpack.c.h.b16 %v330
  %v947 = vunpack.c.l.b16 %v331
  %v948 = vunpack.c.h.b16 %v331
  %v949 = vunpack.c.l.b16 %v332
  %v950 = vunpack.c.h.b16 %v332
  %v951 = vunpack.c.l.b16 %v333
  %v952 = vunpack.c.h.b16 %v333
  %v953 = vunpack.c.l.b16 %v334
  %v954 = vunpack.c.h.b16 %v334
  %v955 = vunpack.c.l.b16 %v335
  %v956 = vunpack.c.h.b16 %v335
  %v957 = vunpack.c.l.b16 %v336
  %v958 = vunpack.c.h.b16 %v336
  %v959 = vunpack.c.l.b16 %v337
  %v960 = vunpack.c.h.b16 %v337
  %v961 = vunpack.c.l.b16 %v338
  %v962 = vunpack.c.h.b16 %v338
  %v963 = vunpack.c.l.b16 %v339
  %v964 = vunpack.c.h.b16 %v339
  %v965 = vunpack.c.l.b16 %v340
  %v966 = vunpack.c.h.b16 %v340
  %v967 = vunpack.c.l.b16 %v341
  %v968 = vunpack.c.h.b16 %v341
  %v969 = vunpack.c.l.b16 %v342
  %v970 = vunpack.c.h.b16 %v342
  %v971 = vunpack.c.l.b16 %v343
  %v972 = vunpack.c.h.b16 %v343
  %v973 = vunpack.c.l.b16 %v344
  %v974 = vunpack.c.h.b16 %v344
  %v975 = vunpack.c.l.b16 %v345
  %v976 = vunpack.c.h.b16 %v345
  %v977 = vunpack.c.l.b16 %v346
  %v978 = vunpack.c.h.b16 %v346
  %v979 = vunpack.c.l.b16 %v347
  %v980 = vunpack.c.h.b16 %v347
  %v981 = vunpack.c.l.b16 %v348
  %v982 = vunpack.c.h.b16 %v348
  %v983 = vunpack.c.l.b16 %v349
  %v984 = vunpack.c.h.b16 %v349
  %v985 = vunpack.c.l.b16 %v350
  %v986 = vunpack.c.h.b16 %v350
  %v987 = vunpack.c.l.b16 %v351
  %v988 = vunpack.c.h.b16 %v351
  %v989 = vunpack.c.l.b16 %v352
  %v990 = vunpack.c.h.b16 %v352
  %v991 = vunpack.c.l.b16 %v353
  %v992 = vunpack.c.h.b16 %v353
  %v993 = vunpack.c.l.b16 %v354
  %v994 = vunpack.c.h.b16 %v354
  %v995 = vunpack.c.l.b16 %v355
  %v996 = vunpack.c.h.b16 %v355
  %v997 = vunpack.c.l.b16 %v356
  %v998 = vunpack.c.h.b16 %v356
  %v999 = vunpack.c.l.b16 %v357
  %v1000 = vunpack.c.h.b16 %v357
  %v1001 = vunpack.c.l.b16 %v358
  %v1002 = vunpack.c.h.b16 %v358
  %v1003 = vunpack.c.l.b16 %v359
  %v1004 = vunpack.c.h.b16 %v359
  %v1005 = vunpack.c.l.b16 %v360
  %v1006 = vunpack.c.h.b16 %v360
  %v1007 = vunpack.c.l.b16 %v361
  %v1008 = vunpack.c.h.b16 %v361
  %v1009 = vunpack.c.l.b16 %v362
  %v1010 = vunpack.c.h.b16 %v362
  %v1011 = vunpack.c.l.b16 %v363
  %v1012 = vunpack.c.h.b16 %v363
  %v1013 = vunpack.c.l.b16 %v364
  %v1014 = vunpack.c.h.b16 %v364
  %v1015 = vunpack.c.l.b16 %v365
  %v1016 = vunpack.c.h.b16 %v365
  %v1017 = vunpack.c.l.b16 %v366
  %v1018 = vunpack.c.h.b16 %v366
  %v1019 = vunpack.c.l.b16 %v367
  %v1020 = vunpack.c.h.b16 %v367
  %v1021 = vunpack.c.l.b16 %v368
  %v1022 = vunpack.c.h.b16 %v368
  %v1023 = vunpack.c.l.b16 %v369
  %v1024 = vunpack.c.h.b16 %v369
  %v1025 = vunpack.c.l.b16 %v370
  %v1026 = vunpack.c.h.b16 %v370
  %v1027 = vunpack.c.l.b16 %v371
  %v1028 = vunpack.c.h.b16 %v371
  %v1029 = vunpack.c.l.b16 %v372
  %v1030 = vunpack.c.h.b16 %v372
  %v1031 = vunpack.c.l.b16 %v373
  %v1032 = vunpack.c.h.b16 %v373
  %v1033 = vunpack.c.l.b16 %v374
  %v1034 = vunpack.c.h.b16 %v374
  %v1035 = vunpack.c.l.b16 %v375
  %v1036 = vunpack.c.h.b16 %v375
  %v1037 = vunpack.c.l.b16 %v376
  %v1038 = vunpack.c.h.b16 %v376
  %v1039 = vunpack.c.l.b16 %v377
  %v1040 = vunpack.c.h.b16 %v377
  %v1041 = vunpack.c.l.b16 %v378
  %v1042 = vunpack.c.h.b16 %v378
  %v1043 = vunpack.c.l.b16 %v379
  %v1044 = vunpack.c.h.b16 %v379
  %v1045 = vunpack.c.l.b16 %v380
  %v1046 = vunpack.c.h.b16 %v380
  %v1047 = vunpack.c.l.b16 %v381
  %v1048 = vunpack.c.h.b16 %v381
  %v1049 = vunpack.c.l.b16 %v382
  %v1050 = vunpack.c.h.b16 %v382
  %v1051 = vunpack.c.l.b16 %v383
  %v1052 = vunpack.c.h.b16 %v383
  %v1053 = vunpack.c.l.b16 %v384
  %v1054 = vunpack.c.h.b16 %v384
  %v1055 = vunpack.c.l.b16 %v385
  %v1056 = vunpack.c.h.b16 %v385
  %v1057 = vunpack.c.l.b16 %v386
  %v1058 = vunpack.c.h.b16 %v386
  %v1059 = vunpack.c.l.b16 %v387
  %v1060 = vunpack.c.h.b16 %v387
  %v1061 = vunpack.c.l.b16 %v388
  %v1062 = vunpack.c.h.b16 %v388
  %v1063 = vunpack.c.l.b16 %v389
  %v1064 = vunpack.c.h.b16 %v389
  %v1065 = vunpack.c.l.b16 %v390
  %v1066 = vunpack.c.h.b16 %v390
  %v1067 = vunpack.c.l.b16 %v391
  %v1068 = vunpack.c.h.b16 %v391
  %v1069 = vunpack.c.l.b16 %v392
  %v1070 = vunpack.c.h.b16 %v392
  %v1071 = vunpack.c.l.b16 %v393
  %v1072 = vunpack.c.h.b16 %v393
  %v1073 = vunpack.c.l.b16 %v394
  %v1074 = vunpack.c.h.b16 %v394
  %v1075 = vunpack.c.l.b16 %v395
  %v1076 = vunpack.c.h.b16 %v395
  %v1077 = vunpack.c.l.b16 %v396
  %v1078 = vunpack.c.h.b16 %v396
  %v1079 = vunpack.c.l.b16 %v397
  %v1080 = vunpack.c.h.b16 %v397
  %v1081 = vunpack.c.l.b16 %v398
  %v1082 = vunpack.c.h.b16 %v398
  %v1083 = vunpack.c.l.b16 %v399
  %v1084 = vunpack.c.h.b16 %v399
  %v1085 = vunpack.c.l.b16 %v400
  %v1086 = vunpack.c.h.b16 %v400
  %v1087 = vunpack.c.l.b16 %v401
  %v1088 = vunpack.c.h.b16 %v401
  %v1089 = vunpack.c.l.b16 %v402
  %v1090 = vunpack.c.h.b16 %v402
  %v1091 = vunpack.c.l.b16 %v403
  %v1092 = vunpack.c.h.b16 %v403
  %v1093 = vunpack.c.l.b16 %v404
  %v1094 = vunpack.c.h.b16 %v404
  %v1095 = vunpack.c.l.b16 %v405
  %v1096 = vunpack.c.h.b16 %v405
  %v1097 = vunpack.c.l.b16 %v406
  %v1098 = vunpack.c.h.b16 %v406
  %v1099 = vunpack.c.l.b16 %v407
  %v1100 = vunpack.c.h.b16 %v407
  %v1101 = vunpack.c.l.b16 %v408
  %v1102 = vunpack.c.h.b16 %v408
  %v1103 = vunpack.c.l.b16 %v409
  %v1104 = vunpack.c.h.b16 %v409
  %v1105 = vunpack.c.l.b16 %v410
  %v1106 = vunpack.c.h.b16 %v410
  %v1107 = vunpack.c.l.b16 %v411
  %v1108 = vunpack.c.h.b16 %v411
  %v1109 = vunpack.c.l.b16 %v412
  %v1110 = vunpack.c.h.b16 %v412
  %v1111 = vunpack.c.l.b16 %v413
  %v1112 = vunpack.c.h.b16 %v413
  %v1113 = vunpack.c.l.b16 %v414
  %v1114 = vunpack.c.h.b16 %v414
  %v1115 = vunpack.c.l.b16 %v415
  %v1116 = vunpack.c.h.b16 %v415
  %v1117 = vunpack.c.l.b16 %v416
  %v1118 = vunpack.c.h.b16 %v416
  %v1119 = vunpack.c.l.b16 %v417
  %v1120 = vunpack.c.h.b16 %v417
  %v1121 = vunpack.c.l.b16 %v418
  %v1122 = vunpack.c.h.b16 %v418
  %v1123 = vunpack.c.l.b16 %v419
  %v1124 = vunpack.c.h.b16 %v419
  %v1125 = vunpack.c.l.b16 %v420
  %v1126 = vunpack.c.h.b16 %v420
  %v1127 = vunpack.c.l.b16 %v421
  %v1128 = vunpack.c.h.b16 %v421
  %v1129 = vunpack.c.l.b16 %v422
  %v1130 = vunpack.c.h.b16 %v422
  %v1131 = vunpack.c.l.b16 %v423
  %v1132 = vunpack.c.h.b16 %v423
  %v1133 = vunpack.c.l.b16 %v424
  %v1134 = vunpack.c.h.b16 %v424
  %v1135 = vunpack.c.l.b16 %v425
  %v1136 = vunpack.c.h.b16 %v425
  %v1137 = vunpack.c.l.b16 %v426
  %v1138 = vunpack.c.h.b16 %v426
  %v1139 = vunpack.c.l.b16 %v427
  %v1140 = vunpack.c.h.b16 %v427
  %v1141 = vunpack.c.l.b16 %v428
  %v1142 = vunpack.c.h.b16 %v428
  %v1143 = vunpack.c.l.b16 %v429
  %v1144 = vunpack.c.h.b16 %v429
  %v1145 = vunpack.c.l.b16 %v430
  %v1146 = vunpack.c.h.b16 %v430
  %v1147 = vunpack.c.l.b16 %v431
  %v1148 = vunpack.c.h.b16 %v431
  %v1149 = vunpack.c.l.b16 %v432
  %v1150 = vunpack.c.h.b16 %v432
  %v1151 = vunpack.c.l.b16 %v433
  %v1152 = vunpack.c.h.b16 %v433
  %v1153 = vunpack.c.l.b16 %v434
  %v1154 = vunpack.c.h.b16 %v434
  %v1155 = vunpack.c.l.b16 %v435
  %v1156 = vunpack.c.h.b16 %v435
  %v1157 = vunpack.c.l.b16 %v436
  %v1158 = vunpack.c.h.b16 %v436
  %v1159 = vunpack.c.l.b16 %v437
  %v1160 = vunpack.c.h.b16 %v437
  %v1161 = vunpack.c.l.b16 %v438
  %v1162 = vunpack.c.h.b16 %v438
  %v1163 = vunpack.c.l.b16 %v439
  %v1164 = vunpack.c.h.b16 %v439
  %v1165 = vunpack.c.l.b16 %v440
  %v1166 = vunpack.c.h.b16 %v440
  %v1167 = vunpack.c.l.b16 %v441
  %v1168 = vunpack.c.h.b16 %v441
  %v1169 = vunpack.c.l.b16 %v442
  %v1170 = vunpack.c.h.b16 %v442
  %v1171 = vunpack.c.l.b16 %v443
  %v1172 = vunpack.c.h.b16 %v443
  %v1173 = vunpack.c.l.b16 %v444
  %v1174 = vunpack.c.h.b16 %v444
  %v1175 = vunpack.c.l.b16 %v445
  %v1176 = vunpack.c.h.b16 %v445
  %v1177 = vunpack.c.l.b16 %v446
  %v1178 = vunpack.c.h.b16 %v446
  %v1179 = vunpack.c.l.b16 %v447
  %v1180 = vunpack.c.h.b16 %v447
  %v1181 = vunpack.c.l.b16 %v448
  %v1182 = vunpack.c.h.b16 %v448
  %v1183 = vunpack.c.l.b16 %v449
  %v1184 = vunpack.c.h.b16 %v449
  %v1185 = vunpack.c.l.b16 %v450
  %v1186 = vunpack.c.h.b16 %v450
  %v1187 = vunpack.c.l.b16 %v451
  %v1188 = vunpack.c.h.b16 %v451
  %v1189 = vunpack.c.l.b16 %v452
  %v1190 = vunpack.c.h.b16 %v452
  %v1191 = vunpack.c.l.b16 %v453
  %v1192 = vunpack.c.h.b16 %v453
  %v1193 = vunpack.c.l.b16 %v454
  %v1194 = vunpack.c.h.b16 %v454
  %v1195 = vunpack.c.l.b16 %v455
  %v1196 = vunpack.c.h.b16 %v455
  %v1197 = vunpack.c.l.b16 %v456
  %v1198 = vunpack.c.h.b16 %v456
  %v1199 = vunpack.c.l.b16 %v457
  %v1200 = vunpack.c.h.b16 %v457
  %v1201 = vunpack.c.l.b16 %v458
  %v1202 = vunpack.c.h.b16 %v458
  %v1203 = vunpack.c.l.b16 %v459
  %v1204 = vunpack.c.h.b16 %v459
  %v1205 = vunpack.c.l.b16 %v460
  %v1206 = vunpack.c.h.b16 %v460
  %v1207 = vunpack.c.l.b16 %v461
  %v1208 = vunpack.c.h.b16 %v461
  %v1209 = vunpack.c.l.b16 %v462
  %v1210 = vunpack.c.h.b16 %v462
  %v1211 = vunpack.c.l.b16 %v463
  %v1212 = vunpack.c.h.b16 %v463
  %v1213 = vunpack.c.l.b16 %v464
  %v1214 = vunpack.c.h.b16 %v464
  %v1215 = vunpack.c.l.b16 %v465
  %v1216 = vunpack.c.h.b16 %v465
  %v1217 = vunpack.c.l.b16 %v466
  %v1218 = vunpack.c.h.b16 %v466
  %v1219 = vunpack.c.l.b16 %v467
  %v1220 = vunpack.c.h.b16 %v467
  %v1221 = vunpack.c.l.b16 %v468
  %v1222 = vunpack.c.h.b16 %v468
  %v1223 = vunpack.c.l.b16 %v469
  %v1224 = vunpack.c.h.b16 %v469
  %v1225 = vunpack.c.l.b16 %v470
  %v1226 = vunpack.c.h.b16 %v470
  %v1227 = vunpack.c.l.b16 %v471
  %v1228 = vunpack.c.h.b16 %v471
  %v1229 = vunpack.c.l.b16 %v472
  %v1230 = vunpack.c.h.b16 %v472
  %v1231 = vunpack.c.l.b16 %v473
  %v1232 = vunpack.c.h.b16 %v473
  %v1233 = vunpack.c.l.b16 %v474
  %v1234 = vunpack.c.h.b16 %v474
  %v1235 = vunpack.c.l.b16 %v475
  %v1236 = vunpack.c.h.b16 %v475
  %v1237 = vunpack.c.l.b16 %v476
  %v1238 = vunpack.c.h.b16 %v476
  %v1239 = vunpack.c.l.b16 %v477
  %v1240 = vunpack.c.h.b16 %v477
  %v1241 = vunpack.c.l.b16 %v478
  %v1242 = vunpack.c.h.b16 %v478
  %v1243 = vunpack.c.l.b16 %v479
  %v1244 = vunpack.c.h.b16 %v479
  %v1245 = vunpack.c.l.b16 %v480
  %v1246 = vunpack.c.h.b16 %v480
  %v1247 = vunpack.c.l.b16 %v481
  %v1248 = vunpack.c.h.b16 %v481
  %v1249 = vunpack.c.l.b16 %v482
  %v1250 = vunpack.c.h.b16 %v482
  %v1251 = vunpack.c.l.b16 %v483
  %v1252 = vunpack.c.h.b16 %v483
  %v1253 = vunpack.c.l.b16 %v484
  %v1254 = vunpack.c.h.b16 %v484
  %v1255 = vunpack.c.l.b16 %v485
  %v1256 = vunpack.c.h.b16 %v485
  %v1257 = vunpack.c.l.b16 %v486
  %v1258 = vunpack.c.h.b16 %v486
  %v1259 = vunpack.c.l.b16 %v487
  %v1260 = vunpack.c.h.b16 %v487
  %v1261 = vunpack.c.l.b16 %v488
  %v1262 = vunpack.c.h.b16 %v488
  %v1263 = vunpack.c.l.b16 %v489
  %v1264 = vunpack.c.h.b16 %v489
  %v1265 = vunpack.c.l.b16 %v490
  %v1266 = vunpack.c.h.b16 %v490
  %v1267 = vunpack.c.l.b16 %v491
  %v1268 = vunpack.c.h.b16 %v491
  %v1269 = vunpack.c.l.b16 %v492
  %v1270 = vunpack.c.h.b16 %v492
  %v1271 = vunpack.c.l.b16 %v493
  %v1272 = vunpack.c.h.b16 %v493
  %v1273 = vunpack.c.l.b16 %v494
  %v1274 = vunpack.c.h.b16 %v494
  %v1275 = vunpack.c.l.b16 %v495
  %v1276 = vunpack.c.h.b16 %v495
  %v1277 = vunpack.c.l.b16 %v496
  %v1278 = vunpack.c.h.b16 %v496
  %v1279 = vunpack.c.l.b16 %v497
  %v1280 = vunpack.c.h.b16 %v497
  %v1281 = vunpack.c.l.b16 %v498
  %v1282 = vunpack.c.h.b16 %v498
  %v1283 = vunpack.c.l.b16 %v499
  %v1284 = vunpack.c.h.b16 %v499
  %v1285 = vunpack.c.l.b16 %v500
  %v1286 = vunpack.c.h.b16 %v500
  %v1287 = vunpack.c.l.b16 %v501
  %v1288 = vunpack.c.h.b16 %v501
  %v1289 = vunpack.c.l.b16 %v502
  %v1290 = vunpack.c.h.b16 %v502
  %v1291 = vunpack.c.l.b16 %v503
  %v1292 = vunpack.c.h.b16 %v503
  %v1293 = vunpack.c.l.b16 %v504
  %v1294 = vunpack.c.h.b16 %v504
  %v1295 = vpack.c.b16 %v787, %v783
  %v1296 = vpack.c.b16 %v788, %v784
  %v1297 = vpack.c.b16 %v789, %v785
  %v1298 = vpack.c.b16 %v790, %v786
  %v1299 = vpack.c.b16 %v795, %v791
  %v1300 = vpack.c.b16 %v796, %v792
  %v1301 = vpack.c.b16 %v797, %v793
  %v1302 = vpack.c.b16 %v798, %v794
  %v1303 = vpack.c.b16 %v803, %v799
  %v1304 = vpack.c.b16 %v804, %v800
  %v1305 = vpack.c.b16 %v805, %v801
  %v1306 = vpack.c.b16 %v806, %v802
  %v1307 = vpack.c.b16 %v811, %v807
  %v1308 = vpack.c.b16 %v812, %v808
  %v1309 = vpack.c.b16 %v813, %v809
  %v1310 = vpack.c.b16 %v814, %v810
  %v1311 = vpack.c.b16 %v819, %v815
  %v1312 = vpack.c.b16 %v820, %v816
  %v1313 = vpack.c.b16 %v821, %v817
  %v1314 = vpack.c.b16 %v822, %v818
  %v1315 = vpack.c.b16 %v827, %v823
  %v1316 = vpack.c.b16 %v828, %v824
  %v1317 = vpack.c.b16 %v829, %v825
  %v1318 = vpack.c.b16 %v830, %v826
  %v1319 = vpack.c.b16 %v835, %v831
  %v1320 = vpack.c.b16 %v836, %v832
  %v1321 = vpack.c.b16 %v837, %v833
  %v1322 = vpack.c.b16 %v838, %v834
  %v1323 = vpack.c.b16 %v843, %v839
  %v1324 = vpack.c.b16 %v844, %v840
  %v1325 = vpack.c.b16 %v845, %v841
  %v1326 = vpack.c.b16 %v846, %v842
  %v1327 = vpack.c.b16 %v851, %v847
  %v1328 = vpack.c.b16 %v852, %v848
  %v1329 = vpack.c.b16 %v853, %v849
  %v1330 = vpack.c.b16 %v854, %v850
  %v1331 = vpack.c.b16 %v859, %v855
  %v1332 = vpack.c.b16 %v860, %v856
  %v1333 = vpack.c.b16 %v861, %v857
  %v1334 = vpack.c.b16 %v862, %v858
  %v1335 = vpack.c.b16 %v867, %v863
  %v1336 = vpack.c.b16 %v868, %v864
  %v1337 = vpack.c.b16 %v869, %v865
  %v1338 = vpack.c.b16 %v870, %v866
  %v1339 = vpack.c.b16 %v875, %v871
  %v1340 = vpack.c.b16 %v876, %v872
  %v1341 = vpack.c.b16 %v877, %v873
  %v1342 = vpack.c.b16 %v878, %v874
  %v1343 = vpack.c.b16 %v883, %v879
  %v1344 = vpack.c.b16 %v884, %v880
  %v1345 = vpack.c.b16 %v885, %v881
  %v1346 = vpack.c.b16 %v886, %v882
  %v1347 = vpack.c.b16 %v891, %v887
  %v1348 = vpack.c.b16 %v892, %v888
  %v1349 = vpack.c.b16 %v893, %v889
  %v1350 = vpack.c.b16 %v894, %v890
  %v1351 = vpack.c.b16 %v899, %v895
  %v1352 = vpack.c.b16 %v900, %v896
  %v1353 = vpack.c.b16 %v901, %v897
  %v1354 = vpack.c.b16 %v902, %v898
  %v1355 = vpack.c.b16 %v907, %v903
  %v1356 = vpack.c.b16 %v908, %v904
  %v1357 = vpack.c.b16 %v909, %v905
  %v1358 = vpack.c.b16 %v910, %v906
  %v1359 = vpack.c.b16 %v915, %v911
  %v1360 = vpack.c.b16 %v916, %v912
  %v1361 = vpack.c.b16 %v917, %v913
  %v1362 = vpack.c.b16 %v918, %v914
  %v1363 = vpack.c.b16 %v923, %v919
  %v1364 = vpack.c.b16 %v924, %v920
  %v1365 = vpack.c.b16 %v925, %v921
  %v1366 = vpack.c.b16 %v926, %v922
  %v1367 = vpack.c.b16 %v931, %v927
  %v1368 = vpack.c.b16 %v932, %v928
  %v1369 = vpack.c.b16 %v933, %v929
  %v1370 = vpack.c.b16 %v934, %v930
  %v1371 = vpack.c.b16 %v939, %v935
  %v1372 = vpack.c.b16 %v940, %v936
  %v1373 = vpack.c.b16 %v941, %v937
  %v1374 = vpack.c.b16 %v942, %v938
  %v1375 = vpack.c.b16 %v947, %v943
  %v1376 = vpack.c.b16 %v948, %v944
  %v1377 = vpack.c.b16 %v949, %v945
  %v1378 = vpack.c.b16 %v950, %v946
  %v1379 = vpack.c.b16 %v955, %v951
  %v1380 = vpack.c.b16 %v956, %v952
  %v1381 = vpack.c.b16 %v957, %v953
  %v1382 = vpack.c.b16 %v958, %v954
  %v1383 = vpack.c.b16 %v963, %v959
  %v1384 = vpack.c.b16 %v964, %v960
  %v1385 = vpack.c.b16 %v965, %v961
  %v1386 = vpack.c.b16 %v966, %v962
  %v1387 = vpack.c.b16 %v971, %v967
  %v1388 = vpack.c.b16 %v972, %v968
  %v1389 = vpack.c.b16 %v973, %v969
  %v1390 = vpack.c.b16 %v974, %v970
  %v1391 = vpack.c.b16 %v979, %v975
  %v1392 = vpack.c.b16 %v980, %v976
  %v1393 = vpack.c.b16 %v981, %v977
  %v1394 = vpack.c.b16 %v982, %v978
  %v1395 = vpack.c.b16 %v987, %v983
  %v1396 = vpack.c.b16 %v988, %v984
  %v1397 = vpack.c.b16 %v989, %v985
  %v1398 = vpack.c.b16 %v990, %v986
  %v1399 = vpack.c.b16 %v995, %v991
  %v1400 = vpack.c.b16 %v996, %v992
  %v1401 = vpack.c.b16 %v997, %v993
  %v1402 = vpack.c.b16 %v998, %v994
  %v1403 = vpack.c.b16 %v1003, %v999
  %v1404 = vpack.c.b16 %v1004, %v1000
  %v1405 = vpack.c.b16 %v1005, %v1001
  %v1406 = vpack.c.b16 %v1006, %v1002
  %v1407 = vpack.c.b16 %v1011, %v1007
  %v1408 = vpack.c.b16 %v1012, %v1008
  %v1409 = vpack.c.b16 %v1013, %v1009
  %v1410 = vpack.c.b16 %v1014, %v1010
  %v1411 = vpack.c.b16 %v1019, %v1015
  %v1412 = vpack.c.b16 %v1020, %v1016
  %v1413 = vpack.c.b16 %v1021, %v1017
  %v1414 = vpack.c.b16 %v1022, %v1018
  %v1415 = vpack.c.b16 %v1027, %v1023
  %v1416 = vpack.c.b16 %v1028, %v1024
  %v1417 = vpack.c.b16 %v1029, %v1025
  %v1418 = vpack.c.b16 %v1030, %v1026
  %v1419 = vpack.c.b16 %v1035, %v1031
  %v1420 = vpack.c.b16 %v1036, %v1032
  %v1421 = vpack.c.b16 %v1037, %v1033
  %v1422 = vpack.c.b16 %v1038, %v1034
  %v1423 = vpack.c.b16 %v1043, %v1039
  %v1424 = vpack.c.b16 %v1044, %v1040
  %v1425 = vpack.c.b16 %v1045, %v1041
  %v1426 = vpack.c.b16 %v1046, %v1042
  %v1427 = vpack.c.b16 %v1051, %v1047
  %v1428 = vpack.c.b16 %v1052, %v1048
  %v1429 = vpack.c.b16 %v1053, %v1049
  %v1430 = vpack.c.b16 %v1054, %v1050
  %v1431 = vpack.c.b16 %v1059, %v1055
  %v1432 = vpack.c.b16 %v1060, %v1056
  %v1433 = vpack.c.b16 %v1061, %v1057
  %v1434 = vpack.c.b16 %v1062, %v1058
  %v1435 = vpack.c.b16 %v1067, %v1063
  %v1436 = vpack.c.b16 %v1068, %v1064
  %v1437 = vpack.c.b16 %v1069, %v1065
  %v1438 = vpack.c.b16 %v1070, %v1066
  %v1439 = vpack.c.b16 %v1075, %v1071
  %v1440 = vpack.c.b16 %v1076, %v1072
  %v1441 = vpack.c.b16 %v1077, %v1073
  %v1442 = vpack.c.b16 %v1078, %v1074
  %v1443 = vpack.c.b16 %v1083, %v1079
  %v1444 = vpack.c.b16 %v1084, %v1080
  %v1445 = vpack.c.b16 %v1085, %v1081
  %v1446 = vpack.c.b16 %v1086, %v1082
  %v1447 = vpack.c.b16 %v1091, %v1087
  %v1448 = vpack.c.b16 %v1092, %v1088
  %v1449 = vpack.c.b16 %v1093, %v1089
  %v1450 = vpack.c.b16 %v1094, %v1090
  %v1451 = vpack.c.b16 %v1099, %v1095
  %v1452 = vpack.c.b16 %v1100, %v1096
  %v1453 = vpack.c.b16 %v1101, %v1097
  %v1454 = vpack.c.b16 %v1102, %v1098
  %v1455 = vpack.c.b16 %v1107, %v1103
  %v1456 = vpack.c.b16 %v1108, %v1104
  %v1457 = vpack.c.b16 %v1109, %v1105
  %v1458 = vpack.c.b16 %v1110, %v1106
  %v1459 = vpack.c.b16 %v1115, %v1111
  %v1460 = vpack.c.b16 %v1116, %v1112
  %v1461 = vpack.c.b16 %v1117, %v1113
  %v1462 = vpack.c.b16 %v1118, %v1114
  %v1463 = vpack.c.b16 %v1123, %v1119
  %v1464 = vpack.c.b16 %v1124, %v1120
  %v1465 = vpack.c.b16 %v1125, %v1121
  %v1466 = vpack.c.b16 %v1126, %v1122
  %v1467 = vpack.c.b16 %v1131, %v1127
  %v1468 = vpack.c.b16 %v1132, %v1128
  %v1469 = vpack.c.b16 %v1133, %v1129
  %v1470 = vpack.c.b16 %v1134, %v1130
  %v1471 = vpack.c.b16 %v1139, %v1135
  %v1472 = vpack.c.b16 %v1140, %v1136
  %v1473 = vpack.c.b16 %v1141, %v1137
  %v1474 = vpack.c.b16 %v1142, %v1138
  %v1475 = vpack.c.b16 %v1147, %v1143
  %v1476 = vpack.c.b16 %v1148, %v1144
  %v1477 = vpack.c.b16 %v1149, %v1145
  %v1478 = vpack.c.b16 %v1150, %v1146
  %v1479 = vpack.c.b16 %v1155, %v1151
  %v1480 = vpack.c.b16 %v1156, %v1152
  %v1481 = vpack.c.b16 %v1157, %v1153
  %v1482 = vpack.c.b16 %v1158, %v1154
  %v1483 = vpack.c.b16 %v1163, %v1159
  %v1484 = vpack.c.b16 %v1164, %v1160
  %v1485 = vpack.c.b16 %v1165, %v1161
  %v1486 = vpack.c.b16 %v1166, %v1162
  %v1487 = vpack.c.b16 %v1171, %v1167
  %v1488 = vpack.c.b16 %v1172, %v1168
  %v1489 = vpack.c.b16 %v1173, %v1169
  %v1490 = vpack.c.b16 %v1174, %v1170
  %v1491 = vpack.c.b16 %v1179, %v1175
  %v1492 = vpack.c.b16 %v1180, %v1176
  %v1493 = vpack.c.b16 %v1181, %v1177
  %v1494 = vpack.c.b16 %v1182, %v1178
  %v1495 = vpack.c.b16 %v1187, %v1183
  %v1496 = vpack.c.b16 %v1188, %v1184
  %v1497 = vpack.c.b16 %v1189, %v1185
  %v1498 = vpack.c.b16 %v1190, %v1186
  %v1499 = vpack.c.b16 %v1195, %v1191
  %v1500 = vpack.c.b16 %v1196, %v1192
  %v1501 = vpack.c.b16 %v1197, %v1193
  %v1502 = vpack.c.b16 %v1198, %v1194
  %v1503 = vpack.c.b16 %v1203, %v1199
  %v1504 = vpack.c.b16 %v1204, %v1200
  %v1505 = vpack.c.b16 %v1205, %v1201
  %v1506 = vpack.c.b16 %v1206, %v1202
  %v1507 = vpack.c.b16 %v1211, %v1207
  %v1508 = vpack.c.b16 %v1212, %v1208
  %v1509 = vpack.c.b16 %v1213, %v1209
  %v1510 = vpack.c.b16 %v1214, %v1210
  %v1511 = vpack.c.b16 %v1219, %v1215
  %v1512 = vpack.c.b16 %v1220, %v1216
  %v1513 = vpack.c.b16 %v1221, %v1217
  %v1514 = vpack.c.b16 %v1222, %v1218
  %v1515 = vpack.c.b16 %v1227, %v1223
  %v1516 = vpack.c.b16 %v1228, %v1224
  %v1517 = vpack.c.b16 %v1229, %v1225
  %v1518 = vpack.c.b16 %v1230, %v1226
  %v1519 = vpack.c.b16 %v1235, %v1231
  %v1520 = vpack.c.b16 %v1236, %v1232
  %v1521 = vpack.c.b16 %v1237, %v1233
  %v1522 = vpack.c.b16 %v1238, %v1234
  %v1523 = vpack.c.b16 %v1243, %v1239
  %v1524 = vpack.c.b16 %v1244, %v1240
  %v1525 = vpack.c.b16 %v1245, %v1241
  %v1526 = vpack.c.b16 %v1246, %v1242
  %v1527 = vpack.c.b16 %v1251, %v1247
  %v1528 = vpack.c.b16 %v1252, %v1248
  %v1529 = vpack.c.b16 %v1253, %v1249
  %v1530 = vpack.c.b16 %v1254, %v1250
  %v1531 = vpack.c.b16 %v1259, %v1255
  %v1532 = vpack.c.b16 %v1260, %v1256
  %v1533 = vpack.c.b16 %v1261, %v1257
  %v1534 = vpack.c.b16 %v1262, %v1258
  %v1535 = vpack.c.b16 %v1267, %v1263
  %v1536 = vpack.c.b16 %v1268, %v1264
  %v1537 = vpack.c.b16 %v1269, %v1265
  %v1538 = vpack.c.b16 %v1270, %v1266
  %v1539 = vpack.c.b16 %v1275, %v1271
  %v1540 = vpack.c.b16 %v1276, %v1272
  %v1541 = vpack.c.b16 %v1277, %v1273
  %v1542 = vpack.c.b16 %v1278, %v1274
  %v1543 = vpack.c.b16 %v1283, %v1279
  %v1544 = vpack.c.b16 %v1284, %v1280
  %v1545 = vpack.c.b16 %v1285, %v1281
  %v1546 = vpack.c.b16 %v1286, %v1282
  %v1547 = vpack.c.b16 %v1291, %v1287
  %v1548 = vpack.c.b16 %v1292, %v1288
  %v1549 = vpack.c.b16 %v1293, %v1289
  %v1550 = vpack.c.b16 %v1294, %v1290
  %1807 = vmatprep.subr.bf16.mxu0 %v1296
  %1808 = vmatpush1.bf16.msra.mxu0 %v1295
  %1809 = vmatprep.subr.bf16.mxu0 %v1300
  %1810 = vmatpush1.bf16.msra.mxu0 %v1299
  %1811 = vmatprep.subr.bf16.mxu0 %v1304
  %1812 = vmatpush1.bf16.msra.mxu0 %v1303
  %1813 = vmatprep.subr.bf16.mxu0 %v1308
  %1814 = vmatpush1.bf16.msra.mxu0 %v1307
  %1815 = vmatprep.subr.bf16.mxu0 %v1312
  %1816 = vmatpush1.bf16.msra.mxu0 %v1311
  %1817 = vmatprep.subr.bf16.mxu0 %v1316
  %1818 = vmatpush1.bf16.msra.mxu0 %v1315
  %1819 = vmatprep.subr.bf16.mxu0 %v1320
  %1820 = vmatpush1.bf16.msra.mxu0 %v1319
  %1821 = vmatprep.subr.bf16.mxu0 %v1324
  %1822 = vmatpush1.bf16.msra.mxu0 %v1323
  %1823 = vmatprep.subr.bf16.mxu0 %v1328
  %1824 = vmatpush1.bf16.msra.mxu0 %v1327
  %1825 = vmatprep.subr.bf16.mxu0 %v1332
  %1826 = vmatpush1.bf16.msra.mxu0 %v1331
  %1827 = vmatprep.subr.bf16.mxu0 %v1336
  %1828 = vmatpush1.bf16.msra.mxu0 %v1335
  %1829 = vmatprep.subr.bf16.mxu0 %v1340
  %1830 = vmatpush1.bf16.msra.mxu0 %v1339
  %1831 = vmatprep.subr.bf16.mxu0 %v1344
  %1832 = vmatpush1.bf16.msra.mxu0 %v1343
  %1833 = vmatprep.subr.bf16.mxu0 %v1348
  %1834 = vmatpush1.bf16.msra.mxu0 %v1347
  %1835 = vmatprep.subr.bf16.mxu0 %v1352
  %1836 = vmatpush1.bf16.msra.mxu0 %v1351
  %1837 = vmatprep.subr.bf16.mxu0 %v1356
  %1838 = vmatpush1.bf16.msra.mxu0 %v1355
  %1839 = vmatprep.mubr.bf16.mxu0 %v242
  %1840 = vmatmul.mubr.bf16.gmra.mrb[0].mxu0 %v241
  %v1841 = vpop.f32.mrb[0].mxu0
  %v1842 = vadd.f32 %v510, %v1841
  %v1843 = vpop.f32.mrb[0].mxu0
  %v1844 = vadd.f32 %v514, %v1843
  %v1845 = vpop.f32.mrb[0].mxu0
  %v1846 = vpop.f32.mrb[0].mxu0
  %1847 = vdwg.mxu0
  %1848 = vmatprep.subr.bf16.mxu0 %v1360
  %1849 = vmatpush1.bf16.msra.mxu0 %v1359
  %1850 = vmatprep.subr.bf16.mxu0 %v1364
  %1851 = vmatpush1.bf16.msra.mxu0 %v1363
  %1852 = vmatprep.subr.bf16.mxu0 %v1368
  %1853 = vmatpush1.bf16.msra.mxu0 %v1367
  %1854 = vmatprep.subr.bf16.mxu0 %v1372
  %1855 = vmatpush1.bf16.msra.mxu0 %v1371
  %1856 = vmatprep.subr.bf16.mxu0 %v1376
  %1857 = vmatpush1.bf16.msra.mxu0 %v1375
  %1858 = vmatprep.subr.bf16.mxu0 %v1380
  %1859 = vmatpush1.bf16.msra.mxu0 %v1379
  %1860 = vmatprep.subr.bf16.mxu0 %v1384
  %1861 = vmatpush1.bf16.msra.mxu0 %v1383
  %1862 = vmatprep.subr.bf16.mxu0 %v1388
  %1863 = vmatpush1.bf16.msra.mxu0 %v1387
  %1864 = vmatprep.subr.bf16.mxu0 %v1392
  %1865 = vmatpush1.bf16.msra.mxu0 %v1391
  %1866 = vmatprep.subr.bf16.mxu0 %v1396
  %1867 = vmatpush1.bf16.msra.mxu0 %v1395
  %1868 = vmatprep.subr.bf16.mxu0 %v1400
  %1869 = vmatpush1.bf16.msra.mxu0 %v1399
  %1870 = vmatprep.subr.bf16.mxu0 %v1404
  %1871 = vmatpush1.bf16.msra.mxu0 %v1403
  %1872 = vmatprep.subr.bf16.mxu0 %v1408
  %1873 = vmatpush1.bf16.msra.mxu0 %v1407
  %1874 = vmatprep.subr.bf16.mxu0 %v1412
  %1875 = vmatpush1.bf16.msra.mxu0 %v1411
  %1876 = vmatprep.subr.bf16.mxu0 %v1416
  %1877 = vmatpush1.bf16.msra.mxu0 %v1415
  %1878 = vmatprep.subr.bf16.mxu0 %v1420
  %1879 = vmatpush1.bf16.msra.mxu0 %v1419
  %1880 = vmatprep.mubr.bf16.mxu0 %v244
  %1881 = vmatmul.mubr.bf16.gmra.mrb[0].mxu0 %v243
  %v1882 = vpop.f32.mrb[0].mxu0
  %v1883 = vadd.f32 %v1842, %v1882
  %v1884 = vpop.f32.mrb[0].mxu0
  %v1885 = vadd.f32 %v1844, %v1884
  %v1886 = vpop.f32.mrb[0].mxu0
  %v1887 = vpop.f32.mrb[0].mxu0
  %1888 = vdwg.mxu0
  %1889 = vmatprep.subr.bf16.mxu0 %v1424
  %1890 = vmatpush1.bf16.msra.mxu0 %v1423
  %1891 = vmatprep.subr.bf16.mxu0 %v1428
  %1892 = vmatpush1.bf16.msra.mxu0 %v1427
  %1893 = vmatprep.subr.bf16.mxu0 %v1432
  %1894 = vmatpush1.bf16.msra.mxu0 %v1431
  %1895 = vmatprep.subr.bf16.mxu0 %v1436
  %1896 = vmatpush1.bf16.msra.mxu0 %v1435
  %1897 = vmatprep.subr.bf16.mxu0 %v1440
  %1898 = vmatpush1.bf16.msra.mxu0 %v1439
  %1899 = vmatprep.subr.bf16.mxu0 %v1444
  %1900 = vmatpush1.bf16.msra.mxu0 %v1443
  %1901 = vmatprep.subr.bf16.mxu0 %v1448
  %1902 = vmatpush1.bf16.msra.mxu0 %v1447
  %1903 = vmatprep.subr.bf16.mxu0 %v1452
  %1904 = vmatpush1.bf16.msra.mxu0 %v1451
  %1905 = vmatprep.subr.bf16.mxu0 %v1456
  %1906 = vmatpush1.bf16.msra.mxu0 %v1455
  %1907 = vmatprep.subr.bf16.mxu0 %v1460
  %1908 = vmatpush1.bf16.msra.mxu0 %v1459
  %1909 = vmatprep.subr.bf16.mxu0 %v1464
  %1910 = vmatpush1.bf16.msra.mxu0 %v1463
  %1911 = vmatprep.subr.bf16.mxu0 %v1468
  %1912 = vmatpush1.bf16.msra.mxu0 %v1467
  %1913 = vmatprep.subr.bf16.mxu0 %v1472
  %1914 = vmatpush1.bf16.msra.mxu0 %v1471
  %1915 = vmatprep.subr.bf16.mxu0 %v1476
  %1916 = vmatpush1.bf16.msra.mxu0 %v1475
  %1917 = vmatprep.subr.bf16.mxu0 %v1480
  %1918 = vmatpush1.bf16.msra.mxu0 %v1479
  %1919 = vmatprep.subr.bf16.mxu0 %v1484
  %1920 = vmatpush1.bf16.msra.mxu0 %v1483
  %1921 = vmatprep.mubr.bf16.mxu0 %v246
  %1922 = vmatmul.mubr.bf16.gmra.mrb[0].mxu0 %v245
  %v1923 = vpop.f32.mrb[0].mxu0
  %v1924 = vadd.f32 %v1883, %v1923
  %v1925 = vpop.f32.mrb[0].mxu0
  %v1926 = vadd.f32 %v1885, %v1925
  %v1927 = vpop.f32.mrb[0].mxu0
  %v1928 = vpop.f32.mrb[0].mxu0
  %1929 = vdwg.mxu0
  %1930 = vmatprep.subr.bf16.mxu0 %v1488
  %1931 = vmatpush1.bf16.msra.mxu0 %v1487
  %1932 = vmatprep.subr.bf16.mxu0 %v1492
  %1933 = vmatpush1.bf16.msra.mxu0 %v1491
  %1934 = vmatprep.subr.bf16.mxu0 %v1496
  %1935 = vmatpush1.bf16.msra.mxu0 %v1495
  %1936 = vmatprep.subr.bf16.mxu0 %v1500
  %1937 = vmatpush1.bf16.msra.mxu0 %v1499
  %1938 = vmatprep.subr.bf16.mxu0 %v1504
  %1939 = vmatpush1.bf16.msra.mxu0 %v1503
  %1940 = vmatprep.subr.bf16.mxu0 %v1508
  %1941 = vmatpush1.bf16.msra.mxu0 %v1507
  %1942 = vmatprep.subr.bf16.mxu0 %v1512
  %1943 = vmatpush1.bf16.msra.mxu0 %v1511
  %1944 = vmatprep.subr.bf16.mxu0 %v1516
  %1945 = vmatpush1.bf16.msra.mxu0 %v1515
  %1946 = vmatprep.subr.bf16.mxu0 %v1520
  %1947 = vmatpush1.bf16.msra.mxu0 %v1519
  %1948 = vmatprep.subr.bf16.mxu0 %v1524
  %1949 = vmatpush1.bf16.msra.mxu0 %v1523
  %1950 = vmatprep.subr.bf16.mxu0 %v1528
  %1951 = vmatpush1.bf16.msra.mxu0 %v1527
  %1952 = vmatprep.subr.bf16.mxu0 %v1532
  %1953 = vmatpush1.bf16.msra.mxu0 %v1531
  %1954 = vmatprep.subr.bf16.mxu0 %v1536
  %1955 = vmatpush1.bf16.msra.mxu0 %v1535
  %1956 = vmatprep.subr.bf16.mxu0 %v1540
  %1957 = vmatpush1.bf16.msra.mxu0 %v1539
  %1958 = vmatprep.subr.bf16.mxu0 %v1544
  %1959 = vmatpush1.bf16.msra.mxu0 %v1543
  %1960 = vmatprep.subr.bf16.mxu0 %v1548
  %1961 = vmatpush1.bf16.msra.mxu0 %v1547
  %1962 = vmatprep.mubr.bf16.mxu0 %v248
  %1963 = vmatmul.mubr.bf16.gmra.mrb[0].mxu0 %v247
  %v1964 = vpop.f32.mrb[0].mxu0
  %v1965 = vadd.f32 %v1924, %v1964
  %v1966 = vpop.f32.mrb[0].mxu0
  %v1967 = vadd.f32 %v1926, %v1966
  %v1968 = vpop.f32.mrb[0].mxu0
  %v1969 = vpop.f32.mrb[0].mxu0
  %1970 = vdwg.mxu0
  %1971 = vmatprep.subr.bf16.mxu0 %v1298
  %1972 = vmatpush1.bf16.msra.mxu0 %v1297
  %1973 = vmatprep.subr.bf16.mxu0 %v1302
  %1974 = vmatpush1.bf16.msra.mxu0 %v1301
  %1975 = vmatprep.subr.bf16.mxu0 %v1306
  %1976 = vmatpush1.bf16.msra.mxu0 %v1305
  %1977 = vmatprep.subr.bf16.mxu0 %v1310
  %1978 = vmatpush1.bf16.msra.mxu0 %v1309
  %1979 = vmatprep.subr.bf16.mxu0 %v1314
  %1980 = vmatpush1.bf16.msra.mxu0 %v1313
  %1981 = vmatprep.subr.bf16.mxu0 %v1318
  %1982 = vmatpush1.bf16.msra.mxu0 %v1317
  %1983 = vmatprep.subr.bf16.mxu0 %v1322
  %1984 = vmatpush1.bf16.msra.mxu0 %v1321
  %1985 = vmatprep.subr.bf16.mxu0 %v1326
  %1986 = vmatpush1.bf16.msra.mxu0 %v1325
  %1987 = vmatprep.subr.bf16.mxu0 %v1330
  %1988 = vmatpush1.bf16.msra.mxu0 %v1329
  %1989 = vmatprep.subr.bf16.mxu0 %v1334
  %1990 = vmatpush1.bf16.msra.mxu0 %v1333
  %1991 = vmatprep.subr.bf16.mxu0 %v1338
  %1992 = vmatpush1.bf16.msra.mxu0 %v1337
  %1993 = vmatprep.subr.bf16.mxu0 %v1342
  %1994 = vmatpush1.bf16.msra.mxu0 %v1341
  %1995 = vmatprep.subr.bf16.mxu0 %v1346
  %1996 = vmatpush1.bf16.msra.mxu0 %v1345
  %1997 = vmatprep.subr.bf16.mxu0 %v1350
  %1998 = vmatpush1.bf16.msra.mxu0 %v1349
  %1999 = vmatprep.subr.bf16.mxu0 %v1354
  %2000 = vmatpush1.bf16.msra.mxu0 %v1353
  %2001 = vmatprep.subr.bf16.mxu0 %v1358
  %2002 = vmatpush1.bf16.msra.mxu0 %v1357
  %2003 = vmatprep.mubr.bf16.mxu0 %v242
  %2004 = vmatmul.mubr.bf16.gmra.mrb[0].mxu0 %v241
  %v2005 = vpop.f32.mrb[0].mxu0
  %v2006 = vadd.f32 %v518, %v2005
  %v2007 = vpop.f32.mrb[0].mxu0
  %v2008 = vadd.f32 %v522, %v2007
  %v2009 = vpop.f32.mrb[0].mxu0
  %v2010 = vpop.f32.mrb[0].mxu0
  %2011 = vdwg.mxu0
  %2012 = vmatprep.subr.bf16.mxu0 %v1362
  %2013 = vmatpush1.bf16.msra.mxu0 %v1361
  %2014 = vmatprep.subr.bf16.mxu0 %v1366
  %2015 = vmatpush1.bf16.msra.mxu0 %v1365
  %2016 = vmatprep.subr.bf16.mxu0 %v1370
  %2017 = vmatpush1.bf16.msra.mxu0 %v1369
  %2018 = vmatprep.subr.bf16.mxu0 %v1374
  %2019 = vmatpush1.bf16.msra.mxu0 %v1373
  %2020 = vmatprep.subr.bf16.mxu0 %v1378
  %2021 = vmatpush1.bf16.msra.mxu0 %v1377
  %2022 = vmatprep.subr.bf16.mxu0 %v1382
  %2023 = vmatpush1.bf16.msra.mxu0 %v1381
  %2024 = vmatprep.subr.bf16.mxu0 %v1386
  %2025 = vmatpush1.bf16.msra.mxu0 %v1385
  %2026 = vmatprep.subr.bf16.mxu0 %v1390
  %2027 = vmatpush1.bf16.msra.mxu0 %v1389
  %2028 = vmatprep.subr.bf16.mxu0 %v1394
  %2029 = vmatpush1.bf16.msra.mxu0 %v1393
  %2030 = vmatprep.subr.bf16.mxu0 %v1398
  %2031 = vmatpush1.bf16.msra.mxu0 %v1397
  %2032 = vmatprep.subr.bf16.mxu0 %v1402
  %2033 = vmatpush1.bf16.msra.mxu0 %v1401
  %2034 = vmatprep.subr.bf16.mxu0 %v1406
  %2035 = vmatpush1.bf16.msra.mxu0 %v1405
  %2036 = vmatprep.subr.bf16.mxu0 %v1410
  %2037 = vmatpush1.bf16.msra.mxu0 %v1409
  %2038 = vmatprep.subr.bf16.mxu0 %v1414
  %2039 = vmatpush1.bf16.msra.mxu0 %v1413
  %2040 = vmatprep.subr.bf16.mxu0 %v1418
  %2041 = vmatpush1.bf16.msra.mxu0 %v1417
  %2042 = vmatprep.subr.bf16.mxu0 %v1422
  %2043 = vmatpush1.bf16.msra.mxu0 %v1421
  %2044 = vmatprep.mubr.bf16.mxu0 %v244
  %2045 = vmatmul.mubr.bf16.gmra.mrb[0].mxu0 %v243
  %v2046 = vpop.f32.mrb[0].mxu0
  %v2047 = vadd.f32 %v2006, %v2046
  %v2048 = vpop.f32.mrb[0].mxu0
  %v2049 = vadd.f32 %v2008, %v2048
  %v2050 = vpop.f32.mrb[0].mxu0
  %v2051 = vpop.f32.mrb[0].mxu0
  %2052 = vdwg.mxu0
  %2053 = vmatprep.subr.bf16.mxu0 %v1426
  %2054 = vmatpush1.bf16.msra.mxu0 %v1425
  %2055 = vmatprep.subr.bf16.mxu0 %v1430
  %2056 = vmatpush1.bf16.msra.mxu0 %v1429
  %2057 = vmatprep.subr.bf16.mxu0 %v1434
  %2058 = vmatpush1.bf16.msra.mxu0 %v1433
  %2059 = vmatprep.subr.bf16.mxu0 %v1438
  %2060 = vmatpush1.bf16.msra.mxu0 %v1437
  %2061 = vmatprep.subr.bf16.mxu0 %v1442
  %2062 = vmatpush1.bf16.msra.mxu0 %v1441
  %2063 = vmatprep.subr.bf16.mxu0 %v1446
  %2064 = vmatpush1.bf16.msra.mxu0 %v1445
  %2065 = vmatprep.subr.bf16.mxu0 %v1450
  %2066 = vmatpush1.bf16.msra.mxu0 %v1449
  %2067 = vmatprep.subr.bf16.mxu0 %v1454
  %2068 = vmatpush1.bf16.msra.mxu0 %v1453
  %2069 = vmatprep.subr.bf16.mxu0 %v1458
  %2070 = vmatpush1.bf16.msra.mxu0 %v1457
  %2071 = vmatprep.subr.bf16.mxu0 %v1462
  %2072 = vmatpush1.bf16.msra.mxu0 %v1461
  %2073 = vmatprep.subr.bf16.mxu0 %v1466
  %2074 = vmatpush1.bf16.msra.mxu0 %v1465
  %2075 = vmatprep.subr.bf16.mxu0 %v1470
  %2076 = vmatpush1.bf16.msra.mxu0 %v1469
  %2077 = vmatprep.subr.bf16.mxu0 %v1474
  %2078 = vmatpush1.bf16.msra.mxu0 %v1473
  %2079 = vmatprep.subr.bf16.mxu0 %v1478
  %2080 = vmatpush1.bf16.msra.mxu0 %v1477
  %2081 = vmatprep.subr.bf16.mxu0 %v1482
  %2082 = vmatpush1.bf16.msra.mxu0 %v1481
  %2083 = vmatprep.subr.bf16.mxu0 %v1486
  %2084 = vmatpush1.bf16.msra.mxu0 %v1485
  %2085 = vmatprep.mubr.bf16.mxu0 %v246
  %2086 = vmatmul.mubr.bf16.gmra.mrb[0].mxu0 %v245
  %v2087 = vpop.f32.mrb[0].mxu0
  %v2088 = vadd.f32 %v2047, %v2087
  %v2089 = vpop.f32.mrb[0].mxu0
  %v2090 = vadd.f32 %v2049, %v2089
  %v2091 = vpop.f32.mrb[0].mxu0
  %v2092 = vpop.f32.mrb[0].mxu0
  %2093 = vdwg.mxu0
  %2094 = vmatprep.subr.bf16.mxu0 %v1490
  %2095 = vmatpush1.bf16.msra.mxu0 %v1489
  %2096 = vmatprep.subr.bf16.mxu0 %v1494
  %2097 = vmatpush1.bf16.msra.mxu0 %v1493
  %2098 = vmatprep.subr.bf16.mxu0 %v1498
  %2099 = vmatpush1.bf16.msra.mxu0 %v1497
  %2100 = vmatprep.subr.bf16.mxu0 %v1502
  %2101 = vmatpush1.bf16.msra.mxu0 %v1501
  %2102 = vmatprep.subr.bf16.mxu0 %v1506
  %2103 = vmatpush1.bf16.msra.mxu0 %v1505
  %2104 = vmatprep.subr.bf16.mxu0 %v1510
  %2105 = vmatpush1.bf16.msra.mxu0 %v1509
  %2106 = vmatprep.subr.bf16.mxu0 %v1514
  %2107 = vmatpush1.bf16.msra.mxu0 %v1513
  %2108 = vmatprep.subr.bf16.mxu0 %v1518
  %2109 = vmatpush1.bf16.msra.mxu0 %v1517
  %2110 = vmatprep.subr.bf16.mxu0 %v1522
  %2111 = vmatpush1.bf16.msra.mxu0 %v1521
  %2112 = vmatprep.subr.bf16.mxu0 %v1526
  %2113 = vmatpush1.bf16.msra.mxu0 %v1525
  %2114 = vmatprep.subr.bf16.mxu0 %v1530
  %2115 = vmatpush1.bf16.msra.mxu0 %v1529
  %2116 = vmatprep.subr.bf16.mxu0 %v1534
  %2117 = vmatpush1.bf16.msra.mxu0 %v1533
  %2118 = vmatprep.subr.bf16.mxu0 %v1538
  %2119 = vmatpush1.bf16.msra.mxu0 %v1537
  %2120 = vmatprep.subr.bf16.mxu0 %v1542
  %2121 = vmatpush1.bf16.msra.mxu0 %v1541
  %2122 = vmatprep.subr.bf16.mxu0 %v1546
  %2123 = vmatpush1.bf16.msra.mxu0 %v1545
  %2124 = vmatprep.subr.bf16.mxu0 %v1550
  %2125 = vmatpush1.bf16.msra.mxu0 %v1549
  %2126 = vmatprep.mubr.bf16.mxu0 %v248
  %2127 = vmatmul.mubr.bf16.gmra.mrb[0].mxu0 %v247
  %v2128 = vpop.f32.mrb[0].mxu0
  %v2129 = vadd.f32 %v2088, %v2128
  %v2130 = vpop.f32.mrb[0].mxu0
  %v2131 = vadd.f32 %v2090, %v2130
  %v2132 = vpop.f32.mrb[0].mxu0
  %v2133 = vpop.f32.mrb[0].mxu0
  %2134 = vdwg.mxu0
  %v2135 = vpack.c.bf16 %v1965, %v1965
  %v2136 = vpack.c.bf16 %v1967, %v1967
  %v2137 = vpack.c.bf16 %v2129, %v2129
  %v2138 = vpack.c.bf16 %v2131, %v2131
  %v2139 = vld [vmem:[%s6] sm:$0xff]
  %v2140 = vld [vmem:[%s6 + $0x8] sm:$0xff]
  %v2141 = vld [vmem:[%s6 + $0x10] sm:$0xff]
  %v2142 = vld [vmem:[%s6 + $0x18] sm:$0xff]
  %v2143 = vld [vmem:[%s6 + $0x20] sm:$0xff]
  %v2144 = vld [vmem:[%s6 + $0x28] sm:$0xff]
  %v2145 = vld [vmem:[%s6 + $0x30] sm:$0xff]
  %v2146 = vld [vmem:[%s6 + $0x38] sm:$0xff]
  %v2147 = vld [vmem:[%s6 + $0x40] sm:$0xff]
  %v2148 = vld [vmem:[%s6 + $0x48] sm:$0xff]
  %v2149 = vld [vmem:[%s6 + $0x50] sm:$0xff]
  %v2150 = vld [vmem:[%s6 + $0x58] sm:$0xff]
  %v2151 = vld [vmem:[%s6 + $0x60] sm:$0xff]
  %v2152 = vld [vmem:[%s6 + $0x68] sm:$0xff]
  %v2153 = vld [vmem:[%s6 + $0x70] sm:$0xff]
  %v2154 = vld [vmem:[%s6 + $0x78] sm:$0xff]
  %v2155 = vld [vmem:[%s6 + $0x80] sm:$0xff]
  %v2156 = vld [vmem:[%s6 + $0x88] sm:$0xff]
  %v2157 = vld [vmem:[%s6 + $0x90] sm:$0xff]
  %v2158 = vld [vmem:[%s6 + $0x98] sm:$0xff]
  %v2159 = vld [vmem:[%s6 + $0xa0] sm:$0xff]
  %v2160 = vld [vmem:[%s6 + $0xa8] sm:$0xff]
  %v2161 = vld [vmem:[%s6 + $0xb0] sm:$0xff]
  %v2162 = vld [vmem:[%s6 + $0xb8] sm:$0xff]
  %v2163 = vld [vmem:[%s6 + $0xc0] sm:$0xff]
  %v2164 = vld [vmem:[%s6 + $0xc8] sm:$0xff]
  %v2165 = vld [vmem:[%s6 + $0xd0] sm:$0xff]
  %v2166 = vld [vmem:[%s6 + $0xd8] sm:$0xff]
  %v2167 = vld [vmem:[%s6 + $0xe0] sm:$0xff]
  %v2168 = vld [vmem:[%s6 + $0xe8] sm:$0xff]
  %v2169 = vld [vmem:[%s6 + $0xf0] sm:$0xff]
  %v2170 = vld [vmem:[%s6 + $0xf8] sm:$0xff]
  %v2171 = vld [vmem:[%s6 + $0x100] sm:$0xff]
  %v2172 = vld [vmem:[%s6 + $0x108] sm:$0xff]
  %v2173 = vld [vmem:[%s6 + $0x110] sm:$0xff]
  %v2174 = vld [vmem:[%s6 + $0x118] sm:$0xff]
  %v2175 = vld [vmem:[%s6 + $0x120] sm:$0xff]
  %v2176 = vld [vmem:[%s6 + $0x128] sm:$0xff]
  %v2177 = vld [vmem:[%s6 + $0x130] sm:$0xff]
  %v2178 = vld [vmem:[%s6 + $0x138] sm:$0xff]
  %v2179 = vld [vmem:[%s6 + $0x140] sm:$0xff]
  %v2180 = vld [vmem:[%s6 + $0x148] sm:$0xff]
  %v2181 = vld [vmem:[%s6 + $0x150] sm:$0xff]
  %v2182 = vld [vmem:[%s6 + $0x158] sm:$0xff]
  %v2183 = vld [vmem:[%s6 + $0x160] sm:$0xff]
  %v2184 = vld [vmem:[%s6 + $0x168] sm:$0xff]
  %v2185 = vld [vmem:[%s6 + $0x170] sm:$0xff]
  %v2186 = vld [vmem:[%s6 + $0x178] sm:$0xff]
  %v2187 = vld [vmem:[%s6 + $0x180] sm:$0xff]
  %v2188 = vld [vmem:[%s6 + $0x188] sm:$0xff]
  %v2189 = vld [vmem:[%s6 + $0x190] sm:$0xff]
  %v2190 = vld [vmem:[%s6 + $0x198] sm:$0xff]
  %v2191 = vld [vmem:[%s6 + $0x1a0] sm:$0xff]
  %v2192 = vld [vmem:[%s6 + $0x1a8] sm:$0xff]
  %v2193 = vld [vmem:[%s6 + $0x1b0] sm:$0xff]
  %v2194 = vld [vmem:[%s6 + $0x1b8] sm:$0xff]
  %v2195 = vld [vmem:[%s6 + $0x1c0] sm:$0xff]
  %v2196 = vld [vmem:[%s6 + $0x1c8] sm:$0xff]
  %v2197 = vld [vmem:[%s6 + $0x1d0] sm:$0xff]
  %v2198 = vld [vmem:[%s6 + $0x1d8] sm:$0xff]
  %v2199 = vld [vmem:[%s6 + $0x1e0] sm:$0xff]
  %v2200 = vld [vmem:[%s6 + $0x1e8] sm:$0xff]
  %v2201 = vld [vmem:[%s6 + $0x1f0] sm:$0xff]
  %v2202 = vld [vmem:[%s6 + $0x1f8] sm:$0xff]
  %v2203 = vld [vmem:[%s7] sm:$0x3]
  %v2205 = vlaneseq
  %v2206 = vshrl.u32 %v2205, 7
  %v2207 = vsub.s32 0, %v2206
  %v2208 = vrot.slane %v2203, %v2207
  %v2209 = vlaneseq
  %v2210 = vshrl.u32 %v2209, 7
  %v2211 = vsub.s32 1, %v2210
  %v2212 = vrot.slane %v2203, %v2211
  %v2279 = vunpack.c.l.b16 %v2139
  %v2280 = vunpack.c.h.b16 %v2139
  %v2281 = vunpack.c.l.b16 %v2140
  %v2282 = vunpack.c.h.b16 %v2140
  %v2283 = vunpack.c.l.b16 %v2141
  %v2284 = vunpack.c.h.b16 %v2141
  %v2285 = vunpack.c.l.b16 %v2142
  %v2286 = vunpack.c.h.b16 %v2142
  %v2287 = vunpack.c.l.b16 %v2143
  %v2288 = vunpack.c.h.b16 %v2143
  %v2289 = vunpack.c.l.b16 %v2144
  %v2290 = vunpack.c.h.b16 %v2144
  %v2291 = vunpack.c.l.b16 %v2145
  %v2292 = vunpack.c.h.b16 %v2145
  %v2293 = vunpack.c.l.b16 %v2146
  %v2294 = vunpack.c.h.b16 %v2146
  %v2295 = vunpack.c.l.b16 %v2147
  %v2296 = vunpack.c.h.b16 %v2147
  %v2297 = vunpack.c.l.b16 %v2148
  %v2298 = vunpack.c.h.b16 %v2148
  %v2299 = vunpack.c.l.b16 %v2149
  %v2300 = vunpack.c.h.b16 %v2149
  %v2301 = vunpack.c.l.b16 %v2150
  %v2302 = vunpack.c.h.b16 %v2150
  %v2303 = vunpack.c.l.b16 %v2151
  %v2304 = vunpack.c.h.b16 %v2151
  %v2305 = vunpack.c.l.b16 %v2152
  %v2306 = vunpack.c.h.b16 %v2152
  %v2307 = vunpack.c.l.b16 %v2153
  %v2308 = vunpack.c.h.b16 %v2153
  %v2309 = vunpack.c.l.b16 %v2154
  %v2310 = vunpack.c.h.b16 %v2154
  %v2311 = vunpack.c.l.b16 %v2155
  %v2312 = vunpack.c.h.b16 %v2155
  %v2313 = vunpack.c.l.b16 %v2156
  %v2314 = vunpack.c.h.b16 %v2156
  %v2315 = vunpack.c.l.b16 %v2157
  %v2316 = vunpack.c.h.b16 %v2157
  %v2317 = vunpack.c.l.b16 %v2158
  %v2318 = vunpack.c.h.b16 %v2158
  %v2319 = vunpack.c.l.b16 %v2159
  %v2320 = vunpack.c.h.b16 %v2159
  %v2321 = vunpack.c.l.b16 %v2160
  %v2322 = vunpack.c.h.b16 %v2160
  %v2323 = vunpack.c.l.b16 %v2161
  %v2324 = vunpack.c.h.b16 %v2161
  %v2325 = vunpack.c.l.b16 %v2162
  %v2326 = vunpack.c.h.b16 %v2162
  %v2327 = vunpack.c.l.b16 %v2163
  %v2328 = vunpack.c.h.b16 %v2163
  %v2329 = vunpack.c.l.b16 %v2164
  %v2330 = vunpack.c.h.b16 %v2164
  %v2331 = vunpack.c.l.b16 %v2165
  %v2332 = vunpack.c.h.b16 %v2165
  %v2333 = vunpack.c.l.b16 %v2166
  %v2334 = vunpack.c.h.b16 %v2166
  %v2335 = vunpack.c.l.b16 %v2167
  %v2336 = vunpack.c.h.b16 %v2167
  %v2337 = vunpack.c.l.b16 %v2168
  %v2338 = vunpack.c.h.b16 %v2168
  %v2339 = vunpack.c.l.b16 %v2169
  %v2340 = vunpack.c.h.b16 %v2169
  %v2341 = vunpack.c.l.b16 %v2170
  %v2342 = vunpack.c.h.b16 %v2170
  %v2343 = vunpack.c.l.b16 %v2171
  %v2344 = vunpack.c.h.b16 %v2171
  %v2345 = vunpack.c.l.b16 %v2172
  %v2346 = vunpack.c.h.b16 %v2172
  %v2347 = vunpack.c.l.b16 %v2173
  %v2348 = vunpack.c.h.b16 %v2173
  %v2349 = vunpack.c.l.b16 %v2174
  %v2350 = vunpack.c.h.b16 %v2174
  %v2351 = vunpack.c.l.b16 %v2175
  %v2352 = vunpack.c.h.b16 %v2175
  %v2353 = vunpack.c.l.b16 %v2176
  %v2354 = vunpack.c.h.b16 %v2176
  %v2355 = vunpack.c.l.b16 %v2177
  %v2356 = vunpack.c.h.b16 %v2177
  %v2357 = vunpack.c.l.b16 %v2178
  %v2358 = vunpack.c.h.b16 %v2178
  %v2359 = vunpack.c.l.b16 %v2179
  %v2360 = vunpack.c.h.b16 %v2179
  %v2361 = vunpack.c.l.b16 %v2180
  %v2362 = vunpack.c.h.b16 %v2180
  %v2363 = vunpack.c.l.b16 %v2181
  %v2364 = vunpack.c.h.b16 %v2181
  %v2365 = vunpack.c.l.b16 %v2182
  %v2366 = vunpack.c.h.b16 %v2182
  %v2367 = vunpack.c.l.b16 %v2183
  %v2368 = vunpack.c.h.b16 %v2183
  %v2369 = vunpack.c.l.b16 %v2184
  %v2370 = vunpack.c.h.b16 %v2184
  %v2371 = vunpack.c.l.b16 %v2185
  %v2372 = vunpack.c.h.b16 %v2185
  %v2373 = vunpack.c.l.b16 %v2186
  %v2374 = vunpack.c.h.b16 %v2186
  %v2375 = vunpack.c.l.b16 %v2187
  %v2376 = vunpack.c.h.b16 %v2187
  %v2377 = vunpack.c.l.b16 %v2188
  %v2378 = vunpack.c.h.b16 %v2188
  %v2379 = vunpack.c.l.b16 %v2189
  %v2380 = vunpack.c.h.b16 %v2189
  %v2381 = vunpack.c.l.b16 %v2190
  %v2382 = vunpack.c.h.b16 %v2190
  %v2383 = vunpack.c.l.b16 %v2191
  %v2384 = vunpack.c.h.b16 %v2191
  %v2385 = vunpack.c.l.b16 %v2192
  %v2386 = vunpack.c.h.b16 %v2192
  %v2387 = vunpack.c.l.b16 %v2193
  %v2388 = vunpack.c.h.b16 %v2193
  %v2389 = vunpack.c.l.b16 %v2194
  %v2390 = vunpack.c.h.b16 %v2194
  %v2391 = vunpack.c.l.b16 %v2195
  %v2392 = vunpack.c.h.b16 %v2195
  %v2393 = vunpack.c.l.b16 %v2196
  %v2394 = vunpack.c.h.b16 %v2196
  %v2395 = vunpack.c.l.b16 %v2197
  %v2396 = vunpack.c.h.b16 %v2197
  %v2397 = vunpack.c.l.b16 %v2198
  %v2398 = vunpack.c.h.b16 %v2198
  %v2399 = vunpack.c.l.b16 %v2199
  %v2400 = vunpack.c.h.b16 %v2199
  %v2401 = vunpack.c.l.b16 %v2200
  %v2402 = vunpack.c.h.b16 %v2200
  %v2403 = vunpack.c.l.b16 %v2201
  %v2404 = vunpack.c.h.b16 %v2201
  %v2405 = vunpack.c.l.b16 %v2202
  %v2406 = vunpack.c.h.b16 %v2202
  %v2407 = vpack.c.b16 %v2281, %v2279
  %v2408 = vpack.c.b16 %v2282, %v2280
  %v2409 = vpack.c.b16 %v2285, %v2283
  %v2410 = vpack.c.b16 %v2286, %v2284
  %v2411 = vpack.c.b16 %v2289, %v2287
  %v2412 = vpack.c.b16 %v2290, %v2288
  %v2413 = vpack.c.b16 %v2293, %v2291
  %v2414 = vpack.c.b16 %v2294, %v2292
  %v2415 = vpack.c.b16 %v2297, %v2295
  %v2416 = vpack.c.b16 %v2298, %v2296
  %v2417 = vpack.c.b16 %v2301, %v2299
  %v2418 = vpack.c.b16 %v2302, %v2300
  %v2419 = vpack.c.b16 %v2305, %v2303
  %v2420 = vpack.c.b16 %v2306, %v2304
  %v2421 = vpack.c.b16 %v2309, %v2307
  %v2422 = vpack.c.b16 %v2310, %v2308
  %v2423 = vpack.c.b16 %v2313, %v2311
  %v2424 = vpack.c.b16 %v2314, %v2312
  %v2425 = vpack.c.b16 %v2317, %v2315
  %v2426 = vpack.c.b16 %v2318, %v2316
  %v2427 = vpack.c.b16 %v2321, %v2319
  %v2428 = vpack.c.b16 %v2322, %v2320
  %v2429 = vpack.c.b16 %v2325, %v2323
  %v2430 = vpack.c.b16 %v2326, %v2324
  %v2431 = vpack.c.b16 %v2329, %v2327
  %v2432 = vpack.c.b16 %v2330, %v2328
  %v2433 = vpack.c.b16 %v2333, %v2331
  %v2434 = vpack.c.b16 %v2334, %v2332
  %v2435 = vpack.c.b16 %v2337, %v2335
  %v2436 = vpack.c.b16 %v2338, %v2336
  %v2437 = vpack.c.b16 %v2341, %v2339
  %v2438 = vpack.c.b16 %v2342, %v2340
  %v2439 = vpack.c.b16 %v2345, %v2343
  %v2440 = vpack.c.b16 %v2346, %v2344
  %v2441 = vpack.c.b16 %v2349, %v2347
  %v2442 = vpack.c.b16 %v2350, %v2348
  %v2443 = vpack.c.b16 %v2353, %v2351
  %v2444 = vpack.c.b16 %v2354, %v2352
  %v2445 = vpack.c.b16 %v2357, %v2355
  %v2446 = vpack.c.b16 %v2358, %v2356
  %v2447 = vpack.c.b16 %v2361, %v2359
  %v2448 = vpack.c.b16 %v2362, %v2360
  %v2449 = vpack.c.b16 %v2365, %v2363
  %v2450 = vpack.c.b16 %v2366, %v2364
  %v2451 = vpack.c.b16 %v2369, %v2367
  %v2452 = vpack.c.b16 %v2370, %v2368
  %v2453 = vpack.c.b16 %v2373, %v2371
  %v2454 = vpack.c.b16 %v2374, %v2372
  %v2455 = vpack.c.b16 %v2377, %v2375
  %v2456 = vpack.c.b16 %v2378, %v2376
  %v2457 = vpack.c.b16 %v2381, %v2379
  %v2458 = vpack.c.b16 %v2382, %v2380
  %v2459 = vpack.c.b16 %v2385, %v2383
  %v2460 = vpack.c.b16 %v2386, %v2384
  %v2461 = vpack.c.b16 %v2389, %v2387
  %v2462 = vpack.c.b16 %v2390, %v2388
  %v2463 = vpack.c.b16 %v2393, %v2391
  %v2464 = vpack.c.b16 %v2394, %v2392
  %v2465 = vpack.c.b16 %v2397, %v2395
  %v2466 = vpack.c.b16 %v2398, %v2396
  %v2467 = vpack.c.b16 %v2401, %v2399
  %v2468 = vpack.c.b16 %v2402, %v2400
  %v2469 = vpack.c.b16 %v2405, %v2403
  %v2470 = vpack.c.b16 %v2406, %v2404
  %2535 = vmatprep.subr.bf16.mxu0 %v2408
  %2536 = vmatpush1.bf16.msra.mxu0 %v2407
  %2537 = vmatprep.subr.bf16.mxu0 %v2410
  %2538 = vmatpush1.bf16.msra.mxu0 %v2409
  %2539 = vmatprep.subr.bf16.mxu0 %v2412
  %2540 = vmatpush1.bf16.msra.mxu0 %v2411
  %2541 = vmatprep.subr.bf16.mxu0 %v2414
  %2542 = vmatpush1.bf16.msra.mxu0 %v2413
  %2543 = vmatprep.subr.bf16.mxu0 %v2416
  %2544 = vmatpush1.bf16.msra.mxu0 %v2415
  %2545 = vmatprep.subr.bf16.mxu0 %v2418
  %2546 = vmatpush1.bf16.msra.mxu0 %v2417
  %2547 = vmatprep.subr.bf16.mxu0 %v2420
  %2548 = vmatpush1.bf16.msra.mxu0 %v2419
  %2549 = vmatprep.subr.bf16.mxu0 %v2422
  %2550 = vmatpush1.bf16.msra.mxu0 %v2421
  %2551 = vmatprep.subr.bf16.mxu0 %v2424
  %2552 = vmatpush1.bf16.msra.mxu0 %v2423
  %2553 = vmatprep.subr.bf16.mxu0 %v2426
  %2554 = vmatpush1.bf16.msra.mxu0 %v2425
  %2555 = vmatprep.subr.bf16.mxu0 %v2428
  %2556 = vmatpush1.bf16.msra.mxu0 %v2427
  %2557 = vmatprep.subr.bf16.mxu0 %v2430
  %2558 = vmatpush1.bf16.msra.mxu0 %v2429
  %2559 = vmatprep.subr.bf16.mxu0 %v2432
  %2560 = vmatpush1.bf16.msra.mxu0 %v2431
  %2561 = vmatprep.subr.bf16.mxu0 %v2434
  %2562 = vmatpush1.bf16.msra.mxu0 %v2433
  %2563 = vmatprep.subr.bf16.mxu0 %v2436
  %2564 = vmatpush1.bf16.msra.mxu0 %v2435
  %2565 = vmatprep.subr.bf16.mxu0 %v2438
  %2566 = vmatpush1.bf16.msra.mxu0 %v2437
  %2567 = vmatprep.mubr.bf16.mxu0 %v2136
  %2568 = vmatmul.mubr.bf16.gmra.mrb[0].mxu0 %v2135
  %v2569 = vpop.f32.mrb[0].mxu0
  %v2570 = vadd.f32 %v2208, %v2569
  %v2571 = vpop.f32.mrb[0].mxu0
  %v2572 = vadd.f32 %v2212, %v2571
  %v2573 = vpop.f32.mrb[0].mxu0
  %v2574 = vpop.f32.mrb[0].mxu0
  %2575 = vdwg.mxu0
  %2576 = vmatprep.subr.bf16.mxu0 %v2440
  %2577 = vmatpush1.bf16.msra.mxu0 %v2439
  %2578 = vmatprep.subr.bf16.mxu0 %v2442
  %2579 = vmatpush1.bf16.msra.mxu0 %v2441
  %2580 = vmatprep.subr.bf16.mxu0 %v2444
  %2581 = vmatpush1.bf16.msra.mxu0 %v2443
  %2582 = vmatprep.subr.bf16.mxu0 %v2446
  %2583 = vmatpush1.bf16.msra.mxu0 %v2445
  %2584 = vmatprep.subr.bf16.mxu0 %v2448
  %2585 = vmatpush1.bf16.msra.mxu0 %v2447
  %2586 = vmatprep.subr.bf16.mxu0 %v2450
  %2587 = vmatpush1.bf16.msra.mxu0 %v2449
  %2588 = vmatprep.subr.bf16.mxu0 %v2452
  %2589 = vmatpush1.bf16.msra.mxu0 %v2451
  %2590 = vmatprep.subr.bf16.mxu0 %v2454
  %2591 = vmatpush1.bf16.msra.mxu0 %v2453
  %2592 = vmatprep.subr.bf16.mxu0 %v2456
  %2593 = vmatpush1.bf16.msra.mxu0 %v2455
  %2594 = vmatprep.subr.bf16.mxu0 %v2458
  %2595 = vmatpush1.bf16.msra.mxu0 %v2457
  %2596 = vmatprep.subr.bf16.mxu0 %v2460
  %2597 = vmatpush1.bf16.msra.mxu0 %v2459
  %2598 = vmatprep.subr.bf16.mxu0 %v2462
  %2599 = vmatpush1.bf16.msra.mxu0 %v2461
  %2600 = vmatprep.subr.bf16.mxu0 %v2464
  %2601 = vmatpush1.bf16.msra.mxu0 %v2463
  %2602 = vmatprep.subr.bf16.mxu0 %v2466
  %2603 = vmatpush1.bf16.msra.mxu0 %v2465
  %2604 = vmatprep.subr.bf16.mxu0 %v2468
  %2605 = vmatpush1.bf16.msra.mxu0 %v2467
  %2606 = vmatprep.subr.bf16.mxu0 %v2470
  %2607 = vmatpush1.bf16.msra.mxu0 %v2469
  %2608 = vmatprep.mubr.bf16.mxu0 %v2138
  %2609 = vmatmul.mubr.bf16.gmra.mrb[0].mxu0 %v2137
  %v2610 = vpop.f32.mrb[0].mxu0
  %v2611 = vadd.f32 %v2570, %v2610
  %v2612 = vpop.f32.mrb[0].mxu0
  %v2613 = vadd.f32 %v2572, %v2612
  %v2614 = vpop.f32.mrb[0].mxu0
  %v2615 = vpop.f32.mrb[0].mxu0
  %2616 = vdwg.mxu0
  %v2617 = vpack.c.bf16 %v2611, %v2611
  %v2618 = vpack.c.bf16 %v2613, %v2613
  %v2619 = vld [vmem:[%s8] sm:$0xf]
  %v2620 = vld [vmem:[%s8 + $0x4] sm:$0xf]
  %v2621 = vld [vmem:[%s8 + $0x8] sm:$0xf]
  %v2622 = vld [vmem:[%s8 + $0xc] sm:$0xf]
  %v2623 = vld [vmem:[%s8 + $0x10] sm:$0xf]
  %v2624 = vld [vmem:[%s8 + $0x14] sm:$0xf]
  %v2625 = vld [vmem:[%s8 + $0x18] sm:$0xf]
  %v2626 = vld [vmem:[%s8 + $0x1c] sm:$0xf]
  %v2627 = vld [vmem:[%s8 + $0x20] sm:$0xf]
  %v2628 = vld [vmem:[%s8 + $0x24] sm:$0xf]
  %v2629 = vld [vmem:[%s8 + $0x28] sm:$0xf]
  %v2630 = vld [vmem:[%s8 + $0x2c] sm:$0xf]
  %v2631 = vld [vmem:[%s8 + $0x30] sm:$0xf]
  %v2632 = vld [vmem:[%s8 + $0x34] sm:$0xf]
  %v2633 = vld [vmem:[%s8 + $0x38] sm:$0xf]
  %v2634 = vld [vmem:[%s8 + $0x3c] sm:$0xf]
  %v2635 = vld [vmem:[%s8 + $0x40] sm:$0xf]
  %v2636 = vld [vmem:[%s8 + $0x44] sm:$0xf]
  %v2637 = vld [vmem:[%s8 + $0x48] sm:$0xf]
  %v2638 = vld [vmem:[%s8 + $0x4c] sm:$0xf]
  %v2639 = vld [vmem:[%s8 + $0x50] sm:$0xf]
  %v2640 = vld [vmem:[%s8 + $0x54] sm:$0xf]
  %v2641 = vld [vmem:[%s8 + $0x58] sm:$0xf]
  %v2642 = vld [vmem:[%s8 + $0x5c] sm:$0xf]
  %v2643 = vld [vmem:[%s8 + $0x60] sm:$0xf]
  %v2644 = vld [vmem:[%s8 + $0x64] sm:$0xf]
  %v2645 = vld [vmem:[%s8 + $0x68] sm:$0xf]
  %v2646 = vld [vmem:[%s8 + $0x6c] sm:$0xf]
  %v2647 = vld [vmem:[%s8 + $0x70] sm:$0xf]
  %v2648 = vld [vmem:[%s8 + $0x74] sm:$0xf]
  %v2649 = vld [vmem:[%s8 + $0x78] sm:$0xf]
  %v2650 = vld [vmem:[%s8 + $0x7c] sm:$0xf]
  %v2651 = vld [vmem:[%s9] sm:$0x1]
  %v2653 = vlaneseq
  %v2654 = vshrl.u32 %v2653, 7
  %v2655 = vsub.s32 0, %v2654
  %v2656 = vrot.slane %v2651, %v2655
  %v2690 = vunpack.c.l.b16 %v2619
  %v2691 = vunpack.c.l.b16 %v2620
  %v2692 = vunpack.c.l.b16 %v2621
  %v2693 = vunpack.c.l.b16 %v2622
  %v2694 = vunpack.c.l.b16 %v2623
  %v2695 = vunpack.c.l.b16 %v2624
  %v2696 = vunpack.c.l.b16 %v2625
  %v2697 = vunpack.c.l.b16 %v2626
  %v2698 = vunpack.c.l.b16 %v2627
  %v2699 = vunpack.c.l.b16 %v2628
  %v2700 = vunpack.c.l.b16 %v2629
  %v2701 = vunpack.c.l.b16 %v2630
  %v2702 = vunpack.c.l.b16 %v2631
  %v2703 = vunpack.c.l.b16 %v2632
  %v2704 = vunpack.c.l.b16 %v2633
  %v2705 = vunpack.c.l.b16 %v2634
  %v2706 = vunpack.c.l.b16 %v2635
  %v2707 = vunpack.c.l.b16 %v2636
  %v2708 = vunpack.c.l.b16 %v2637
  %v2709 = vunpack.c.l.b16 %v2638
  %v2710 = vunpack.c.l.b16 %v2639
  %v2711 = vunpack.c.l.b16 %v2640
  %v2712 = vunpack.c.l.b16 %v2641
  %v2713 = vunpack.c.l.b16 %v2642
  %v2714 = vunpack.c.l.b16 %v2643
  %v2715 = vunpack.c.l.b16 %v2644
  %v2716 = vunpack.c.l.b16 %v2645
  %v2717 = vunpack.c.l.b16 %v2646
  %v2718 = vunpack.c.l.b16 %v2647
  %v2719 = vunpack.c.l.b16 %v2648
  %v2720 = vunpack.c.l.b16 %v2649
  %v2721 = vunpack.c.l.b16 %v2650
  %v2722 = vpack.c.b16 %v2691, %v2690
  %v2723 = vpack.c.b16 %v2693, %v2692
  %v2724 = vpack.c.b16 %v2695, %v2694
  %v2725 = vpack.c.b16 %v2697, %v2696
  %v2726 = vpack.c.b16 %v2699, %v2698
  %v2727 = vpack.c.b16 %v2701, %v2700
  %v2728 = vpack.c.b16 %v2703, %v2702
  %v2729 = vpack.c.b16 %v2705, %v2704
  %v2730 = vpack.c.b16 %v2707, %v2706
  %v2731 = vpack.c.b16 %v2709, %v2708
  %v2732 = vpack.c.b16 %v2711, %v2710
  %v2733 = vpack.c.b16 %v2713, %v2712
  %v2734 = vpack.c.b16 %v2715, %v2714
  %v2735 = vpack.c.b16 %v2717, %v2716
  %v2736 = vpack.c.b16 %v2719, %v2718
  %v2737 = vpack.c.b16 %v2721, %v2720
  %2754 = vmatprep.subr.bf16.mxu0 0
  %2755 = vmatpush1.bf16.msra.mxu0 %v2722
  %2756 = vmatprep.subr.bf16.mxu0 0
  %2757 = vmatpush1.bf16.msra.mxu0 %v2723
  %2758 = vmatprep.subr.bf16.mxu0 0
  %2759 = vmatpush1.bf16.msra.mxu0 %v2724
  %2760 = vmatprep.subr.bf16.mxu0 0
  %2761 = vmatpush1.bf16.msra.mxu0 %v2725
  %2762 = vmatprep.subr.bf16.mxu0 0
  %2763 = vmatpush1.bf16.msra.mxu0 %v2726
  %2764 = vmatprep.subr.bf16.mxu0 0
  %2765 = vmatpush1.bf16.msra.mxu0 %v2727
  %2766 = vmatprep.subr.bf16.mxu0 0
  %2767 = vmatpush1.bf16.msra.mxu0 %v2728
  %2768 = vmatprep.subr.bf16.mxu0 0
  %2769 = vmatpush1.bf16.msra.mxu0 %v2729
  %2770 = vmatprep.subr.bf16.mxu0 0
  %2771 = vmatpush1.bf16.msra.mxu0 %v2730
  %2772 = vmatprep.subr.bf16.mxu0 0
  %2773 = vmatpush1.bf16.msra.mxu0 %v2731
  %2774 = vmatprep.subr.bf16.mxu0 0
  %2775 = vmatpush1.bf16.msra.mxu0 %v2732
  %2776 = vmatprep.subr.bf16.mxu0 0
  %2777 = vmatpush1.bf16.msra.mxu0 %v2733
  %2778 = vmatprep.subr.bf16.mxu0 0
  %2779 = vmatpush1.bf16.msra.mxu0 %v2734
  %2780 = vmatprep.subr.bf16.mxu0 0
  %2781 = vmatpush1.bf16.msra.mxu0 %v2735
  %2782 = vmatprep.subr.bf16.mxu0 0
  %2783 = vmatpush1.bf16.msra.mxu0 %v2736
  %2784 = vmatprep.subr.bf16.mxu0 0
  %2785 = vmatpush1.bf16.msra.mxu0 %v2737
  %2786 = vmatprep.mubr.bf16.mxu0 %v2618
  %2787 = vmatmul.mubr.bf16.gmra.mrb[0].mxu0 %v2617
  %v2788 = vpop.f32.mrb[0].mxu0
  %v2789 = vadd.f32 %v2656, %v2788
  %v2790 = vpop.f32.mrb[0].mxu0
  %v2791 = vpop.f32.mrb[0].mxu0
  %v2792 = vpop.f32.mrb[0].mxu0
  %2793 = vdwg.mxu0
  %v2794 = vld [vmem:[%s10] sm:$0x1]
  %v2796 = vlaneseq
  %v2797 = vshrl.u32 %v2796, 7
  %v2798 = vsub.s32 0, %v2797
  %v2799 = vrot.slane %v2794, %v2798
  %v2801 = vadd.f32 %v2789, %v2799
  %2802 = vst [vmem:[%s11] sm:$0x3] %v2801
  // Predicated region
  $region46: #{tnet_forward.7} parent=0 // pred_check
    _
  $region47: #{tnet_forward.7} parent=0 // pred_check_branch
    %2804 = sbr.rel (0) target = $region49
  $region48: #{tnet_forward.7} parent=0 // pred_region
    _
  $region49: #{tnet_forward.7} parent=0 // pred_fallthru
    _
  // Predicated region
  $region50: #{tnet_forward.7} parent=0 // pred_check
    _
  $region51: #{tnet_forward.7} parent=0 // pred_check_branch
    %2806 = sbr.rel (0) target = $region53
  $region52: #{tnet_forward.7} parent=0 // pred_region
    _
  $region53: #{tnet_forward.7} parent=0 // pred_fallthru
    _

</llo_original>
